<compile_context>
chip_gen: v6e
topology: v6e:2x2x1
jax: 0.10.0
libtpu: 0.0.40
codegen_flags: <defaults>
</compile_context>

<pallas_src>
import functools

import numpy as np
import jax
import jax.numpy as jnp
from jax.experimental import pallas as pl
from jax.experimental.pallas import tpu as pltpu


def _conv_out_size(n):
    # Conv2d(kernel_size=3, stride=2, padding=1): floor((n - 1) / 2) + 1
    return (n - 1) // 2 + 1


def _round_up(n, m):
    return ((n + m - 1) // m) * m


# --------------------- host-side constant construction --------------------- #
def build_encoder_constants(params, input_size, compute_dtype=jnp.float32):
    """Build per-layer constants for the fused kernel.

    params : list of (w, b) with w: (3, 3, Cin, Cout) [HWIO], b: (Cout,)
    Returns:
      consts : flat list [Ghat_0, bias_0, ..., Ghat_{L-1}, bias_{L-1}]
               Ghat_l : (3, W*Cin, OW*Cout) — stride-2 column taps fused with weights
               bias_l : (1, OW*Cout) f32    — bias tiled over OW
      shapes : list of (H, W, Cin, OH, OW, Cout) static ints per layer
    """
    consts, shapes = [], []
    H = W = int(input_size)
    for (w, b) in params:
        w = np.asarray(w, np.float32)                  # (3, 3, Cin, Cout)
        b = np.asarray(b, np.float32)                  # (Cout,)
        Cin, Cout = int(w.shape[2]), int(w.shape[3])
        OH, OW = _conv_out_size(H), _conv_out_size(W)

        # Ghat[ky][wc*Cin + ci, ox*Cout + co] = sum_kx [wc == 2*ox + kx - 1] * w[ky,kx,ci,co]
        Ghat = np.zeros((3, W * Cin, OW * Cout), np.float32)
        for ky in range(3):
            for kx in range(3):
                for ox in range(OW):
                    wc = 2 * ox + kx - 1
                    if 0 <= wc < W:
                        Ghat[ky, wc * Cin:(wc + 1) * Cin,
                             ox * Cout:(ox + 1) * Cout] += w[ky, kx]

        bias_row = np.tile(b, OW)[None, :]             # (1, OW*Cout), kept f32

        consts += [jnp.asarray(Ghat, compute_dtype), jnp.asarray(bias_row, jnp.float32)]
        shapes.append((H, W, Cin, OH, OW, Cout))
        H, W = OH, OW
    return consts, shapes


# ------------------------------ Pallas kernel ------------------------------ #
def _fused_encoder_kernel(shapes, bm, x_ref, *refs):
    """One grid step = BM samples; all conv layers stay in VMEM/vregs.

    x_ref : (1, H0*BM, W0*C0)  rows ordered (h, b), features (w, c)   [compute dtype]
    refs  : [Ghat_l, bias_l] * L constants, then out_ref (1, OHf*BM, OWf*Cf) f32
    """
    out_ref = refs[-1]
    layer_refs = refs[:-1]

    act = x_ref[0]                                      # (H*BM, W*Cin)
    y = act
    for l, (H, W, Cin, OH, OW, Cout) in enumerate(shapes):
        g_ref, b_ref = layer_refs[2 * l], layer_refs[2 * l + 1]
        wc, owc = W * Cin, OW * Cout

        # Bias-initialized f32 accumulator, rows ordered (oy, b).
        acc = jnp.broadcast_to(b_ref[...], (OH * bm, owc)).astype(jnp.float32)

        for ky in range(3):
            # stride-2 / pad-1 row taps: static, sublane-aligned BM-row block slices.
            blocks, any_valid = [], False
            for oy in range(OH):
                h = 2 * oy + ky - 1
                if 0 <= h < H:
                    blocks.append(act[h * bm:(h + 1) * bm, :])
                    any_valid = True
                else:
                    blocks.append(jnp.zeros((bm, wc), act.dtype))
            if not any_valid:                           # whole tap is in the zero pad
                continue
            rows = blocks[0] if OH == 1 else jnp.concatenate(blocks, axis=0)
            # One MXU matmul per ky: (OH*BM, W*Cin) @ (W*Cin, OW*Cout), f32 accumulate.
            acc = acc + jnp.dot(rows, g_ref[ky], preferred_element_type=jnp.float32)

        y = jnp.maximum(acc, 0.0)                       # f32 ReLU epilogue
        act = y.astype(act.dtype)                       # next layer input, compute dtype
    out_ref[0] = y.astype(out_ref.dtype)


# ------------------------------ JAX wrapper -------------------------------- #
def conv_encoder_forward(x_nchw, consts, shapes, block_batch=32):
    """Fused Pallas forward. x_nchw: (N, Cin, H, W) f32 -> (N, output_dims) f32."""
    N, Cin, H, W = x_nchw.shape
    H0, W0, C0 = shapes[0][0], shapes[0][1], shapes[0][2]
    assert (H, W, Cin) == (H0, W0, C0), "input shape does not match built constants"
    OHf, OWf, Cf = shapes[-1][3], shapes[-1][4], shapes[-1][5]
    compute_dtype = consts[0].dtype

    # Batch block: multiple of 8 (sublane-aligned row blocks).  Keep >=2 grid steps on
    # v7x so both TensorCores are used; BM <= ~256 keeps blocks far under VMEM limits
    # on every generation (v5e 16 MiB default scoped, v7x 64 MiB physical).
    bm = min(int(block_batch), _round_up(N, 8))
    bm = _round_up(bm, 8)
    n_pad = _round_up(N, bm)
    G = n_pad // bm

    # Pack NCHW -> (G, H*bm, W*Cin): rows (h, b)-ordered, features (w, c)-ordered.
    x_p = x_nchw
    if n_pad != N:
        x_p = jnp.pad(x_p, ((0, n_pad - N), (0, 0), (0, 0), (0, 0)))
    x2d = (x_p.reshape(G, bm, Cin, H, W)
              .transpose(0, 3, 1, 4, 2)                 # (G, H, bm, W, Cin)
              .reshape(G, H * bm, W * Cin)
              .astype(compute_dtype))

    def _const_map(ndim):
        return lambda g: (0,) * ndim                    # VMEM-resident across the grid

    in_specs = [pl.BlockSpec((1, H * bm, W * Cin), lambda g: (g, 0, 0))]
    for c in consts:
        in_specs.append(pl.BlockSpec(c.shape, _const_map(c.ndim)))
    out_specs = pl.BlockSpec((1, OHf * bm, OWf * Cf), lambda g: (g, 0, 0))

    # Advisory cost estimate so XLA schedules the surrounding pack/unpack well.
    flops = 0
    for (Hl, Wl, Cl, OHl, OWl, Col) in shapes:
        flops += 2 * n_pad * 3 * OHl * (Wl * Cl) * (OWl * Col)
    bytes_accessed = x2d.size * x2d.dtype.itemsize + n_pad * OHf * OWf * Cf * 4
    for c in consts:
        bytes_accessed += c.size * c.dtype.itemsize

    out = pl.pallas_call(
        functools.partial(_fused_encoder_kernel, tuple(shapes), bm),
        out_shape=jax.ShapeDtypeStruct((G, OHf * bm, OWf * Cf), jnp.float32),
        grid=(G,),
        in_specs=in_specs,
        out_specs=out_specs,
        compiler_params=pltpu.CompilerParams(dimension_semantics=("parallel",)),
        cost_estimate=pl.CostEstimate(flops=int(flops), transcendentals=0,
                                      bytes_accessed=int(bytes_accessed)),
    )(x2d, *consts)                                     # (G, OHf*bm, OWf*Cf)

    # Un-pack rows (ohf, b) / features (owf, cf); flatten in torch (C, H, W) order.
    out = (out.reshape(G, OHf, bm, OWf, Cf)
              .transpose(0, 2, 4, 1, 3)                 # (G, bm, Cf, OHf, OWf)
              .reshape(n_pad, Cf * OHf * OWf))
    return out[:N]


# ------------------------------ references --------------------------------- #
def conv_encoder_reference(x_nchw, params):
    """Pure-JAX reference (lax.conv, highest precision) for numerical verification."""
    h = x_nchw
    for w, b in params:
        w_oihw = jnp.transpose(w, (3, 2, 0, 1))         # (3,3,Cin,Cout) -> OIHW
        h = jax.lax.conv_general_dilated(
            h, w_oihw, window_strides=(2, 2), padding=((1, 1), (1, 1)),
            dimension_numbers=("NCHW", "OIHW", "NCHW"),
            precision=jax.lax.Precision.HIGHEST,
        )
        h = h + b.reshape(1, -1, 1, 1)
        h = jnp.maximum(h, 0.0)
    return h.reshape(h.shape[0], -1)


def init_params(key, in_channels, hidden_dims):
    params = []
    cin = in_channels
    for i, cout in enumerate(hidden_dims):
        kw, kb = jax.random.split(jax.random.fold_in(key, i))
        w = jax.random.normal(kw, (3, 3, cin, cout), jnp.float32) * 0.1
        b = jax.random.normal(kb, (cout,), jnp.float32) * 0.01
        params.append((w, b))
        cin = cout
    return params


if __name__ == "__main__":
    # Module config: input_size=16, in_channels=4, hidden_dims=[32, 64, 64, 128].
    # Spatial: 16 -> 8 -> 4 -> 2 -> 1, so output_dims = 128 (lane-dense final store).
    # batch=64 with block_batch=32 -> grid=(2,): both v7x TensorCores get a step.
    key = jax.random.PRNGKey(0)
    kx, kp = jax.random.split(key)

    batch, in_channels, input_size = 64, 4, 16
    hidden_dims = [32, 64, 64, 128]
    block_batch = 32

    x = jax.random.normal(kx, (batch, in_channels, input_size, input_size), jnp.float32)
    params = init_params(kp, in_channels, hidden_dims)
    h_ref = conv_encoder_reference(x, params)

    # ---- f32 data path (tight functional check) ----
    consts32, shapes = build_encoder_constants(params, input_size, jnp.float32)
    fwd32 = jax.jit(functools.partial(conv_encoder_forward, consts=consts32,
                                      shapes=shapes, block_batch=block_batch))
    h32 = fwd32(x)
    jax.block_until_ready(h32)
    assert h32.shape == h_ref.shape, (h32.shape, h_ref.shape)
    assert jnp.allclose(h32, h_ref, atol=2e-3, rtol=2e-3), "f32 mismatch vs reference"

    # ---- ragged batch (N not a multiple of the batch block; pad + slice path) ----
    h32_r = fwd32(x[:50])
    jax.block_until_ready(h32_r)
    assert jnp.allclose(h32_r, h_ref[:50], atol=2e-3, rtol=2e-3), "ragged-batch mismatch"

    # ---- bf16 MXU inputs (fast path on all generations), f32 accumulate/epilogue ----
    consts16, _ = build_encoder_constants(params, input_size, jnp.bfloat16)
    fwd16 = jax.jit(functools.partial(conv_encoder_forward, consts=consts16,
                                      shapes=shapes, block_batch=block_batch))
    h16 = fwd16(x)
    jax.block_until_ready(h16)
    assert h16.shape == h_ref.shape, (h16.shape, h_ref.shape)
    assert jnp.allclose(h16, h_ref, atol=1e-1, rtol=1e-1), "bf16 mismatch vs reference"

    print("KERNEL_OK")
</pallas_src>

<mosaic_0001>
module attributes {stable_mosaic.version = 11 : i64} {
  func.func @_fused_encoder_kernel(%arg0: i32, %arg1: memref<1x512x64xf32, #tpu.memory_space<vmem>>, %arg2: memref<3x64x256xf32, #tpu.memory_space<vmem>>, %arg3: memref<1x256xf32, #tpu.memory_space<vmem>>, %arg4: memref<3x256x256xf32, #tpu.memory_space<vmem>>, %arg5: memref<1x256xf32, #tpu.memory_space<vmem>>, %arg6: memref<3x256x128xf32, #tpu.memory_space<vmem>>, %arg7: memref<1x128xf32, #tpu.memory_space<vmem>>, %arg8: memref<3x128x128xf32, #tpu.memory_space<vmem>>, %arg9: memref<1x128xf32, #tpu.memory_space<vmem>>, %arg10: memref<1x32x128xf32, #tpu.memory_space<vmem>>) attributes {dimension_semantics = [#tpu.dimension_semantics<parallel>], iteration_bounds = array<i64: 2>, scalar_prefetch = 0 : i64, scratch_operands = 0 : i64, tpu.core_type = #tpu.core_type<tc>, window_params = [{transform_indices = @transform_0, window_bounds = array<i64: 1, 512, 64>}, {pipeline_mode = #tpu.pipeline_mode<synchronous>, transform_indices = @transform_1, window_bounds = array<i64: 3, 64, 256>}, {pipeline_mode = #tpu.pipeline_mode<synchronous>, transform_indices = @transform_2, window_bounds = array<i64: 1, 256>}, {pipeline_mode = #tpu.pipeline_mode<synchronous>, transform_indices = @transform_3, window_bounds = array<i64: 3, 256, 256>}, {pipeline_mode = #tpu.pipeline_mode<synchronous>, transform_indices = @transform_4, window_bounds = array<i64: 1, 256>}, {pipeline_mode = #tpu.pipeline_mode<synchronous>, transform_indices = @transform_5, window_bounds = array<i64: 3, 256, 128>}, {pipeline_mode = #tpu.pipeline_mode<synchronous>, transform_indices = @transform_6, window_bounds = array<i64: 1, 128>}, {pipeline_mode = #tpu.pipeline_mode<synchronous>, transform_indices = @transform_7, window_bounds = array<i64: 3, 128, 128>}, {pipeline_mode = #tpu.pipeline_mode<synchronous>, transform_indices = @transform_8, window_bounds = array<i64: 1, 128>}, {transform_indices = @transform_9, window_bounds = array<i64: 1, 32, 128>}]} {
    %c0 = arith.constant 0 : index
    %c0_0 = arith.constant 0 : index
    %c0_1 = arith.constant 0 : index
    %0 = vector.load %arg1[%c0, %c0_0, %c0_1] : memref<1x512x64xf32, #tpu.memory_space<vmem>>, vector<1x512x64xf32>
    %1 = vector.shape_cast %0 : vector<1x512x64xf32> to vector<512x64xf32>
    %c0_2 = arith.constant 0 : index
    %c0_3 = arith.constant 0 : index
    %2 = vector.load %arg3[%c0_2, %c0_3] : memref<1x256xf32, #tpu.memory_space<vmem>>, vector<1x256xf32>
    %3 = vector.shape_cast %2 : vector<1x256xf32> to vector<1x256xf32>
    %4 = vector.broadcast %3 : vector<1x256xf32> to vector<256x256xf32>
    %cst = arith.constant 0.000000e+00 : f32
    %5 = vector.broadcast %cst : f32 to vector<32x64xf32>
    %6 = vector.extract_strided_slice %1 {offsets = [32, 0], sizes = [32, 64], strides = [1, 1]} : vector<512x64xf32> to vector<32x64xf32>
    %7 = vector.extract_strided_slice %1 {offsets = [96, 0], sizes = [32, 64], strides = [1, 1]} : vector<512x64xf32> to vector<32x64xf32>
    %8 = vector.extract_strided_slice %1 {offsets = [160, 0], sizes = [32, 64], strides = [1, 1]} : vector<512x64xf32> to vector<32x64xf32>
    %9 = vector.extract_strided_slice %1 {offsets = [224, 0], sizes = [32, 64], strides = [1, 1]} : vector<512x64xf32> to vector<32x64xf32>
    %10 = vector.extract_strided_slice %1 {offsets = [288, 0], sizes = [32, 64], strides = [1, 1]} : vector<512x64xf32> to vector<32x64xf32>
    %11 = vector.extract_strided_slice %1 {offsets = [352, 0], sizes = [32, 64], strides = [1, 1]} : vector<512x64xf32> to vector<32x64xf32>
    %12 = vector.extract_strided_slice %1 {offsets = [416, 0], sizes = [32, 64], strides = [1, 1]} : vector<512x64xf32> to vector<32x64xf32>
    %13 = tpu.concatenate %5, %6, %7, %8, %9, %10, %11, %12 in 0 : vector<32x64xf32>, vector<32x64xf32>, vector<32x64xf32>, vector<32x64xf32>, vector<32x64xf32>, vector<32x64xf32>, vector<32x64xf32>, vector<32x64xf32> -> vector<256x64xf32>
    %c0_4 = arith.constant 0 : index
    %c0_5 = arith.constant 0 : index
    %c0_6 = arith.constant 0 : index
    %14 = vector.load %arg2[%c0_4, %c0_5, %c0_6] : memref<3x64x256xf32, #tpu.memory_space<vmem>>, vector<1x64x256xf32>
    %15 = vector.shape_cast %14 : vector<1x64x256xf32> to vector<64x256xf32>
    %cst_7 = arith.constant dense<0.000000e+00> : vector<256x256xf32>
    %16 = tpu.matmul %13, %15, %cst_7 {dimension_numbers = #tpu.dot_dimension_numbers<[1], [0], [0], [1], [0, 0, 1, 1], [], []>} : vector<256x64xf32>, vector<64x256xf32>, vector<256x256xf32> -> vector<256x256xf32>
    %17 = arith.addf %4, %16 : vector<256x256xf32>
    %18 = vector.extract_strided_slice %1 {offsets = [0, 0], sizes = [32, 64], strides = [1, 1]} : vector<512x64xf32> to vector<32x64xf32>
    %19 = vector.extract_strided_slice %1 {offsets = [64, 0], sizes = [32, 64], strides = [1, 1]} : vector<512x64xf32> to vector<32x64xf32>
    %20 = vector.extract_strided_slice %1 {offsets = [128, 0], sizes = [32, 64], strides = [1, 1]} : vector<512x64xf32> to vector<32x64xf32>
    %21 = vector.extract_strided_slice %1 {offsets = [192, 0], sizes = [32, 64], strides = [1, 1]} : vector<512x64xf32> to vector<32x64xf32>
    %22 = vector.extract_strided_slice %1 {offsets = [256, 0], sizes = [32, 64], strides = [1, 1]} : vector<512x64xf32> to vector<32x64xf32>
    %23 = vector.extract_strided_slice %1 {offsets = [320, 0], sizes = [32, 64], strides = [1, 1]} : vector<512x64xf32> to vector<32x64xf32>
    %24 = vector.extract_strided_slice %1 {offsets = [384, 0], sizes = [32, 64], strides = [1, 1]} : vector<512x64xf32> to vector<32x64xf32>
    %25 = vector.extract_strided_slice %1 {offsets = [448, 0], sizes = [32, 64], strides = [1, 1]} : vector<512x64xf32> to vector<32x64xf32>
    %26 = tpu.concatenate %18, %19, %20, %21, %22, %23, %24, %25 in 0 : vector<32x64xf32>, vector<32x64xf32>, vector<32x64xf32>, vector<32x64xf32>, vector<32x64xf32>, vector<32x64xf32>, vector<32x64xf32>, vector<32x64xf32> -> vector<256x64xf32>
    %c1 = arith.constant 1 : index
    %c0_8 = arith.constant 0 : index
    %c0_9 = arith.constant 0 : index
    %27 = vector.load %arg2[%c1, %c0_8, %c0_9] : memref<3x64x256xf32, #tpu.memory_space<vmem>>, vector<1x64x256xf32>
    %28 = vector.shape_cast %27 : vector<1x64x256xf32> to vector<64x256xf32>
    %cst_10 = arith.constant dense<0.000000e+00> : vector<256x256xf32>
    %29 = tpu.matmul %26, %28, %cst_10 {dimension_numbers = #tpu.dot_dimension_numbers<[1], [0], [0], [1], [0, 0, 1, 1], [], []>} : vector<256x64xf32>, vector<64x256xf32>, vector<256x256xf32> -> vector<256x256xf32>
    %30 = arith.addf %17, %29 : vector<256x256xf32>
    %31 = vector.extract_strided_slice %1 {offsets = [32, 0], sizes = [32, 64], strides = [1, 1]} : vector<512x64xf32> to vector<32x64xf32>
    %32 = vector.extract_strided_slice %1 {offsets = [96, 0], sizes = [32, 64], strides = [1, 1]} : vector<512x64xf32> to vector<32x64xf32>
    %33 = vector.extract_strided_slice %1 {offsets = [160, 0], sizes = [32, 64], strides = [1, 1]} : vector<512x64xf32> to vector<32x64xf32>
    %34 = vector.extract_strided_slice %1 {offsets = [224, 0], sizes = [32, 64], strides = [1, 1]} : vector<512x64xf32> to vector<32x64xf32>
    %35 = vector.extract_strided_slice %1 {offsets = [288, 0], sizes = [32, 64], strides = [1, 1]} : vector<512x64xf32> to vector<32x64xf32>
    %36 = vector.extract_strided_slice %1 {offsets = [352, 0], sizes = [32, 64], strides = [1, 1]} : vector<512x64xf32> to vector<32x64xf32>
    %37 = vector.extract_strided_slice %1 {offsets = [416, 0], sizes = [32, 64], strides = [1, 1]} : vector<512x64xf32> to vector<32x64xf32>
    %38 = vector.extract_strided_slice %1 {offsets = [480, 0], sizes = [32, 64], strides = [1, 1]} : vector<512x64xf32> to vector<32x64xf32>
    %39 = tpu.concatenate %31, %32, %33, %34, %35, %36, %37, %38 in 0 : vector<32x64xf32>, vector<32x64xf32>, vector<32x64xf32>, vector<32x64xf32>, vector<32x64xf32>, vector<32x64xf32>, vector<32x64xf32>, vector<32x64xf32> -> vector<256x64xf32>
    %c2 = arith.constant 2 : index
    %c0_11 = arith.constant 0 : index
    %c0_12 = arith.constant 0 : index
    %40 = vector.load %arg2[%c2, %c0_11, %c0_12] : memref<3x64x256xf32, #tpu.memory_space<vmem>>, vector<1x64x256xf32>
    %41 = vector.shape_cast %40 : vector<1x64x256xf32> to vector<64x256xf32>
    %cst_13 = arith.constant dense<0.000000e+00> : vector<256x256xf32>
    %42 = tpu.matmul %39, %41, %cst_13 {dimension_numbers = #tpu.dot_dimension_numbers<[1], [0], [0], [1], [0, 0, 1, 1], [], []>} : vector<256x64xf32>, vector<64x256xf32>, vector<256x256xf32> -> vector<256x256xf32>
    %43 = arith.addf %30, %42 : vector<256x256xf32>
    %cst_14 = arith.constant 0.000000e+00 : f32
    %44 = vector.broadcast %cst_14 : f32 to vector<256x256xf32>
    %45 = arith.maximumf %43, %44 : vector<256x256xf32>
    %c0_15 = arith.constant 0 : index
    %c0_16 = arith.constant 0 : index
    %46 = vector.load %arg5[%c0_15, %c0_16] : memref<1x256xf32, #tpu.memory_space<vmem>>, vector<1x256xf32>
    %47 = vector.shape_cast %46 : vector<1x256xf32> to vector<1x256xf32>
    %48 = vector.broadcast %47 : vector<1x256xf32> to vector<128x256xf32>
    %cst_17 = arith.constant 0.000000e+00 : f32
    %49 = vector.broadcast %cst_17 : f32 to vector<32x256xf32>
    %50 = vector.extract_strided_slice %45 {offsets = [32, 0], sizes = [32, 256], strides = [1, 1]} : vector<256x256xf32> to vector<32x256xf32>
    %51 = vector.extract_strided_slice %45 {offsets = [96, 0], sizes = [32, 256], strides = [1, 1]} : vector<256x256xf32> to vector<32x256xf32>
    %52 = vector.extract_strided_slice %45 {offsets = [160, 0], sizes = [32, 256], strides = [1, 1]} : vector<256x256xf32> to vector<32x256xf32>
    %53 = tpu.concatenate %49, %50, %51, %52 in 0 : vector<32x256xf32>, vector<32x256xf32>, vector<32x256xf32>, vector<32x256xf32> -> vector<128x256xf32>
    %c0_18 = arith.constant 0 : index
    %c0_19 = arith.constant 0 : index
    %c0_20 = arith.constant 0 : index
    %54 = vector.load %arg4[%c0_18, %c0_19, %c0_20] : memref<3x256x256xf32, #tpu.memory_space<vmem>>, vector<1x256x256xf32>
    %55 = vector.shape_cast %54 : vector<1x256x256xf32> to vector<256x256xf32>
    %cst_21 = arith.constant dense<0.000000e+00> : vector<128x256xf32>
    %56 = tpu.matmul %53, %55, %cst_21 {dimension_numbers = #tpu.dot_dimension_numbers<[1], [0], [0], [1], [0, 0, 1, 1], [], []>} : vector<128x256xf32>, vector<256x256xf32>, vector<128x256xf32> -> vector<128x256xf32>
    %57 = arith.addf %48, %56 : vector<128x256xf32>
    %58 = vector.extract_strided_slice %45 {offsets = [0, 0], sizes = [32, 256], strides = [1, 1]} : vector<256x256xf32> to vector<32x256xf32>
    %59 = vector.extract_strided_slice %45 {offsets = [64, 0], sizes = [32, 256], strides = [1, 1]} : vector<256x256xf32> to vector<32x256xf32>
    %60 = vector.extract_strided_slice %45 {offsets = [128, 0], sizes = [32, 256], strides = [1, 1]} : vector<256x256xf32> to vector<32x256xf32>
    %61 = vector.extract_strided_slice %45 {offsets = [192, 0], sizes = [32, 256], strides = [1, 1]} : vector<256x256xf32> to vector<32x256xf32>
    %62 = tpu.concatenate %58, %59, %60, %61 in 0 : vector<32x256xf32>, vector<32x256xf32>, vector<32x256xf32>, vector<32x256xf32> -> vector<128x256xf32>
    %c1_22 = arith.constant 1 : index
    %c0_23 = arith.constant 0 : index
    %c0_24 = arith.constant 0 : index
    %63 = vector.load %arg4[%c1_22, %c0_23, %c0_24] : memref<3x256x256xf32, #tpu.memory_space<vmem>>, vector<1x256x256xf32>
    %64 = vector.shape_cast %63 : vector<1x256x256xf32> to vector<256x256xf32>
    %cst_25 = arith.constant dense<0.000000e+00> : vector<128x256xf32>
    %65 = tpu.matmul %62, %64, %cst_25 {dimension_numbers = #tpu.dot_dimension_numbers<[1], [0], [0], [1], [0, 0, 1, 1], [], []>} : vector<128x256xf32>, vector<256x256xf32>, vector<128x256xf32> -> vector<128x256xf32>
    %66 = arith.addf %57, %65 : vector<128x256xf32>
    %67 = vector.extract_strided_slice %45 {offsets = [32, 0], sizes = [32, 256], strides = [1, 1]} : vector<256x256xf32> to vector<32x256xf32>
    %68 = vector.extract_strided_slice %45 {offsets = [96, 0], sizes = [32, 256], strides = [1, 1]} : vector<256x256xf32> to vector<32x256xf32>
    %69 = vector.extract_strided_slice %45 {offsets = [160, 0], sizes = [32, 256], strides = [1, 1]} : vector<256x256xf32> to vector<32x256xf32>
    %70 = vector.extract_strided_slice %45 {offsets = [224, 0], sizes = [32, 256], strides = [1, 1]} : vector<256x256xf32> to vector<32x256xf32>
    %71 = tpu.concatenate %67, %68, %69, %70 in 0 : vector<32x256xf32>, vector<32x256xf32>, vector<32x256xf32>, vector<32x256xf32> -> vector<128x256xf32>
    %c2_26 = arith.constant 2 : index
    %c0_27 = arith.constant 0 : index
    %c0_28 = arith.constant 0 : index
    %72 = vector.load %arg4[%c2_26, %c0_27, %c0_28] : memref<3x256x256xf32, #tpu.memory_space<vmem>>, vector<1x256x256xf32>
    %73 = vector.shape_cast %72 : vector<1x256x256xf32> to vector<256x256xf32>
    %cst_29 = arith.constant dense<0.000000e+00> : vector<128x256xf32>
    %74 = tpu.matmul %71, %73, %cst_29 {dimension_numbers = #tpu.dot_dimension_numbers<[1], [0], [0], [1], [0, 0, 1, 1], [], []>} : vector<128x256xf32>, vector<256x256xf32>, vector<128x256xf32> -> vector<128x256xf32>
    %75 = arith.addf %66, %74 : vector<128x256xf32>
    %cst_30 = arith.constant 0.000000e+00 : f32
    %76 = vector.broadcast %cst_30 : f32 to vector<128x256xf32>
    %77 = arith.maximumf %75, %76 : vector<128x256xf32>
    %c0_31 = arith.constant 0 : index
    %c0_32 = arith.constant 0 : index
    %78 = vector.load %arg7[%c0_31, %c0_32] : memref<1x128xf32, #tpu.memory_space<vmem>>, vector<1x128xf32>
    %79 = vector.shape_cast %78 : vector<1x128xf32> to vector<1x128xf32>
    %80 = vector.broadcast %79 : vector<1x128xf32> to vector<64x128xf32>
    %cst_33 = arith.constant 0.000000e+00 : f32
    %81 = vector.broadcast %cst_33 : f32 to vector<32x256xf32>
    %82 = vector.extract_strided_slice %77 {offsets = [32, 0], sizes = [32, 256], strides = [1, 1]} : vector<128x256xf32> to vector<32x256xf32>
    %83 = tpu.concatenate %81, %82 in 0 : vector<32x256xf32>, vector<32x256xf32> -> vector<64x256xf32>
    %c0_34 = arith.constant 0 : index
    %c0_35 = arith.constant 0 : index
    %c0_36 = arith.constant 0 : index
    %84 = vector.load %arg6[%c0_34, %c0_35, %c0_36] : memref<3x256x128xf32, #tpu.memory_space<vmem>>, vector<1x256x128xf32>
    %85 = vector.shape_cast %84 : vector<1x256x128xf32> to vector<256x128xf32>
    %cst_37 = arith.constant dense<0.000000e+00> : vector<64x128xf32>
    %86 = tpu.matmul %83, %85, %cst_37 {dimension_numbers = #tpu.dot_dimension_numbers<[1], [0], [0], [1], [0, 0, 1, 1], [], []>} : vector<64x256xf32>, vector<256x128xf32>, vector<64x128xf32> -> vector<64x128xf32>
    %87 = arith.addf %80, %86 : vector<64x128xf32>
    %88 = vector.extract_strided_slice %77 {offsets = [0, 0], sizes = [32, 256], strides = [1, 1]} : vector<128x256xf32> to vector<32x256xf32>
    %89 = vector.extract_strided_slice %77 {offsets = [64, 0], sizes = [32, 256], strides = [1, 1]} : vector<128x256xf32> to vector<32x256xf32>
    %90 = tpu.concatenate %88, %89 in 0 : vector<32x256xf32>, vector<32x256xf32> -> vector<64x256xf32>
    %c1_38 = arith.constant 1 : index
    %c0_39 = arith.constant 0 : index
    %c0_40 = arith.constant 0 : index
    %91 = vector.load %arg6[%c1_38, %c0_39, %c0_40] : memref<3x256x128xf32, #tpu.memory_space<vmem>>, vector<1x256x128xf32>
    %92 = vector.shape_cast %91 : vector<1x256x128xf32> to vector<256x128xf32>
    %cst_41 = arith.constant dense<0.000000e+00> : vector<64x128xf32>
    %93 = tpu.matmul %90, %92, %cst_41 {dimension_numbers = #tpu.dot_dimension_numbers<[1], [0], [0], [1], [0, 0, 1, 1], [], []>} : vector<64x256xf32>, vector<256x128xf32>, vector<64x128xf32> -> vector<64x128xf32>
    %94 = arith.addf %87, %93 : vector<64x128xf32>
    %95 = vector.extract_strided_slice %77 {offsets = [32, 0], sizes = [32, 256], strides = [1, 1]} : vector<128x256xf32> to vector<32x256xf32>
    %96 = vector.extract_strided_slice %77 {offsets = [96, 0], sizes = [32, 256], strides = [1, 1]} : vector<128x256xf32> to vector<32x256xf32>
    %97 = tpu.concatenate %95, %96 in 0 : vector<32x256xf32>, vector<32x256xf32> -> vector<64x256xf32>
    %c2_42 = arith.constant 2 : index
    %c0_43 = arith.constant 0 : index
    %c0_44 = arith.constant 0 : index
    %98 = vector.load %arg6[%c2_42, %c0_43, %c0_44] : memref<3x256x128xf32, #tpu.memory_space<vmem>>, vector<1x256x128xf32>
    %99 = vector.shape_cast %98 : vector<1x256x128xf32> to vector<256x128xf32>
    %cst_45 = arith.constant dense<0.000000e+00> : vector<64x128xf32>
    %100 = tpu.matmul %97, %99, %cst_45 {dimension_numbers = #tpu.dot_dimension_numbers<[1], [0], [0], [1], [0, 0, 1, 1], [], []>} : vector<64x256xf32>, vector<256x128xf32>, vector<64x128xf32> -> vector<64x128xf32>
    %101 = arith.addf %94, %100 : vector<64x128xf32>
    %cst_46 = arith.constant 0.000000e+00 : f32
    %102 = vector.broadcast %cst_46 : f32 to vector<64x128xf32>
    %103 = arith.maximumf %101, %102 : vector<64x128xf32>
    %c0_47 = arith.constant 0 : index
    %c0_48 = arith.constant 0 : index
    %104 = vector.load %arg9[%c0_47, %c0_48] : memref<1x128xf32, #tpu.memory_space<vmem>>, vector<1x128xf32>
    %105 = vector.shape_cast %104 : vector<1x128xf32> to vector<1x128xf32>
    %106 = vector.broadcast %105 : vector<1x128xf32> to vector<32x128xf32>
    %107 = vector.extract_strided_slice %103 {offsets = [0, 0], sizes = [32, 128], strides = [1, 1]} : vector<64x128xf32> to vector<32x128xf32>
    %c1_49 = arith.constant 1 : index
    %c0_50 = arith.constant 0 : index
    %c0_51 = arith.constant 0 : index
    %108 = vector.load %arg8[%c1_49, %c0_50, %c0_51] : memref<3x128x128xf32, #tpu.memory_space<vmem>>, vector<1x128x128xf32>
    %109 = vector.shape_cast %108 : vector<1x128x128xf32> to vector<128x128xf32>
    %cst_52 = arith.constant dense<0.000000e+00> : vector<32x128xf32>
    %110 = tpu.matmul %107, %109, %cst_52 {dimension_numbers = #tpu.dot_dimension_numbers<[1], [0], [0], [1], [0, 0, 1, 1], [], []>} : vector<32x128xf32>, vector<128x128xf32>, vector<32x128xf32> -> vector<32x128xf32>
    %111 = arith.addf %106, %110 : vector<32x128xf32>
    %112 = vector.extract_strided_slice %103 {offsets = [32, 0], sizes = [32, 128], strides = [1, 1]} : vector<64x128xf32> to vector<32x128xf32>
    %c2_53 = arith.constant 2 : index
    %c0_54 = arith.constant 0 : index
    %c0_55 = arith.constant 0 : index
    %113 = vector.load %arg8[%c2_53, %c0_54, %c0_55] : memref<3x128x128xf32, #tpu.memory_space<vmem>>, vector<1x128x128xf32>
    %114 = vector.shape_cast %113 : vector<1x128x128xf32> to vector<128x128xf32>
    %cst_56 = arith.constant dense<0.000000e+00> : vector<32x128xf32>
    %115 = tpu.matmul %112, %114, %cst_56 {dimension_numbers = #tpu.dot_dimension_numbers<[1], [0], [0], [1], [0, 0, 1, 1], [], []>} : vector<32x128xf32>, vector<128x128xf32>, vector<32x128xf32> -> vector<32x128xf32>
    %116 = arith.addf %111, %115 : vector<32x128xf32>
    %cst_57 = arith.constant 0.000000e+00 : f32
    %117 = vector.broadcast %cst_57 : f32 to vector<32x128xf32>
    %118 = arith.maximumf %116, %117 : vector<32x128xf32>
    %c0_58 = arith.constant 0 : index
    %c0_59 = arith.constant 0 : index
    %c0_60 = arith.constant 0 : index
    %119 = vector.load %arg10[%c0_58, %c0_59, %c0_60] : memref<1x32x128xf32, #tpu.memory_space<vmem>>, vector<1x32x128xf32>
    %120 = vector.shape_cast %119 : vector<1x32x128xf32> to vector<32x128xf32>
    %121 = vector.shape_cast %118 : vector<32x128xf32> to vector<1x32x128xf32>
    tpu.vector_store %arg10[%c0_58, %c0_59, %c0_60], %121 {strides = array<i32>} : memref<1x32x128xf32, #tpu.memory_space<vmem>>, vector<1x32x128xf32>,
    return
  }
  func.func @transform_0(%arg0: i32) -> (i32, i32, i32) {
    %c0_i32 = arith.constant 0 : i32
    %c0_i32_0 = arith.constant 0 : i32
    %c0_i32_1 = arith.constant 0 : i32
    return %arg0, %c0_i32, %c0_i32_0 : i32, i32, i32
  }
  func.func @transform_1(%arg0: i32) -> (i32, i32, i32) {
    %c0_i32 = arith.constant 0 : i32
    %c0_i32_0 = arith.constant 0 : i32
    %c0_i32_1 = arith.constant 0 : i32
    %c0_i32_2 = arith.constant 0 : i32
    return %c0_i32, %c0_i32_0, %c0_i32_1 : i32, i32, i32
  }
  func.func @transform_2(%arg0: i32) -> (i32, i32) {
    %c0_i32 = arith.constant 0 : i32
    %c0_i32_0 = arith.constant 0 : i32
    %c0_i32_1 = arith.constant 0 : i32
    return %c0_i32, %c0_i32_0 : i32, i32
  }
  func.func @transform_3(%arg0: i32) -> (i32, i32, i32) {
    %c0_i32 = arith.constant 0 : i32
    %c0_i32_0 = arith.constant 0 : i32
    %c0_i32_1 = arith.constant 0 : i32
    %c0_i32_2 = arith.constant 0 : i32
    return %c0_i32, %c0_i32_0, %c0_i32_1 : i32, i32, i32
  }
  func.func @transform_4(%arg0: i32) -> (i32, i32) {
    %c0_i32 = arith.constant 0 : i32
    %c0_i32_0 = arith.constant 0 : i32
    %c0_i32_1 = arith.constant 0 : i32
    return %c0_i32, %c0_i32_0 : i32, i32
  }
  func.func @transform_5(%arg0: i32) -> (i32, i32, i32) {
    %c0_i32 = arith.constant 0 : i32
    %c0_i32_0 = arith.constant 0 : i32
    %c0_i32_1 = arith.constant 0 : i32
    %c0_i32_2 = arith.constant 0 : i32
    return %c0_i32, %c0_i32_0, %c0_i32_1 : i32, i32, i32
  }
  func.func @transform_6(%arg0: i32) -> (i32, i32) {
    %c0_i32 = arith.constant 0 : i32
    %c0_i32_0 = arith.constant 0 : i32
    %c0_i32_1 = arith.constant 0 : i32
    return %c0_i32, %c0_i32_0 : i32, i32
  }
  func.func @transform_7(%arg0: i32) -> (i32, i32, i32) {
    %c0_i32 = arith.constant 0 : i32
    %c0_i32_0 = arith.constant 0 : i32
    %c0_i32_1 = arith.constant 0 : i32
    %c0_i32_2 = arith.constant 0 : i32
    return %c0_i32, %c0_i32_0, %c0_i32_1 : i32, i32, i32
  }
  func.func @transform_8(%arg0: i32) -> (i32, i32) {
    %c0_i32 = arith.constant 0 : i32
    %c0_i32_0 = arith.constant 0 : i32
    %c0_i32_1 = arith.constant 0 : i32
    return %c0_i32, %c0_i32_0 : i32, i32
  }
  func.func @transform_9(%arg0: i32) -> (i32, i32, i32) {
    %c0_i32 = arith.constant 0 : i32
    %c0_i32_0 = arith.constant 0 : i32
    %c0_i32_1 = arith.constant 0 : i32
    return %arg0, %c0_i32, %c0_i32_0 : i32, i32, i32
  }
}

</mosaic_0001>

<llo_original>
// kernel: conv_encoder_forward.1
$region0: #{conv_encoder_forward.1}
  #allocation0 [shape = 'u32[]', space=smem, size = 0x4, offset = 0x4, fixed_abs, tag = 'smem constant byte address 0x4 - core index']
  #allocation1 [shape = 'u32[144,128]{1,0:T(1,128)}', space=vmem, size = 0x12000, scoped, tag = 'internal scratch']
  %s0 = inlined_call_operand.vmem [shape: f32[2,512,64], index: 0, kind: input, shape index: {}]
  %s1 = inlined_call_operand.vmem [shape: f32[3,64,256], index: 1, kind: input, shape index: {}]
  %s2 = inlined_call_operand.vmem [shape: f32[1,256], index: 2, kind: input, shape index: {}]
  %s3 = inlined_call_operand.vmem [shape: f32[3,256,256], index: 3, kind: input, shape index: {}]
  %s4 = inlined_call_operand.vmem [shape: f32[1,256], index: 4, kind: input, shape index: {}]
  %s5 = inlined_call_operand.vmem [shape: f32[3,256,128], index: 5, kind: input, shape index: {}]
  %s6 = inlined_call_operand.vmem [shape: f32[1,128], index: 6, kind: input, shape index: {}]
  %s7 = inlined_call_operand.vmem [shape: f32[3,128,128], index: 7, kind: input, shape index: {}]
  %s8 = inlined_call_operand.vmem [shape: f32[1,128], index: 8, kind: input, shape index: {}]
  %s9 = inlined_call_operand.hbm [shape: f32[2,32,128], index: 9, kind: output, shape index: {}]
  %s10 = sld [smem:[#allocation0]]
  $region69: #{conv_encoder_forward.1} parent=0
    _
  %s12 = ssub.s32 1, %s10
  %s13 = scalar_select 0, %s12, %s10
  $region1: #{conv_encoder_forward.1} parent=0
    #allocation2 [shape = 'u8[32768]{0}', space=vmem, size = 0x8000, scoped, tag = 'output window, operand 0']
    #allocation3 [shape = 's32[2]{0}', space=sflag, size = 0x8, scoped, tag = 'scoped memory for conv_encoder_forward.1']
    %14 = vsyncpa [#allocation3], 0
    %s15 = scalar_lea.sflag [#allocation3], 1
    %16 = vsyncpa %s15, 0
    loop: start=0, step=1, limit=4
    $region2: #{conv_encoder_forward.1} parent=1 // loop_pre_header
      _
    $region3: #{conv_encoder_forward.1} parent=1 // loop_header
      %s18 = sphi 0, %s22
      %p19 = scmp.ge.s32.totalorder %s18, 4
      %s28 = sphi 0, %s30
      %s31 = sphi 0, %s28
      %s32 = sphi 0, %s31
      %s48 = sphi 0, %s32
      %s52 = sphi 0, %s52
      %s54 = sphi 0, %s52
      %s55 = sphi 0, %s54
      %s69 = sphi 0, %s55
      %s73 = sphi 0, %s73
      %s75 = sphi 0, %s73
      %s76 = sphi 0, %s75
      %s90 = sphi 0, %s76
      %s94 = sphi 0, %s94
      %s96 = sphi 0, %s94
      %s97 = sphi 0, %s96
      %s111 = sphi 0, %s97
      %s115 = sphi 0, %s115
      %s117 = sphi 0, %s115
      %s118 = sphi 0, %s117
      %s132 = sphi 0, %s118
      %s136 = sphi 0, %s136
      %s138 = sphi 0, %s136
      %s139 = sphi 0, %s138
      %s153 = sphi 0, %s139
      %s157 = sphi 0, %s157
      %s159 = sphi 0, %s157
      %s160 = sphi 0, %s159
      %s174 = sphi 0, %s160
      %s178 = sphi 0, %s178
      %s180 = sphi 0, %s178
      %s181 = sphi 0, %s180
      %s195 = sphi 0, %s181
      %s199 = sphi 0, %s199
      %s201 = sphi 0, %s199
      %s202 = sphi 0, %s201
      %s216 = sphi 0, %s202
      %s222 = sphi 0, %s224
      %s225 = sphi 0, %s222
      %s226 = sphi 0, %s225
      %s242 = sphi 0, %s226
    $region4: #{conv_encoder_forward.1} parent=1 // loop_header_branch
      %21 = sbr.rel (%p19) target = $region8
    $region5: #{conv_encoder_forward.1} parent=1 // loop_body
      %s23 = ssub.s32 %s18, 1
      %s24 = ssub.s32 %s18, 2
      %s25 = sadd.s32 %s18, 1
      %s26 = ssub.s32 %s18, %s25
      %p27 = scmp.eq.s32.totalorder %s26, 0
      %s29 = sadd.s32 %s28, 1
      %s30 = scalar_select %p27, %s28, %s29
      %p33 = pneg %p27
      %p34 = scmp.eq.s32.totalorder %s18, 1
      %p35 = por %p33, %p34
      %p36 = scmp.ne.s32.totalorder %s28, %s31
      %p37 = scmp.eq.s32.totalorder %s18, 0
      %p38 = por %p36, %p37
      %p39 = scmp.ne.s32.totalorder %s28, %s31
      %p40 = scmp.eq.s32.totalorder %s23, 1
      %p41 = por %p39, %p40
      %p42 = scmp.ne.s32.totalorder %s31, %s32
      %p43 = scmp.eq.s32.totalorder %s23, 0
      %p44 = por %p42, %p43
      %p45 = scmp.ne.s32.totalorder %s31, %s32
      %p46 = scmp.eq.s32.totalorder %s24, 1
      %p47 = por %p45, %p46
      %p49 = scmp.ne.s32.totalorder %s32, %s48
      %p50 = scmp.eq.s32.totalorder %s24, 0
      %p51 = por %p49, %p50
      %s53 = sadd.s32 %s52, 1
      %p56 = scmp.eq.s32.totalorder %s18, 1
      %p57 = scmp.ne.s32.totalorder %s52, %s54
      %p58 = scmp.eq.s32.totalorder %s18, 0
      %p59 = por %p57, %p58
      %p60 = scmp.ne.s32.totalorder %s52, %s54
      %p61 = scmp.eq.s32.totalorder %s23, 1
      %p62 = por %p60, %p61
      %p63 = scmp.ne.s32.totalorder %s54, %s55
      %p64 = scmp.eq.s32.totalorder %s23, 0
      %p65 = por %p63, %p64
      %p66 = scmp.ne.s32.totalorder %s54, %s55
      %p67 = scmp.eq.s32.totalorder %s24, 1
      %p68 = por %p66, %p67
      %p70 = scmp.ne.s32.totalorder %s55, %s69
      %p71 = scmp.eq.s32.totalorder %s24, 0
      %p72 = por %p70, %p71
      %s74 = sadd.s32 %s73, 1
      %p77 = scmp.eq.s32.totalorder %s18, 1
      %p78 = scmp.ne.s32.totalorder %s73, %s75
      %p79 = scmp.eq.s32.totalorder %s18, 0
      %p80 = por %p78, %p79
      %p81 = scmp.ne.s32.totalorder %s73, %s75
      %p82 = scmp.eq.s32.totalorder %s23, 1
      %p83 = por %p81, %p82
      %p84 = scmp.ne.s32.totalorder %s75, %s76
      %p85 = scmp.eq.s32.totalorder %s23, 0
      %p86 = por %p84, %p85
      %p87 = scmp.ne.s32.totalorder %s75, %s76
      %p88 = scmp.eq.s32.totalorder %s24, 1
      %p89 = por %p87, %p88
      %p91 = scmp.ne.s32.totalorder %s76, %s90
      %p92 = scmp.eq.s32.totalorder %s24, 0
      %p93 = por %p91, %p92
      %s95 = sadd.s32 %s94, 1
      %p98 = scmp.eq.s32.totalorder %s18, 1
      %p99 = scmp.ne.s32.totalorder %s94, %s96
      %p100 = scmp.eq.s32.totalorder %s18, 0
      %p101 = por %p99, %p100
      %p102 = scmp.ne.s32.totalorder %s94, %s96
      %p103 = scmp.eq.s32.totalorder %s23, 1
      %p104 = por %p102, %p103
      %p105 = scmp.ne.s32.totalorder %s96, %s97
      %p106 = scmp.eq.s32.totalorder %s23, 0
      %p107 = por %p105, %p106
      %p108 = scmp.ne.s32.totalorder %s96, %s97
      %p109 = scmp.eq.s32.totalorder %s24, 1
      %p110 = por %p108, %p109
      %p112 = scmp.ne.s32.totalorder %s97, %s111
      %p113 = scmp.eq.s32.totalorder %s24, 0
      %p114 = por %p112, %p113
      %s116 = sadd.s32 %s115, 1
      %p119 = scmp.eq.s32.totalorder %s18, 1
      %p120 = scmp.ne.s32.totalorder %s115, %s117
      %p121 = scmp.eq.s32.totalorder %s18, 0
      %p122 = por %p120, %p121
      %p123 = scmp.ne.s32.totalorder %s115, %s117
      %p124 = scmp.eq.s32.totalorder %s23, 1
      %p125 = por %p123, %p124
      %p126 = scmp.ne.s32.totalorder %s117, %s118
      %p127 = scmp.eq.s32.totalorder %s23, 0
      %p128 = por %p126, %p127
      %p129 = scmp.ne.s32.totalorder %s117, %s118
      %p130 = scmp.eq.s32.totalorder %s24, 1
      %p131 = por %p129, %p130
      %p133 = scmp.ne.s32.totalorder %s118, %s132
      %p134 = scmp.eq.s32.totalorder %s24, 0
      %p135 = por %p133, %p134
      %s137 = sadd.s32 %s136, 1
      %p140 = scmp.eq.s32.totalorder %s18, 1
      %p141 = scmp.ne.s32.totalorder %s136, %s138
      %p142 = scmp.eq.s32.totalorder %s18, 0
      %p143 = por %p141, %p142
      %p144 = scmp.ne.s32.totalorder %s136, %s138
      %p145 = scmp.eq.s32.totalorder %s23, 1
      %p146 = por %p144, %p145
      %p147 = scmp.ne.s32.totalorder %s138, %s139
      %p148 = scmp.eq.s32.totalorder %s23, 0
      %p149 = por %p147, %p148
      %p150 = scmp.ne.s32.totalorder %s138, %s139
      %p151 = scmp.eq.s32.totalorder %s24, 1
      %p152 = por %p150, %p151
      %p154 = scmp.ne.s32.totalorder %s139, %s153
      %p155 = scmp.eq.s32.totalorder %s24, 0
      %p156 = por %p154, %p155
      %s158 = sadd.s32 %s157, 1
      %p161 = scmp.eq.s32.totalorder %s18, 1
      %p162 = scmp.ne.s32.totalorder %s157, %s159
      %p163 = scmp.eq.s32.totalorder %s18, 0
      %p164 = por %p162, %p163
      %p165 = scmp.ne.s32.totalorder %s157, %s159
      %p166 = scmp.eq.s32.totalorder %s23, 1
      %p167 = por %p165, %p166
      %p168 = scmp.ne.s32.totalorder %s159, %s160
      %p169 = scmp.eq.s32.totalorder %s23, 0
      %p170 = por %p168, %p169
      %p171 = scmp.ne.s32.totalorder %s159, %s160
      %p172 = scmp.eq.s32.totalorder %s24, 1
      %p173 = por %p171, %p172
      %p175 = scmp.ne.s32.totalorder %s160, %s174
      %p176 = scmp.eq.s32.totalorder %s24, 0
      %p177 = por %p175, %p176
      %s179 = sadd.s32 %s178, 1
      %p182 = scmp.eq.s32.totalorder %s18, 1
      %p183 = scmp.ne.s32.totalorder %s178, %s180
      %p184 = scmp.eq.s32.totalorder %s18, 0
      %p185 = por %p183, %p184
      %p186 = scmp.ne.s32.totalorder %s178, %s180
      %p187 = scmp.eq.s32.totalorder %s23, 1
      %p188 = por %p186, %p187
      %p189 = scmp.ne.s32.totalorder %s180, %s181
      %p190 = scmp.eq.s32.totalorder %s23, 0
      %p191 = por %p189, %p190
      %p192 = scmp.ne.s32.totalorder %s180, %s181
      %p193 = scmp.eq.s32.totalorder %s24, 1
      %p194 = por %p192, %p193
      %p196 = scmp.ne.s32.totalorder %s181, %s195
      %p197 = scmp.eq.s32.totalorder %s24, 0
      %p198 = por %p196, %p197
      %s200 = sadd.s32 %s199, 1
      %p203 = scmp.eq.s32.totalorder %s18, 1
      %p204 = scmp.ne.s32.totalorder %s199, %s201
      %p205 = scmp.eq.s32.totalorder %s18, 0
      %p206 = por %p204, %p205
      %p207 = scmp.ne.s32.totalorder %s199, %s201
      %p208 = scmp.eq.s32.totalorder %s23, 1
      %p209 = por %p207, %p208
      %p210 = scmp.ne.s32.totalorder %s201, %s202
      %p211 = scmp.eq.s32.totalorder %s23, 0
      %p212 = por %p210, %p211
      %p213 = scmp.ne.s32.totalorder %s201, %s202
      %p214 = scmp.eq.s32.totalorder %s24, 1
      %p215 = por %p213, %p214
      %p217 = scmp.ne.s32.totalorder %s202, %s216
      %p218 = scmp.eq.s32.totalorder %s24, 0
      %p219 = por %p217, %p218
      %s220 = ssub.s32 %s18, %s25
      %p221 = scmp.eq.s32.totalorder %s220, 0
      %s223 = sadd.s32 %s222, 1
      %s224 = scalar_select %p221, %s222, %s223
      %p227 = pneg %p221
      %p228 = scmp.eq.s32.totalorder %s18, 1
      %p229 = por %p227, %p228
      %p230 = scmp.ne.s32.totalorder %s222, %s225
      %p231 = scmp.eq.s32.totalorder %s18, 0
      %p232 = por %p230, %p231
      %p233 = scmp.ne.s32.totalorder %s222, %s225
      %p234 = scmp.eq.s32.totalorder %s23, 1
      %p235 = por %p233, %p234
      %p236 = scmp.ne.s32.totalorder %s225, %s226
      %p237 = scmp.eq.s32.totalorder %s23, 0
      %p238 = por %p236, %p237
      %p239 = scmp.ne.s32.totalorder %s225, %s226
      %p240 = scmp.eq.s32.totalorder %s24, 1
      %p241 = por %p239, %p240
      %p243 = scmp.ne.s32.totalorder %s226, %s242
      %p244 = scmp.eq.s32.totalorder %s24, 0
      %p245 = por %p243, %p244
      %p246 = scmp.le.s32.totalorder 1, %s18
      %p247 = scmp.lt.s32.totalorder %s18, 3
      %p248 = pnand %p246, %p247
      %p249 = pneg %p248
      // Predicated region
      $region9: #{conv_encoder_forward.1} parent=5 // pred_check
        _
      $region10: #{conv_encoder_forward.1} parent=5 // pred_check_branch
        %251 = sbr.rel (%p248) target = $region12
      $region11: #{conv_encoder_forward.1} parent=5 // pred_region
        %s252 = ssub.s32 %s18, 1
        // Predicated region
        $region13: #{conv_encoder_forward.1} parent=11 // pred_check
          %p253 = pneg %p65
        $region14: #{conv_encoder_forward.1} parent=11 // pred_check_branch
          %255 = sbr.rel (%p253) target = $region16
        $region15: #{conv_encoder_forward.1} parent=11 // pred_region
          _
        $region16: #{conv_encoder_forward.1} parent=11 // pred_fallthru
          _
        // Predicated region
        $region17: #{conv_encoder_forward.1} parent=11 // pred_check
          %p256 = pneg %p86
        $region18: #{conv_encoder_forward.1} parent=11 // pred_check_branch
          %258 = sbr.rel (%p256) target = $region20
        $region19: #{conv_encoder_forward.1} parent=11 // pred_region
          _
        $region20: #{conv_encoder_forward.1} parent=11 // pred_fallthru
          _
        // Predicated region
        $region21: #{conv_encoder_forward.1} parent=11 // pred_check
          %p259 = pneg %p107
        $region22: #{conv_encoder_forward.1} parent=11 // pred_check_branch
          %261 = sbr.rel (%p259) target = $region24
        $region23: #{conv_encoder_forward.1} parent=11 // pred_region
          _
        $region24: #{conv_encoder_forward.1} parent=11 // pred_fallthru
          _
        // Predicated region
        $region25: #{conv_encoder_forward.1} parent=11 // pred_check
          %p262 = pneg %p128
        $region26: #{conv_encoder_forward.1} parent=11 // pred_check_branch
          %264 = sbr.rel (%p262) target = $region28
        $region27: #{conv_encoder_forward.1} parent=11 // pred_region
          _
        $region28: #{conv_encoder_forward.1} parent=11 // pred_fallthru
          _
        // Predicated region
        $region29: #{conv_encoder_forward.1} parent=11 // pred_check
          %p265 = pneg %p149
        $region30: #{conv_encoder_forward.1} parent=11 // pred_check_branch
          %267 = sbr.rel (%p265) target = $region32
        $region31: #{conv_encoder_forward.1} parent=11 // pred_region
          _
        $region32: #{conv_encoder_forward.1} parent=11 // pred_fallthru
          _
        // Predicated region
        $region33: #{conv_encoder_forward.1} parent=11 // pred_check
          %p268 = pneg %p170
        $region34: #{conv_encoder_forward.1} parent=11 // pred_check_branch
          %270 = sbr.rel (%p268) target = $region36
        $region35: #{conv_encoder_forward.1} parent=11 // pred_region
          _
        $region36: #{conv_encoder_forward.1} parent=11 // pred_fallthru
          _
        // Predicated region
        $region37: #{conv_encoder_forward.1} parent=11 // pred_check
          %p271 = pneg %p191
        $region38: #{conv_encoder_forward.1} parent=11 // pred_check_branch
          %273 = sbr.rel (%p271) target = $region40
        $region39: #{conv_encoder_forward.1} parent=11 // pred_region
          _
        $region40: #{conv_encoder_forward.1} parent=11 // pred_fallthru
          _
        // Predicated region
        $region41: #{conv_encoder_forward.1} parent=11 // pred_check
          %p274 = pneg %p212
        $region42: #{conv_encoder_forward.1} parent=11 // pred_check_branch
          %276 = sbr.rel (%p274) target = $region44
        $region43: #{conv_encoder_forward.1} parent=11 // pred_region
          _
        $region44: #{conv_encoder_forward.1} parent=11 // pred_fallthru
          _
      $region12: #{conv_encoder_forward.1} parent=5 // pred_fallthru
        _
      %p277 = scmp.lt.s32.totalorder %s18, 2
      // Predicated region
      $region45: #{conv_encoder_forward.1} parent=5 // pred_check
        %p278 = pneg %p277
      $region46: #{conv_encoder_forward.1} parent=5 // pred_check_branch
        %280 = sbr.rel (%p278) target = $region48
      $region47: #{conv_encoder_forward.1} parent=5 // pred_region
        // Predicated region
        $region49: #{conv_encoder_forward.1} parent=47 // pred_check
          %p281 = pneg %p38
        $region50: #{conv_encoder_forward.1} parent=47 // pred_check_branch
          %283 = sbr.rel (%p281) target = $region52
        $region51: #{conv_encoder_forward.1} parent=47 // pred_region
          %p284 = scmp.lt.s32.totalorder %s18, 1
          %s285 = scalar_select %p284, %s18, 1
          %s286 = smul.addr %s285, 64
          %s287 = smul.addr %s286, 8
          %s288 = scalar_lea.vmem %s0, %s287
        $region52: #{conv_encoder_forward.1} parent=47 // pred_fallthru
          _
      $region48: #{conv_encoder_forward.1} parent=5 // pred_fallthru
        _
      %p289 = scmp.le.s32.totalorder 1, %s18
      %p290 = scmp.lt.s32.totalorder %s18, 3
      %p291 = pnand %p289, %p290
      %p292 = pneg %p291
      // Predicated region
      $region53: #{conv_encoder_forward.1} parent=5 // pred_check
        _
      $region54: #{conv_encoder_forward.1} parent=5 // pred_check_branch
        %294 = sbr.rel (%p291) target = $region56
      $region55: #{conv_encoder_forward.1} parent=5 // pred_region
        %s295 = ssub.s32 %s18, 1
        %p296 = scmp.lt.s32.totalorder %s23, 1
        %s297 = scalar_select %p296, %s23, 1
        %s298 = smul.addr %s297, 64
        %s299 = smul.addr %s298, 8
        %s300 = scalar_lea.vmem %s0, %s299
        %p301 = pneg %p44
        %p302 = pneg %p41
        %p303 = pneg %p65
        %p304 = pneg %p62
        %p305 = pneg %p86
        %p306 = pneg %p83
        %p307 = pneg %p107
        %p308 = pneg %p104
        %p309 = pneg %p128
        %p310 = pneg %p125
        %p311 = pneg %p149
        %p312 = pneg %p146
        %p313 = pneg %p170
        %p314 = pneg %p167
        %p315 = pneg %p191
        %p316 = pneg %p188
        %p317 = pneg %p212
        %p318 = pneg %p209
        %p319 = pneg %p238
        %p320 = pneg %p235
        %s321 = sand.u32 %s225, 1
        %s322 = scalar_lea.sflag [#allocation3], %s321
        %s323 = sand.u32 %s225, 1
        %s324 = smul.addr %s323, 32
        %s325 = scalar_lea.vmem [#allocation2], %s324
        %p326 = scmp.lt.s32.totalorder %s23, 1
        %s327 = scalar_select %p326, %s23, 1
        %s328 = smul.addr %s327, 64
        %s329 = smul.addr %s328, 8
        %s330 = scalar_lea.vmem %s0, %s329
        %v331 = vld [vmem:[%s330] sm:$0xff]
        %v332 = vld [vmem:[%s330 + $0x8] sm:$0xff]
        %v333 = vld [vmem:[%s330 + $0x10] sm:$0xff]
        %v334 = vld [vmem:[%s330 + $0x18] sm:$0xff]
        %v335 = vld [vmem:[%s330 + $0x20] sm:$0xff]
        %v336 = vld [vmem:[%s330 + $0x28] sm:$0xff]
        %v337 = vld [vmem:[%s330 + $0x30] sm:$0xff]
        %v338 = vld [vmem:[%s330 + $0x38] sm:$0xff]
        %v339 = vld [vmem:[%s330 + $0x40] sm:$0xff]
        %v340 = vld [vmem:[%s330 + $0x48] sm:$0xff]
        %v341 = vld [vmem:[%s330 + $0x50] sm:$0xff]
        %v342 = vld [vmem:[%s330 + $0x58] sm:$0xff]
        %v343 = vld [vmem:[%s330 + $0x60] sm:$0xff]
        %v344 = vld [vmem:[%s330 + $0x68] sm:$0xff]
        %v345 = vld [vmem:[%s330 + $0x70] sm:$0xff]
        %v346 = vld [vmem:[%s330 + $0x78] sm:$0xff]
        %v347 = vld [vmem:[%s330 + $0x80] sm:$0xff]
        %v348 = vld [vmem:[%s330 + $0x88] sm:$0xff]
        %v349 = vld [vmem:[%s330 + $0x90] sm:$0xff]
        %v350 = vld [vmem:[%s330 + $0x98] sm:$0xff]
        %v351 = vld [vmem:[%s330 + $0xa0] sm:$0xff]
        %v352 = vld [vmem:[%s330 + $0xa8] sm:$0xff]
        %v353 = vld [vmem:[%s330 + $0xb0] sm:$0xff]
        %v354 = vld [vmem:[%s330 + $0xb8] sm:$0xff]
        %v355 = vld [vmem:[%s330 + $0xc0] sm:$0xff]
        %v356 = vld [vmem:[%s330 + $0xc8] sm:$0xff]
        %v357 = vld [vmem:[%s330 + $0xd0] sm:$0xff]
        %v358 = vld [vmem:[%s330 + $0xd8] sm:$0xff]
        %v359 = vld [vmem:[%s330 + $0xe0] sm:$0xff]
        %v360 = vld [vmem:[%s330 + $0xe8] sm:$0xff]
        %v361 = vld [vmem:[%s330 + $0xf0] sm:$0xff]
        %v362 = vld [vmem:[%s330 + $0xf8] sm:$0xff]
        %v363 = vld [vmem:[%s330 + $0x100] sm:$0xff]
        %v364 = vld [vmem:[%s330 + $0x108] sm:$0xff]
        %v365 = vld [vmem:[%s330 + $0x110] sm:$0xff]
        %v366 = vld [vmem:[%s330 + $0x118] sm:$0xff]
        %v367 = vld [vmem:[%s330 + $0x120] sm:$0xff]
        %v368 = vld [vmem:[%s330 + $0x128] sm:$0xff]
        %v369 = vld [vmem:[%s330 + $0x130] sm:$0xff]
        %v370 = vld [vmem:[%s330 + $0x138] sm:$0xff]
        %v371 = vld [vmem:[%s330 + $0x140] sm:$0xff]
        %v372 = vld [vmem:[%s330 + $0x148] sm:$0xff]
        %v373 = vld [vmem:[%s330 + $0x150] sm:$0xff]
        %v374 = vld [vmem:[%s330 + $0x158] sm:$0xff]
        %v375 = vld [vmem:[%s330 + $0x160] sm:$0xff]
        %v376 = vld [vmem:[%s330 + $0x168] sm:$0xff]
        %v377 = vld [vmem:[%s330 + $0x170] sm:$0xff]
        %v378 = vld [vmem:[%s330 + $0x178] sm:$0xff]
        %v379 = vld [vmem:[%s330 + $0x180] sm:$0xff]
        %v380 = vld [vmem:[%s330 + $0x188] sm:$0xff]
        %v381 = vld [vmem:[%s330 + $0x190] sm:$0xff]
        %v382 = vld [vmem:[%s330 + $0x198] sm:$0xff]
        %v383 = vld [vmem:[%s330 + $0x1a0] sm:$0xff]
        %v384 = vld [vmem:[%s330 + $0x1a8] sm:$0xff]
        %v385 = vld [vmem:[%s330 + $0x1b0] sm:$0xff]
        %v386 = vld [vmem:[%s330 + $0x1b8] sm:$0xff]
        %v387 = vld [vmem:[%s330 + $0x1c0] sm:$0xff]
        %v388 = vld [vmem:[%s330 + $0x1c8] sm:$0xff]
        %v389 = vld [vmem:[%s330 + $0x1d0] sm:$0xff]
        %v390 = vld [vmem:[%s330 + $0x1d8] sm:$0xff]
        %v391 = vld [vmem:[%s330 + $0x1e0] sm:$0xff]
        %v392 = vld [vmem:[%s330 + $0x1e8] sm:$0xff]
        %v393 = vld [vmem:[%s330 + $0x1f0] sm:$0xff]
        %v394 = vld [vmem:[%s330 + $0x1f8] sm:$0xff]
        %v395 = vld [vmem:[%s2] sm:$0x3]
        %v397 = vlaneseq
        %v398 = vshrl.u32 %v397, 7
        %v399 = vsub.s32 0, %v398
        %v400 = vrot.slane %v395, %v399
        %v401 = vlaneseq
        %v402 = vshrl.u32 %v401, 7
        %v403 = vsub.s32 1, %v402
        %v404 = vrot.slane %v395, %v403
        %v407 = vld [vmem:[%s1] sm:$0xff]
        %v408 = vld [vmem:[%s1 + $0x8] sm:$0xff]
        %v409 = vld [vmem:[%s1 + $0x10] sm:$0xff]
        %v410 = vld [vmem:[%s1 + $0x18] sm:$0xff]
        %v411 = vld [vmem:[%s1 + $0x20] sm:$0xff]
        %v412 = vld [vmem:[%s1 + $0x28] sm:$0xff]
        %v413 = vld [vmem:[%s1 + $0x30] sm:$0xff]
        %v414 = vld [vmem:[%s1 + $0x38] sm:$0xff]
        %v415 = vld [vmem:[%s1 + $0x40] sm:$0xff]
        %v416 = vld [vmem:[%s1 + $0x48] sm:$0xff]
        %v417 = vld [vmem:[%s1 + $0x50] sm:$0xff]
        %v418 = vld [vmem:[%s1 + $0x58] sm:$0xff]
        %v419 = vld [vmem:[%s1 + $0x60] sm:$0xff]
        %v420 = vld [vmem:[%s1 + $0x68] sm:$0xff]
        %v421 = vld [vmem:[%s1 + $0x70] sm:$0xff]
        %v422 = vld [vmem:[%s1 + $0x78] sm:$0xff]
        %vm423 = vcmask 523264
        %v425 = vsel %vm423, 0.0, 0
        %v428 = vsel %vm423, %v335, 0
        %v431 = vsel %vm423, %v336, 0
        %v434 = vsel %vm423, %v337, 0
        %v437 = vsel %vm423, %v338, 0
        %v440 = vsel %vm423, %v343, 0
        %v443 = vsel %vm423, %v344, 0
        %v446 = vsel %vm423, %v345, 0
        %v449 = vsel %vm423, %v346, 0
        %v452 = vsel %vm423, %v351, 0
        %v455 = vsel %vm423, %v352, 0
        %v458 = vsel %vm423, %v353, 0
        %v461 = vsel %vm423, %v354, 0
        %v464 = vsel %vm423, %v359, 0
        %v467 = vsel %vm423, %v360, 0
        %v470 = vsel %vm423, %v361, 0
        %v473 = vsel %vm423, %v362, 0
        %v476 = vsel %vm423, %v367, 0
        %v479 = vsel %vm423, %v368, 0
        %v482 = vsel %vm423, %v369, 0
        %v485 = vsel %vm423, %v370, 0
        %v488 = vsel %vm423, %v375, 0
        %v491 = vsel %vm423, %v376, 0
        %v494 = vsel %vm423, %v377, 0
        %v497 = vsel %vm423, %v378, 0
        %v500 = vsel %vm423, %v383, 0
        %v503 = vsel %vm423, %v384, 0
        %v506 = vsel %vm423, %v385, 0
        %v509 = vsel %vm423, %v386, 0
        %511 = vmatprep.subr.mxu0 0.0
        %512 = vmatpush1.msra.mxu0 0.0
        %513 = vmatprep.subr.mxu0 0.0
        %514 = vmatpush1.msra.mxu0 0.0
        %515 = vmatprep.subr.mxu0 0.0
        %516 = vmatpush1.msra.mxu0 0.0
        %517 = vmatprep.subr.mxu0 0.0
        %518 = vmatpush1.msra.mxu0 0.0
        %519 = vmatprep.subr.mxu0 0.0
        %520 = vmatpush1.msra.mxu0 0.0
        %521 = vmatprep.subr.mxu0 0.0
        %522 = vmatpush1.msra.mxu0 0.0
        %523 = vmatprep.subr.mxu0 0.0
        %524 = vmatpush1.msra.mxu0 0.0
        %525 = vmatprep.subr.mxu0 0.0
        %526 = vmatpush1.msra.mxu0 0.0
        %527 = vmatprep.subr.mxu0 %v422
        %528 = vmatpush1.msra.mxu0 %v421
        %529 = vmatprep.subr.mxu0 %v420
        %530 = vmatpush1.msra.mxu0 %v419
        %531 = vmatprep.subr.mxu0 %v418
        %532 = vmatpush1.msra.mxu0 %v417
        %533 = vmatprep.subr.mxu0 %v416
        %534 = vmatpush1.msra.mxu0 %v415
        %535 = vmatprep.subr.mxu0 %v414
        %536 = vmatpush1.msra.mxu0 %v413
        %537 = vmatprep.subr.mxu0 %v412
        %538 = vmatpush1.msra.mxu0 %v411
        %539 = vmatprep.subr.mxu0 %v410
        %540 = vmatpush1.msra.mxu0 %v409
        %541 = vmatprep.subr.mxu0 %v408
        %542 = vmatpush1.msra.mxu0 %v407
        %543 = vmatprep.subr.mxu0 0.0
        %544 = vmatpush2.msra.mxu0 0.0
        %545 = vmatprep.subr.mxu0 0.0
        %546 = vmatpush2.msra.mxu0 0.0
        %547 = vmatprep.subr.mxu0 0.0
        %548 = vmatpush2.msra.mxu0 0.0
        %549 = vmatprep.subr.mxu0 0.0
        %550 = vmatpush2.msra.mxu0 0.0
        %551 = vmatprep.subr.mxu0 0.0
        %552 = vmatpush2.msra.mxu0 0.0
        %553 = vmatprep.subr.mxu0 0.0
        %554 = vmatpush2.msra.mxu0 0.0
        %555 = vmatprep.subr.mxu0 0.0
        %556 = vmatpush2.msra.mxu0 0.0
        %557 = vmatprep.subr.mxu0 0.0
        %558 = vmatpush2.msra.mxu0 0.0
        %559 = vmatprep.subr.mxu0 0.0
        %560 = vmatpush2.msra.mxu0 0.0
        %561 = vmatprep.subr.mxu0 0.0
        %562 = vmatpush2.msra.mxu0 0.0
        %563 = vmatprep.subr.mxu0 0.0
        %564 = vmatpush2.msra.mxu0 0.0
        %565 = vmatprep.subr.mxu0 0.0
        %566 = vmatpush2.msra.mxu0 0.0
        %567 = vmatprep.subr.mxu0 0.0
        %568 = vmatpush2.msra.mxu0 0.0
        %569 = vmatprep.subr.mxu0 0.0
        %570 = vmatpush2.msra.mxu0 0.0
        %571 = vmatprep.subr.mxu0 0.0
        %572 = vmatpush2.msra.mxu0 0.0
        %573 = vmatprep.subr.mxu0 0.0
        %574 = vmatpush2.msra.mxu0 0.0
        %575 = vmatprep.mubr.f32.mxu0 0.0
        %576 = vmatmul.mubr.f32.gmra.mxu0 %v425
        %v577 = vpop.f32.mrf.mxu0
        %v578 = vadd.f32 0.0, %v577
        %v579 = vpop.f32.mrf.mxu0
        %v580 = vadd.f32 0.0, %v579
        %581 = vmatprep.mubr.f32.mxu0 0.0
        %582 = vmatmul.mubr.f32.gmra.mxu0 %v425
        %v583 = vpop.f32.mrf.mxu0
        %v584 = vadd.f32 0.0, %v583
        %v585 = vpop.f32.mrf.mxu0
        %v586 = vadd.f32 0.0, %v585
        %587 = vmatprep.mubr.f32.mxu0 0.0
        %588 = vmatmul.mubr.f32.gmra.mxu0 %v425
        %v589 = vpop.f32.mrf.mxu0
        %v590 = vadd.f32 0.0, %v589
        %v591 = vpop.f32.mrf.mxu0
        %v592 = vadd.f32 0.0, %v591
        %593 = vmatprep.mubr.f32.mxu0 0.0
        %594 = vmatmul.mubr.f32.gmra.mxu0 %v425
        %v595 = vpop.f32.mrf.mxu0
        %v596 = vadd.f32 0.0, %v595
        %v597 = vpop.f32.mrf.mxu0
        %v598 = vadd.f32 0.0, %v597
        %599 = vmatprep.mubr.f32.mxu0 0.0
        %600 = vmatmul.mubr.f32.gmra.mxu0 %v428
        %v601 = vpop.f32.mrf.mxu0
        %v602 = vadd.f32 0.0, %v601
        %v603 = vpop.f32.mrf.mxu0
        %v604 = vadd.f32 0.0, %v603
        %605 = vmatprep.mubr.f32.mxu0 0.0
        %606 = vmatmul.mubr.f32.gmra.mxu0 %v431
        %v607 = vpop.f32.mrf.mxu0
        %v608 = vadd.f32 0.0, %v607
        %v609 = vpop.f32.mrf.mxu0
        %v610 = vadd.f32 0.0, %v609
        %611 = vmatprep.mubr.f32.mxu0 0.0
        %612 = vmatmul.mubr.f32.gmra.mxu0 %v434
        %v613 = vpop.f32.mrf.mxu0
        %v614 = vadd.f32 0.0, %v613
        %v615 = vpop.f32.mrf.mxu0
        %v616 = vadd.f32 0.0, %v615
        %617 = vmatprep.mubr.f32.mxu0 0.0
        %618 = vmatmul.mubr.f32.gmra.mxu0 %v437
        %v619 = vpop.f32.mrf.mxu0
        %v620 = vadd.f32 0.0, %v619
        %v621 = vpop.f32.mrf.mxu0
        %v622 = vadd.f32 0.0, %v621
        %623 = vmatprep.mubr.f32.mxu0 0.0
        %624 = vmatmul.mubr.f32.gmra.mxu0 %v440
        %v625 = vpop.f32.mrf.mxu0
        %v626 = vadd.f32 0.0, %v625
        %v627 = vpop.f32.mrf.mxu0
        %v628 = vadd.f32 0.0, %v627
        %629 = vmatprep.mubr.f32.mxu0 0.0
        %630 = vmatmul.mubr.f32.gmra.mxu0 %v443
        %v631 = vpop.f32.mrf.mxu0
        %v632 = vadd.f32 0.0, %v631
        %v633 = vpop.f32.mrf.mxu0
        %v634 = vadd.f32 0.0, %v633
        %635 = vmatprep.mubr.f32.mxu0 0.0
        %636 = vmatmul.mubr.f32.gmra.mxu0 %v446
        %v637 = vpop.f32.mrf.mxu0
        %v638 = vadd.f32 0.0, %v637
        %v639 = vpop.f32.mrf.mxu0
        %v640 = vadd.f32 0.0, %v639
        %641 = vmatprep.mubr.f32.mxu0 0.0
        %642 = vmatmul.mubr.f32.gmra.mxu0 %v449
        %v643 = vpop.f32.mrf.mxu0
        %v644 = vadd.f32 0.0, %v643
        %v645 = vpop.f32.mrf.mxu0
        %v646 = vadd.f32 0.0, %v645
        %647 = vmatprep.mubr.f32.mxu0 0.0
        %648 = vmatmul.mubr.f32.gmra.mxu0 %v452
        %v649 = vpop.f32.mrf.mxu0
        %v650 = vadd.f32 0.0, %v649
        %v651 = vpop.f32.mrf.mxu0
        %v652 = vadd.f32 0.0, %v651
        %653 = vmatprep.mubr.f32.mxu0 0.0
        %654 = vmatmul.mubr.f32.gmra.mxu0 %v455
        %v655 = vpop.f32.mrf.mxu0
        %v656 = vadd.f32 0.0, %v655
        %v657 = vpop.f32.mrf.mxu0
        %v658 = vadd.f32 0.0, %v657
        %659 = vmatprep.mubr.f32.mxu0 0.0
        %660 = vmatmul.mubr.f32.gmra.mxu0 %v458
        %v661 = vpop.f32.mrf.mxu0
        %v662 = vadd.f32 0.0, %v661
        %v663 = vpop.f32.mrf.mxu0
        %v664 = vadd.f32 0.0, %v663
        %665 = vmatprep.mubr.f32.mxu0 0.0
        %666 = vmatmul.mubr.f32.gmra.mxu0 %v461
        %v667 = vpop.f32.mrf.mxu0
        %v668 = vadd.f32 0.0, %v667
        %v669 = vpop.f32.mrf.mxu0
        %v670 = vadd.f32 0.0, %v669
        %671 = vmatprep.mubr.f32.mxu0 0.0
        %672 = vmatmul.mubr.f32.gmra.mxu0 %v464
        %v673 = vpop.f32.mrf.mxu0
        %v674 = vadd.f32 0.0, %v673
        %v675 = vpop.f32.mrf.mxu0
        %v676 = vadd.f32 0.0, %v675
        %677 = vmatprep.mubr.f32.mxu0 0.0
        %678 = vmatmul.mubr.f32.gmra.mxu0 %v467
        %v679 = vpop.f32.mrf.mxu0
        %v680 = vadd.f32 0.0, %v679
        %v681 = vpop.f32.mrf.mxu0
        %v682 = vadd.f32 0.0, %v681
        %683 = vmatprep.mubr.f32.mxu0 0.0
        %684 = vmatmul.mubr.f32.gmra.mxu0 %v470
        %v685 = vpop.f32.mrf.mxu0
        %v686 = vadd.f32 0.0, %v685
        %v687 = vpop.f32.mrf.mxu0
        %v688 = vadd.f32 0.0, %v687
        %689 = vmatprep.mubr.f32.mxu0 0.0
        %690 = vmatmul.mubr.f32.gmra.mxu0 %v473
        %v691 = vpop.f32.mrf.mxu0
        %v692 = vadd.f32 0.0, %v691
        %v693 = vpop.f32.mrf.mxu0
        %v694 = vadd.f32 0.0, %v693
        %695 = vmatprep.mubr.f32.mxu0 0.0
        %696 = vmatmul.mubr.f32.gmra.mxu0 %v476
        %v697 = vpop.f32.mrf.mxu0
        %v698 = vadd.f32 0.0, %v697
        %v699 = vpop.f32.mrf.mxu0
        %v700 = vadd.f32 0.0, %v699
        %701 = vmatprep.mubr.f32.mxu0 0.0
        %702 = vmatmul.mubr.f32.gmra.mxu0 %v479
        %v703 = vpop.f32.mrf.mxu0
        %v704 = vadd.f32 0.0, %v703
        %v705 = vpop.f32.mrf.mxu0
        %v706 = vadd.f32 0.0, %v705
        %707 = vmatprep.mubr.f32.mxu0 0.0
        %708 = vmatmul.mubr.f32.gmra.mxu0 %v482
        %v709 = vpop.f32.mrf.mxu0
        %v710 = vadd.f32 0.0, %v709
        %v711 = vpop.f32.mrf.mxu0
        %v712 = vadd.f32 0.0, %v711
        %713 = vmatprep.mubr.f32.mxu0 0.0
        %714 = vmatmul.mubr.f32.gmra.mxu0 %v485
        %v715 = vpop.f32.mrf.mxu0
        %v716 = vadd.f32 0.0, %v715
        %v717 = vpop.f32.mrf.mxu0
        %v718 = vadd.f32 0.0, %v717
        %719 = vmatprep.mubr.f32.mxu0 0.0
        %720 = vmatmul.mubr.f32.gmra.mxu0 %v488
        %v721 = vpop.f32.mrf.mxu0
        %v722 = vadd.f32 0.0, %v721
        %v723 = vpop.f32.mrf.mxu0
        %v724 = vadd.f32 0.0, %v723
        %725 = vmatprep.mubr.f32.mxu0 0.0
        %726 = vmatmul.mubr.f32.gmra.mxu0 %v491
        %v727 = vpop.f32.mrf.mxu0
        %v728 = vadd.f32 0.0, %v727
        %v729 = vpop.f32.mrf.mxu0
        %v730 = vadd.f32 0.0, %v729
        %731 = vmatprep.mubr.f32.mxu0 0.0
        %732 = vmatmul.mubr.f32.gmra.mxu0 %v494
        %v733 = vpop.f32.mrf.mxu0
        %v734 = vadd.f32 0.0, %v733
        %v735 = vpop.f32.mrf.mxu0
        %v736 = vadd.f32 0.0, %v735
        %737 = vmatprep.mubr.f32.mxu0 0.0
        %738 = vmatmul.mubr.f32.gmra.mxu0 %v497
        %v739 = vpop.f32.mrf.mxu0
        %v740 = vadd.f32 0.0, %v739
        %v741 = vpop.f32.mrf.mxu0
        %v742 = vadd.f32 0.0, %v741
        %743 = vmatprep.mubr.f32.mxu0 0.0
        %744 = vmatmul.mubr.f32.gmra.mxu0 %v500
        %v745 = vpop.f32.mrf.mxu0
        %v746 = vadd.f32 0.0, %v745
        %v747 = vpop.f32.mrf.mxu0
        %v748 = vadd.f32 0.0, %v747
        %749 = vmatprep.mubr.f32.mxu0 0.0
        %750 = vmatmul.mubr.f32.gmra.mxu0 %v503
        %v751 = vpop.f32.mrf.mxu0
        %v752 = vadd.f32 0.0, %v751
        %v753 = vpop.f32.mrf.mxu0
        %v754 = vadd.f32 0.0, %v753
        %755 = vmatprep.mubr.f32.mxu0 0.0
        %756 = vmatmul.mubr.f32.gmra.mxu0 %v506
        %v757 = vpop.f32.mrf.mxu0
        %v758 = vadd.f32 0.0, %v757
        %v759 = vpop.f32.mrf.mxu0
        %v760 = vadd.f32 0.0, %v759
        %761 = vmatprep.mubr.f32.mxu0 0.0
        %762 = vmatmul.mubr.f32.gmra.mxu0 %v509
        %v763 = vpop.f32.mrf.mxu0
        %v764 = vadd.f32 0.0, %v763
        %v765 = vpop.f32.mrf.mxu0
        %v766 = vadd.f32 0.0, %v765
        %767 = vdwg.mxu0
        %v768 = vadd.f32 %v400, %v578
        %v769 = vadd.f32 %v404, %v580
        %v770 = vadd.f32 %v400, %v584
        %v771 = vadd.f32 %v404, %v586
        %v772 = vadd.f32 %v400, %v590
        %v773 = vadd.f32 %v404, %v592
        %v774 = vadd.f32 %v400, %v596
        %v775 = vadd.f32 %v404, %v598
        %v776 = vadd.f32 %v400, %v602
        %v777 = vadd.f32 %v404, %v604
        %v778 = vadd.f32 %v400, %v608
        %v779 = vadd.f32 %v404, %v610
        %v780 = vadd.f32 %v400, %v614
        %v781 = vadd.f32 %v404, %v616
        %v782 = vadd.f32 %v400, %v620
        %v783 = vadd.f32 %v404, %v622
        %v784 = vadd.f32 %v400, %v626
        %v785 = vadd.f32 %v404, %v628
        %v786 = vadd.f32 %v400, %v632
        %v787 = vadd.f32 %v404, %v634
        %v788 = vadd.f32 %v400, %v638
        %v789 = vadd.f32 %v404, %v640
        %v790 = vadd.f32 %v400, %v644
        %v791 = vadd.f32 %v404, %v646
        %v792 = vadd.f32 %v400, %v650
        %v793 = vadd.f32 %v404, %v652
        %v794 = vadd.f32 %v400, %v656
        %v795 = vadd.f32 %v404, %v658
        %v796 = vadd.f32 %v400, %v662
        %v797 = vadd.f32 %v404, %v664
        %v798 = vadd.f32 %v400, %v668
        %v799 = vadd.f32 %v404, %v670
        %v800 = vadd.f32 %v400, %v674
        %v801 = vadd.f32 %v404, %v676
        %v802 = vadd.f32 %v400, %v680
        %v803 = vadd.f32 %v404, %v682
        %v804 = vadd.f32 %v400, %v686
        %v805 = vadd.f32 %v404, %v688
        %v806 = vadd.f32 %v400, %v692
        %v807 = vadd.f32 %v404, %v694
        %v808 = vadd.f32 %v400, %v698
        %v809 = vadd.f32 %v404, %v700
        %v810 = vadd.f32 %v400, %v704
        %v811 = vadd.f32 %v404, %v706
        %v812 = vadd.f32 %v400, %v710
        %v813 = vadd.f32 %v404, %v712
        %v814 = vadd.f32 %v400, %v716
        %v815 = vadd.f32 %v404, %v718
        %v816 = vadd.f32 %v400, %v722
        %v817 = vadd.f32 %v404, %v724
        %v818 = vadd.f32 %v400, %v728
        %v819 = vadd.f32 %v404, %v730
        %v820 = vadd.f32 %v400, %v734
        %v821 = vadd.f32 %v404, %v736
        %v822 = vadd.f32 %v400, %v740
        %v823 = vadd.f32 %v404, %v742
        %v824 = vadd.f32 %v400, %v746
        %v825 = vadd.f32 %v404, %v748
        %v826 = vadd.f32 %v400, %v752
        %v827 = vadd.f32 %v404, %v754
        %v828 = vadd.f32 %v400, %v758
        %v829 = vadd.f32 %v404, %v760
        %v830 = vadd.f32 %v400, %v764
        %v831 = vadd.f32 %v404, %v766
        %s832 = scalar_lea.vmem %s1, 128
        %v833 = vld [vmem:[%s832] sm:$0xff]
        %v834 = vld [vmem:[%s832 + $0x8] sm:$0xff]
        %v835 = vld [vmem:[%s832 + $0x10] sm:$0xff]
        %v836 = vld [vmem:[%s832 + $0x18] sm:$0xff]
        %v837 = vld [vmem:[%s832 + $0x20] sm:$0xff]
        %v838 = vld [vmem:[%s832 + $0x28] sm:$0xff]
        %v839 = vld [vmem:[%s832 + $0x30] sm:$0xff]
        %v840 = vld [vmem:[%s832 + $0x38] sm:$0xff]
        %v841 = vld [vmem:[%s832 + $0x40] sm:$0xff]
        %v842 = vld [vmem:[%s832 + $0x48] sm:$0xff]
        %v843 = vld [vmem:[%s832 + $0x50] sm:$0xff]
        %v844 = vld [vmem:[%s832 + $0x58] sm:$0xff]
        %v845 = vld [vmem:[%s832 + $0x60] sm:$0xff]
        %v846 = vld [vmem:[%s832 + $0x68] sm:$0xff]
        %v847 = vld [vmem:[%s832 + $0x70] sm:$0xff]
        %v848 = vld [vmem:[%s832 + $0x78] sm:$0xff]
        %v850 = vsel %vm423, %v331, 0
        %v853 = vsel %vm423, %v332, 0
        %v856 = vsel %vm423, %v333, 0
        %v859 = vsel %vm423, %v334, 0
        %v862 = vsel %vm423, %v339, 0
        %v865 = vsel %vm423, %v340, 0
        %v868 = vsel %vm423, %v341, 0
        %v871 = vsel %vm423, %v342, 0
        %v874 = vsel %vm423, %v347, 0
        %v877 = vsel %vm423, %v348, 0
        %v880 = vsel %vm423, %v349, 0
        %v883 = vsel %vm423, %v350, 0
        %v886 = vsel %vm423, %v355, 0
        %v889 = vsel %vm423, %v356, 0
        %v892 = vsel %vm423, %v357, 0
        %v895 = vsel %vm423, %v358, 0
        %v898 = vsel %vm423, %v363, 0
        %v901 = vsel %vm423, %v364, 0
        %v904 = vsel %vm423, %v365, 0
        %v907 = vsel %vm423, %v366, 0
        %v910 = vsel %vm423, %v371, 0
        %v913 = vsel %vm423, %v372, 0
        %v916 = vsel %vm423, %v373, 0
        %v919 = vsel %vm423, %v374, 0
        %v922 = vsel %vm423, %v379, 0
        %v925 = vsel %vm423, %v380, 0
        %v928 = vsel %vm423, %v381, 0
        %v931 = vsel %vm423, %v382, 0
        %v934 = vsel %vm423, %v387, 0
        %v937 = vsel %vm423, %v388, 0
        %v940 = vsel %vm423, %v389, 0
        %v943 = vsel %vm423, %v390, 0
        %945 = vmatprep.subr.mxu0 0.0
        %946 = vmatpush1.msra.mxu0 0.0
        %947 = vmatprep.subr.mxu0 0.0
        %948 = vmatpush1.msra.mxu0 0.0
        %949 = vmatprep.subr.mxu0 0.0
        %950 = vmatpush1.msra.mxu0 0.0
        %951 = vmatprep.subr.mxu0 0.0
        %952 = vmatpush1.msra.mxu0 0.0
        %953 = vmatprep.subr.mxu0 0.0
        %954 = vmatpush1.msra.mxu0 0.0
        %955 = vmatprep.subr.mxu0 0.0
        %956 = vmatpush1.msra.mxu0 0.0
        %957 = vmatprep.subr.mxu0 0.0
        %958 = vmatpush1.msra.mxu0 0.0
        %959 = vmatprep.subr.mxu0 0.0
        %960 = vmatpush1.msra.mxu0 0.0
        %961 = vmatprep.subr.mxu0 %v848
        %962 = vmatpush1.msra.mxu0 %v847
        %963 = vmatprep.subr.mxu0 %v846
        %964 = vmatpush1.msra.mxu0 %v845
        %965 = vmatprep.subr.mxu0 %v844
        %966 = vmatpush1.msra.mxu0 %v843
        %967 = vmatprep.subr.mxu0 %v842
        %968 = vmatpush1.msra.mxu0 %v841
        %969 = vmatprep.subr.mxu0 %v840
        %970 = vmatpush1.msra.mxu0 %v839
        %971 = vmatprep.subr.mxu0 %v838
        %972 = vmatpush1.msra.mxu0 %v837
        %973 = vmatprep.subr.mxu0 %v836
        %974 = vmatpush1.msra.mxu0 %v835
        %975 = vmatprep.subr.mxu0 %v834
        %976 = vmatpush1.msra.mxu0 %v833
        %977 = vmatprep.subr.mxu0 0.0
        %978 = vmatpush2.msra.mxu0 0.0
        %979 = vmatprep.subr.mxu0 0.0
        %980 = vmatpush2.msra.mxu0 0.0
        %981 = vmatprep.subr.mxu0 0.0
        %982 = vmatpush2.msra.mxu0 0.0
        %983 = vmatprep.subr.mxu0 0.0
        %984 = vmatpush2.msra.mxu0 0.0
        %985 = vmatprep.subr.mxu0 0.0
        %986 = vmatpush2.msra.mxu0 0.0
        %987 = vmatprep.subr.mxu0 0.0
        %988 = vmatpush2.msra.mxu0 0.0
        %989 = vmatprep.subr.mxu0 0.0
        %990 = vmatpush2.msra.mxu0 0.0
        %991 = vmatprep.subr.mxu0 0.0
        %992 = vmatpush2.msra.mxu0 0.0
        %993 = vmatprep.subr.mxu0 0.0
        %994 = vmatpush2.msra.mxu0 0.0
        %995 = vmatprep.subr.mxu0 0.0
        %996 = vmatpush2.msra.mxu0 0.0
        %997 = vmatprep.subr.mxu0 0.0
        %998 = vmatpush2.msra.mxu0 0.0
        %999 = vmatprep.subr.mxu0 0.0
        %1000 = vmatpush2.msra.mxu0 0.0
        %1001 = vmatprep.subr.mxu0 0.0
        %1002 = vmatpush2.msra.mxu0 0.0
        %1003 = vmatprep.subr.mxu0 0.0
        %1004 = vmatpush2.msra.mxu0 0.0
        %1005 = vmatprep.subr.mxu0 0.0
        %1006 = vmatpush2.msra.mxu0 0.0
        %1007 = vmatprep.subr.mxu0 0.0
        %1008 = vmatpush2.msra.mxu0 0.0
        %1009 = vmatprep.mubr.f32.mxu0 0.0
        %1010 = vmatmul.mubr.f32.gmra.mxu0 %v850
        %v1011 = vpop.f32.mrf.mxu0
        %v1012 = vadd.f32 0.0, %v1011
        %v1013 = vpop.f32.mrf.mxu0
        %v1014 = vadd.f32 0.0, %v1013
        %1015 = vmatprep.mubr.f32.mxu0 0.0
        %1016 = vmatmul.mubr.f32.gmra.mxu0 %v853
        %v1017 = vpop.f32.mrf.mxu0
        %v1018 = vadd.f32 0.0, %v1017
        %v1019 = vpop.f32.mrf.mxu0
        %v1020 = vadd.f32 0.0, %v1019
        %1021 = vmatprep.mubr.f32.mxu0 0.0
        %1022 = vmatmul.mubr.f32.gmra.mxu0 %v856
        %v1023 = vpop.f32.mrf.mxu0
        %v1024 = vadd.f32 0.0, %v1023
        %v1025 = vpop.f32.mrf.mxu0
        %v1026 = vadd.f32 0.0, %v1025
        %1027 = vmatprep.mubr.f32.mxu0 0.0
        %1028 = vmatmul.mubr.f32.gmra.mxu0 %v859
        %v1029 = vpop.f32.mrf.mxu0
        %v1030 = vadd.f32 0.0, %v1029
        %v1031 = vpop.f32.mrf.mxu0
        %v1032 = vadd.f32 0.0, %v1031
        %1033 = vmatprep.mubr.f32.mxu0 0.0
        %1034 = vmatmul.mubr.f32.gmra.mxu0 %v862
        %v1035 = vpop.f32.mrf.mxu0
        %v1036 = vadd.f32 0.0, %v1035
        %v1037 = vpop.f32.mrf.mxu0
        %v1038 = vadd.f32 0.0, %v1037
        %1039 = vmatprep.mubr.f32.mxu0 0.0
        %1040 = vmatmul.mubr.f32.gmra.mxu0 %v865
        %v1041 = vpop.f32.mrf.mxu0
        %v1042 = vadd.f32 0.0, %v1041
        %v1043 = vpop.f32.mrf.mxu0
        %v1044 = vadd.f32 0.0, %v1043
        %1045 = vmatprep.mubr.f32.mxu0 0.0
        %1046 = vmatmul.mubr.f32.gmra.mxu0 %v868
        %v1047 = vpop.f32.mrf.mxu0
        %v1048 = vadd.f32 0.0, %v1047
        %v1049 = vpop.f32.mrf.mxu0
        %v1050 = vadd.f32 0.0, %v1049
        %1051 = vmatprep.mubr.f32.mxu0 0.0
        %1052 = vmatmul.mubr.f32.gmra.mxu0 %v871
        %v1053 = vpop.f32.mrf.mxu0
        %v1054 = vadd.f32 0.0, %v1053
        %v1055 = vpop.f32.mrf.mxu0
        %v1056 = vadd.f32 0.0, %v1055
        %1057 = vmatprep.mubr.f32.mxu0 0.0
        %1058 = vmatmul.mubr.f32.gmra.mxu0 %v874
        %v1059 = vpop.f32.mrf.mxu0
        %v1060 = vadd.f32 0.0, %v1059
        %v1061 = vpop.f32.mrf.mxu0
        %v1062 = vadd.f32 0.0, %v1061
        %1063 = vmatprep.mubr.f32.mxu0 0.0
        %1064 = vmatmul.mubr.f32.gmra.mxu0 %v877
        %v1065 = vpop.f32.mrf.mxu0
        %v1066 = vadd.f32 0.0, %v1065
        %v1067 = vpop.f32.mrf.mxu0
        %v1068 = vadd.f32 0.0, %v1067
        %1069 = vmatprep.mubr.f32.mxu0 0.0
        %1070 = vmatmul.mubr.f32.gmra.mxu0 %v880
        %v1071 = vpop.f32.mrf.mxu0
        %v1072 = vadd.f32 0.0, %v1071
        %v1073 = vpop.f32.mrf.mxu0
        %v1074 = vadd.f32 0.0, %v1073
        %1075 = vmatprep.mubr.f32.mxu0 0.0
        %1076 = vmatmul.mubr.f32.gmra.mxu0 %v883
        %v1077 = vpop.f32.mrf.mxu0
        %v1078 = vadd.f32 0.0, %v1077
        %v1079 = vpop.f32.mrf.mxu0
        %v1080 = vadd.f32 0.0, %v1079
        %1081 = vmatprep.mubr.f32.mxu0 0.0
        %1082 = vmatmul.mubr.f32.gmra.mxu0 %v886
        %v1083 = vpop.f32.mrf.mxu0
        %v1084 = vadd.f32 0.0, %v1083
        %v1085 = vpop.f32.mrf.mxu0
        %v1086 = vadd.f32 0.0, %v1085
        %1087 = vmatprep.mubr.f32.mxu0 0.0
        %1088 = vmatmul.mubr.f32.gmra.mxu0 %v889
        %v1089 = vpop.f32.mrf.mxu0
        %v1090 = vadd.f32 0.0, %v1089
        %v1091 = vpop.f32.mrf.mxu0
        %v1092 = vadd.f32 0.0, %v1091
        %1093 = vmatprep.mubr.f32.mxu0 0.0
        %1094 = vmatmul.mubr.f32.gmra.mxu0 %v892
        %v1095 = vpop.f32.mrf.mxu0
        %v1096 = vadd.f32 0.0, %v1095
        %v1097 = vpop.f32.mrf.mxu0
        %v1098 = vadd.f32 0.0, %v1097
        %1099 = vmatprep.mubr.f32.mxu0 0.0
        %1100 = vmatmul.mubr.f32.gmra.mxu0 %v895
        %v1101 = vpop.f32.mrf.mxu0
        %v1102 = vadd.f32 0.0, %v1101
        %v1103 = vpop.f32.mrf.mxu0
        %v1104 = vadd.f32 0.0, %v1103
        %1105 = vmatprep.mubr.f32.mxu0 0.0
        %1106 = vmatmul.mubr.f32.gmra.mxu0 %v898
        %v1107 = vpop.f32.mrf.mxu0
        %v1108 = vadd.f32 0.0, %v1107
        %v1109 = vpop.f32.mrf.mxu0
        %v1110 = vadd.f32 0.0, %v1109
        %1111 = vmatprep.mubr.f32.mxu0 0.0
        %1112 = vmatmul.mubr.f32.gmra.mxu0 %v901
        %v1113 = vpop.f32.mrf.mxu0
        %v1114 = vadd.f32 0.0, %v1113
        %v1115 = vpop.f32.mrf.mxu0
        %v1116 = vadd.f32 0.0, %v1115
        %1117 = vmatprep.mubr.f32.mxu0 0.0
        %1118 = vmatmul.mubr.f32.gmra.mxu0 %v904
        %v1119 = vpop.f32.mrf.mxu0
        %v1120 = vadd.f32 0.0, %v1119
        %v1121 = vpop.f32.mrf.mxu0
        %v1122 = vadd.f32 0.0, %v1121
        %1123 = vmatprep.mubr.f32.mxu0 0.0
        %1124 = vmatmul.mubr.f32.gmra.mxu0 %v907
        %v1125 = vpop.f32.mrf.mxu0
        %v1126 = vadd.f32 0.0, %v1125
        %v1127 = vpop.f32.mrf.mxu0
        %v1128 = vadd.f32 0.0, %v1127
        %1129 = vmatprep.mubr.f32.mxu0 0.0
        %1130 = vmatmul.mubr.f32.gmra.mxu0 %v910
        %v1131 = vpop.f32.mrf.mxu0
        %v1132 = vadd.f32 0.0, %v1131
        %v1133 = vpop.f32.mrf.mxu0
        %v1134 = vadd.f32 0.0, %v1133
        %1135 = vmatprep.mubr.f32.mxu0 0.0
        %1136 = vmatmul.mubr.f32.gmra.mxu0 %v913
        %v1137 = vpop.f32.mrf.mxu0
        %v1138 = vadd.f32 0.0, %v1137
        %v1139 = vpop.f32.mrf.mxu0
        %v1140 = vadd.f32 0.0, %v1139
        %1141 = vmatprep.mubr.f32.mxu0 0.0
        %1142 = vmatmul.mubr.f32.gmra.mxu0 %v916
        %v1143 = vpop.f32.mrf.mxu0
        %v1144 = vadd.f32 0.0, %v1143
        %v1145 = vpop.f32.mrf.mxu0
        %v1146 = vadd.f32 0.0, %v1145
        %1147 = vmatprep.mubr.f32.mxu0 0.0
        %1148 = vmatmul.mubr.f32.gmra.mxu0 %v919
        %v1149 = vpop.f32.mrf.mxu0
        %v1150 = vadd.f32 0.0, %v1149
        %v1151 = vpop.f32.mrf.mxu0
        %v1152 = vadd.f32 0.0, %v1151
        %1153 = vmatprep.mubr.f32.mxu0 0.0
        %1154 = vmatmul.mubr.f32.gmra.mxu0 %v922
        %v1155 = vpop.f32.mrf.mxu0
        %v1156 = vadd.f32 0.0, %v1155
        %v1157 = vpop.f32.mrf.mxu0
        %v1158 = vadd.f32 0.0, %v1157
        %1159 = vmatprep.mubr.f32.mxu0 0.0
        %1160 = vmatmul.mubr.f32.gmra.mxu0 %v925
        %v1161 = vpop.f32.mrf.mxu0
        %v1162 = vadd.f32 0.0, %v1161
        %v1163 = vpop.f32.mrf.mxu0
        %v1164 = vadd.f32 0.0, %v1163
        %1165 = vmatprep.mubr.f32.mxu0 0.0
        %1166 = vmatmul.mubr.f32.gmra.mxu0 %v928
        %v1167 = vpop.f32.mrf.mxu0
        %v1168 = vadd.f32 0.0, %v1167
        %v1169 = vpop.f32.mrf.mxu0
        %v1170 = vadd.f32 0.0, %v1169
        %1171 = vmatprep.mubr.f32.mxu0 0.0
        %1172 = vmatmul.mubr.f32.gmra.mxu0 %v931
        %v1173 = vpop.f32.mrf.mxu0
        %v1174 = vadd.f32 0.0, %v1173
        %v1175 = vpop.f32.mrf.mxu0
        %v1176 = vadd.f32 0.0, %v1175
        %1177 = vmatprep.mubr.f32.mxu0 0.0
        %1178 = vmatmul.mubr.f32.gmra.mxu0 %v934
        %v1179 = vpop.f32.mrf.mxu0
        %v1180 = vadd.f32 0.0, %v1179
        %v1181 = vpop.f32.mrf.mxu0
        %v1182 = vadd.f32 0.0, %v1181
        %1183 = vmatprep.mubr.f32.mxu0 0.0
        %1184 = vmatmul.mubr.f32.gmra.mxu0 %v937
        %v1185 = vpop.f32.mrf.mxu0
        %v1186 = vadd.f32 0.0, %v1185
        %v1187 = vpop.f32.mrf.mxu0
        %v1188 = vadd.f32 0.0, %v1187
        %1189 = vmatprep.mubr.f32.mxu0 0.0
        %1190 = vmatmul.mubr.f32.gmra.mxu0 %v940
        %v1191 = vpop.f32.mrf.mxu0
        %v1192 = vadd.f32 0.0, %v1191
        %v1193 = vpop.f32.mrf.mxu0
        %v1194 = vadd.f32 0.0, %v1193
        %1195 = vmatprep.mubr.f32.mxu0 0.0
        %1196 = vmatmul.mubr.f32.gmra.mxu0 %v943
        %v1197 = vpop.f32.mrf.mxu0
        %v1198 = vadd.f32 0.0, %v1197
        %v1199 = vpop.f32.mrf.mxu0
        %v1200 = vadd.f32 0.0, %v1199
        %1201 = vdwg.mxu0
        %v1202 = vadd.f32 %v768, %v1012
        %v1203 = vadd.f32 %v769, %v1014
        %v1204 = vadd.f32 %v770, %v1018
        %v1205 = vadd.f32 %v771, %v1020
        %v1206 = vadd.f32 %v772, %v1024
        %v1207 = vadd.f32 %v773, %v1026
        %v1208 = vadd.f32 %v774, %v1030
        %v1209 = vadd.f32 %v775, %v1032
        %v1210 = vadd.f32 %v776, %v1036
        %v1211 = vadd.f32 %v777, %v1038
        %v1212 = vadd.f32 %v778, %v1042
        %v1213 = vadd.f32 %v779, %v1044
        %v1214 = vadd.f32 %v780, %v1048
        %v1215 = vadd.f32 %v781, %v1050
        %v1216 = vadd.f32 %v782, %v1054
        %v1217 = vadd.f32 %v783, %v1056
        %v1218 = vadd.f32 %v784, %v1060
        %v1219 = vadd.f32 %v785, %v1062
        %v1220 = vadd.f32 %v786, %v1066
        %v1221 = vadd.f32 %v787, %v1068
        %v1222 = vadd.f32 %v788, %v1072
        %v1223 = vadd.f32 %v789, %v1074
        %v1224 = vadd.f32 %v790, %v1078
        %v1225 = vadd.f32 %v791, %v1080
        %v1226 = vadd.f32 %v792, %v1084
        %v1227 = vadd.f32 %v793, %v1086
        %v1228 = vadd.f32 %v794, %v1090
        %v1229 = vadd.f32 %v795, %v1092
        %v1230 = vadd.f32 %v796, %v1096
        %v1231 = vadd.f32 %v797, %v1098
        %v1232 = vadd.f32 %v798, %v1102
        %v1233 = vadd.f32 %v799, %v1104
        %v1234 = vadd.f32 %v800, %v1108
        %v1235 = vadd.f32 %v801, %v1110
        %v1236 = vadd.f32 %v802, %v1114
        %v1237 = vadd.f32 %v803, %v1116
        %v1238 = vadd.f32 %v804, %v1120
        %v1239 = vadd.f32 %v805, %v1122
        %v1240 = vadd.f32 %v806, %v1126
        %v1241 = vadd.f32 %v807, %v1128
        %v1242 = vadd.f32 %v808, %v1132
        %v1243 = vadd.f32 %v809, %v1134
        %v1244 = vadd.f32 %v810, %v1138
        %v1245 = vadd.f32 %v811, %v1140
        %v1246 = vadd.f32 %v812, %v1144
        %v1247 = vadd.f32 %v813, %v1146
        %v1248 = vadd.f32 %v814, %v1150
        %v1249 = vadd.f32 %v815, %v1152
        %v1250 = vadd.f32 %v816, %v1156
        %v1251 = vadd.f32 %v817, %v1158
        %v1252 = vadd.f32 %v818, %v1162
        %v1253 = vadd.f32 %v819, %v1164
        %v1254 = vadd.f32 %v820, %v1168
        %v1255 = vadd.f32 %v821, %v1170
        %v1256 = vadd.f32 %v822, %v1174
        %v1257 = vadd.f32 %v823, %v1176
        %v1258 = vadd.f32 %v824, %v1180
        %v1259 = vadd.f32 %v825, %v1182
        %v1260 = vadd.f32 %v826, %v1186
        %v1261 = vadd.f32 %v827, %v1188
        %v1262 = vadd.f32 %v828, %v1192
        %v1263 = vadd.f32 %v829, %v1194
        %v1264 = vadd.f32 %v830, %v1198
        %v1265 = vadd.f32 %v831, %v1200
        %s1266 = scalar_lea.vmem %s1, 256
        %v1267 = vld [vmem:[%s1266] sm:$0xff]
        %v1268 = vld [vmem:[%s1266 + $0x8] sm:$0xff]
        %v1269 = vld [vmem:[%s1266 + $0x10] sm:$0xff]
        %v1270 = vld [vmem:[%s1266 + $0x18] sm:$0xff]
        %v1271 = vld [vmem:[%s1266 + $0x20] sm:$0xff]
        %v1272 = vld [vmem:[%s1266 + $0x28] sm:$0xff]
        %v1273 = vld [vmem:[%s1266 + $0x30] sm:$0xff]
        %v1274 = vld [vmem:[%s1266 + $0x38] sm:$0xff]
        %v1275 = vld [vmem:[%s1266 + $0x40] sm:$0xff]
        %v1276 = vld [vmem:[%s1266 + $0x48] sm:$0xff]
        %v1277 = vld [vmem:[%s1266 + $0x50] sm:$0xff]
        %v1278 = vld [vmem:[%s1266 + $0x58] sm:$0xff]
        %v1279 = vld [vmem:[%s1266 + $0x60] sm:$0xff]
        %v1280 = vld [vmem:[%s1266 + $0x68] sm:$0xff]
        %v1281 = vld [vmem:[%s1266 + $0x70] sm:$0xff]
        %v1282 = vld [vmem:[%s1266 + $0x78] sm:$0xff]
        %v1284 = vsel %vm423, %v391, 0
        %v1287 = vsel %vm423, %v392, 0
        %v1290 = vsel %vm423, %v393, 0
        %v1293 = vsel %vm423, %v394, 0
        %1295 = vmatprep.subr.mxu0 0.0
        %1296 = vmatpush1.msra.mxu0 0.0
        %1297 = vmatprep.subr.mxu0 0.0
        %1298 = vmatpush1.msra.mxu0 0.0
        %1299 = vmatprep.subr.mxu0 0.0
        %1300 = vmatpush1.msra.mxu0 0.0
        %1301 = vmatprep.subr.mxu0 0.0
        %1302 = vmatpush1.msra.mxu0 0.0
        %1303 = vmatprep.subr.mxu0 0.0
        %1304 = vmatpush1.msra.mxu0 0.0
        %1305 = vmatprep.subr.mxu0 0.0
        %1306 = vmatpush1.msra.mxu0 0.0
        %1307 = vmatprep.subr.mxu0 0.0
        %1308 = vmatpush1.msra.mxu0 0.0
        %1309 = vmatprep.subr.mxu0 0.0
        %1310 = vmatpush1.msra.mxu0 0.0
        %1311 = vmatprep.subr.mxu0 %v1282
        %1312 = vmatpush1.msra.mxu0 %v1281
        %1313 = vmatprep.subr.mxu0 %v1280
        %1314 = vmatpush1.msra.mxu0 %v1279
        %1315 = vmatprep.subr.mxu0 %v1278
        %1316 = vmatpush1.msra.mxu0 %v1277
        %1317 = vmatprep.subr.mxu0 %v1276
        %1318 = vmatpush1.msra.mxu0 %v1275
        %1319 = vmatprep.subr.mxu0 %v1274
        %1320 = vmatpush1.msra.mxu0 %v1273
        %1321 = vmatprep.subr.mxu0 %v1272
        %1322 = vmatpush1.msra.mxu0 %v1271
        %1323 = vmatprep.subr.mxu0 %v1270
        %1324 = vmatpush1.msra.mxu0 %v1269
        %1325 = vmatprep.subr.mxu0 %v1268
        %1326 = vmatpush1.msra.mxu0 %v1267
        %1327 = vmatprep.subr.mxu0 0.0
        %1328 = vmatpush2.msra.mxu0 0.0
        %1329 = vmatprep.subr.mxu0 0.0
        %1330 = vmatpush2.msra.mxu0 0.0
        %1331 = vmatprep.subr.mxu0 0.0
        %1332 = vmatpush2.msra.mxu0 0.0
        %1333 = vmatprep.subr.mxu0 0.0
        %1334 = vmatpush2.msra.mxu0 0.0
        %1335 = vmatprep.subr.mxu0 0.0
        %1336 = vmatpush2.msra.mxu0 0.0
        %1337 = vmatprep.subr.mxu0 0.0
        %1338 = vmatpush2.msra.mxu0 0.0
        %1339 = vmatprep.subr.mxu0 0.0
        %1340 = vmatpush2.msra.mxu0 0.0
        %1341 = vmatprep.subr.mxu0 0.0
        %1342 = vmatpush2.msra.mxu0 0.0
        %1343 = vmatprep.subr.mxu0 0.0
        %1344 = vmatpush2.msra.mxu0 0.0
        %1345 = vmatprep.subr.mxu0 0.0
        %1346 = vmatpush2.msra.mxu0 0.0
        %1347 = vmatprep.subr.mxu0 0.0
        %1348 = vmatpush2.msra.mxu0 0.0
        %1349 = vmatprep.subr.mxu0 0.0
        %1350 = vmatpush2.msra.mxu0 0.0
        %1351 = vmatprep.subr.mxu0 0.0
        %1352 = vmatpush2.msra.mxu0 0.0
        %1353 = vmatprep.subr.mxu0 0.0
        %1354 = vmatpush2.msra.mxu0 0.0
        %1355 = vmatprep.subr.mxu0 0.0
        %1356 = vmatpush2.msra.mxu0 0.0
        %1357 = vmatprep.subr.mxu0 0.0
        %1358 = vmatpush2.msra.mxu0 0.0
        %1359 = vmatprep.mubr.f32.mxu0 0.0
        %1360 = vmatmul.mubr.f32.gmra.mxu0 %v428
        %v1361 = vpop.f32.mrf.mxu0
        %v1362 = vadd.f32 0.0, %v1361
        %v1363 = vpop.f32.mrf.mxu0
        %v1364 = vadd.f32 0.0, %v1363
        %1365 = vmatprep.mubr.f32.mxu0 0.0
        %1366 = vmatmul.mubr.f32.gmra.mxu0 %v431
        %v1367 = vpop.f32.mrf.mxu0
        %v1368 = vadd.f32 0.0, %v1367
        %v1369 = vpop.f32.mrf.mxu0
        %v1370 = vadd.f32 0.0, %v1369
        %1371 = vmatprep.mubr.f32.mxu0 0.0
        %1372 = vmatmul.mubr.f32.gmra.mxu0 %v434
        %v1373 = vpop.f32.mrf.mxu0
        %v1374 = vadd.f32 0.0, %v1373
        %v1375 = vpop.f32.mrf.mxu0
        %v1376 = vadd.f32 0.0, %v1375
        %1377 = vmatprep.mubr.f32.mxu0 0.0
        %1378 = vmatmul.mubr.f32.gmra.mxu0 %v437
        %v1379 = vpop.f32.mrf.mxu0
        %v1380 = vadd.f32 0.0, %v1379
        %v1381 = vpop.f32.mrf.mxu0
        %v1382 = vadd.f32 0.0, %v1381
        %1383 = vmatprep.mubr.f32.mxu0 0.0
        %1384 = vmatmul.mubr.f32.gmra.mxu0 %v440
        %v1385 = vpop.f32.mrf.mxu0
        %v1386 = vadd.f32 0.0, %v1385
        %v1387 = vpop.f32.mrf.mxu0
        %v1388 = vadd.f32 0.0, %v1387
        %1389 = vmatprep.mubr.f32.mxu0 0.0
        %1390 = vmatmul.mubr.f32.gmra.mxu0 %v443
        %v1391 = vpop.f32.mrf.mxu0
        %v1392 = vadd.f32 0.0, %v1391
        %v1393 = vpop.f32.mrf.mxu0
        %v1394 = vadd.f32 0.0, %v1393
        %1395 = vmatprep.mubr.f32.mxu0 0.0
        %1396 = vmatmul.mubr.f32.gmra.mxu0 %v446
        %v1397 = vpop.f32.mrf.mxu0
        %v1398 = vadd.f32 0.0, %v1397
        %v1399 = vpop.f32.mrf.mxu0
        %v1400 = vadd.f32 0.0, %v1399
        %1401 = vmatprep.mubr.f32.mxu0 0.0
        %1402 = vmatmul.mubr.f32.gmra.mxu0 %v449
        %v1403 = vpop.f32.mrf.mxu0
        %v1404 = vadd.f32 0.0, %v1403
        %v1405 = vpop.f32.mrf.mxu0
        %v1406 = vadd.f32 0.0, %v1405
        %1407 = vmatprep.mubr.f32.mxu0 0.0
        %1408 = vmatmul.mubr.f32.gmra.mxu0 %v452
        %v1409 = vpop.f32.mrf.mxu0
        %v1410 = vadd.f32 0.0, %v1409
        %v1411 = vpop.f32.mrf.mxu0
        %v1412 = vadd.f32 0.0, %v1411
        %1413 = vmatprep.mubr.f32.mxu0 0.0
        %1414 = vmatmul.mubr.f32.gmra.mxu0 %v455
        %v1415 = vpop.f32.mrf.mxu0
        %v1416 = vadd.f32 0.0, %v1415
        %v1417 = vpop.f32.mrf.mxu0
        %v1418 = vadd.f32 0.0, %v1417
        %1419 = vmatprep.mubr.f32.mxu0 0.0
        %1420 = vmatmul.mubr.f32.gmra.mxu0 %v458
        %v1421 = vpop.f32.mrf.mxu0
        %v1422 = vadd.f32 0.0, %v1421
        %v1423 = vpop.f32.mrf.mxu0
        %v1424 = vadd.f32 0.0, %v1423
        %1425 = vmatprep.mubr.f32.mxu0 0.0
        %1426 = vmatmul.mubr.f32.gmra.mxu0 %v461
        %v1427 = vpop.f32.mrf.mxu0
        %v1428 = vadd.f32 0.0, %v1427
        %v1429 = vpop.f32.mrf.mxu0
        %v1430 = vadd.f32 0.0, %v1429
        %1431 = vmatprep.mubr.f32.mxu0 0.0
        %1432 = vmatmul.mubr.f32.gmra.mxu0 %v464
        %v1433 = vpop.f32.mrf.mxu0
        %v1434 = vadd.f32 0.0, %v1433
        %v1435 = vpop.f32.mrf.mxu0
        %v1436 = vadd.f32 0.0, %v1435
        %1437 = vmatprep.mubr.f32.mxu0 0.0
        %1438 = vmatmul.mubr.f32.gmra.mxu0 %v467
        %v1439 = vpop.f32.mrf.mxu0
        %v1440 = vadd.f32 0.0, %v1439
        %v1441 = vpop.f32.mrf.mxu0
        %v1442 = vadd.f32 0.0, %v1441
        %1443 = vmatprep.mubr.f32.mxu0 0.0
        %1444 = vmatmul.mubr.f32.gmra.mxu0 %v470
        %v1445 = vpop.f32.mrf.mxu0
        %v1446 = vadd.f32 0.0, %v1445
        %v1447 = vpop.f32.mrf.mxu0
        %v1448 = vadd.f32 0.0, %v1447
        %1449 = vmatprep.mubr.f32.mxu0 0.0
        %1450 = vmatmul.mubr.f32.gmra.mxu0 %v473
        %v1451 = vpop.f32.mrf.mxu0
        %v1452 = vadd.f32 0.0, %v1451
        %v1453 = vpop.f32.mrf.mxu0
        %v1454 = vadd.f32 0.0, %v1453
        %1455 = vmatprep.mubr.f32.mxu0 0.0
        %1456 = vmatmul.mubr.f32.gmra.mxu0 %v476
        %v1457 = vpop.f32.mrf.mxu0
        %v1458 = vadd.f32 0.0, %v1457
        %v1459 = vpop.f32.mrf.mxu0
        %v1460 = vadd.f32 0.0, %v1459
        %1461 = vmatprep.mubr.f32.mxu0 0.0
        %1462 = vmatmul.mubr.f32.gmra.mxu0 %v479
        %v1463 = vpop.f32.mrf.mxu0
        %v1464 = vadd.f32 0.0, %v1463
        %v1465 = vpop.f32.mrf.mxu0
        %v1466 = vadd.f32 0.0, %v1465
        %1467 = vmatprep.mubr.f32.mxu0 0.0
        %1468 = vmatmul.mubr.f32.gmra.mxu0 %v482
        %v1469 = vpop.f32.mrf.mxu0
        %v1470 = vadd.f32 0.0, %v1469
        %v1471 = vpop.f32.mrf.mxu0
        %v1472 = vadd.f32 0.0, %v1471
        %1473 = vmatprep.mubr.f32.mxu0 0.0
        %1474 = vmatmul.mubr.f32.gmra.mxu0 %v485
        %v1475 = vpop.f32.mrf.mxu0
        %v1476 = vadd.f32 0.0, %v1475
        %v1477 = vpop.f32.mrf.mxu0
        %v1478 = vadd.f32 0.0, %v1477
        %1479 = vmatprep.mubr.f32.mxu0 0.0
        %1480 = vmatmul.mubr.f32.gmra.mxu0 %v488
        %v1481 = vpop.f32.mrf.mxu0
        %v1482 = vadd.f32 0.0, %v1481
        %v1483 = vpop.f32.mrf.mxu0
        %v1484 = vadd.f32 0.0, %v1483
        %1485 = vmatprep.mubr.f32.mxu0 0.0
        %1486 = vmatmul.mubr.f32.gmra.mxu0 %v491
        %v1487 = vpop.f32.mrf.mxu0
        %v1488 = vadd.f32 0.0, %v1487
        %v1489 = vpop.f32.mrf.mxu0
        %v1490 = vadd.f32 0.0, %v1489
        %1491 = vmatprep.mubr.f32.mxu0 0.0
        %1492 = vmatmul.mubr.f32.gmra.mxu0 %v494
        %v1493 = vpop.f32.mrf.mxu0
        %v1494 = vadd.f32 0.0, %v1493
        %v1495 = vpop.f32.mrf.mxu0
        %v1496 = vadd.f32 0.0, %v1495
        %1497 = vmatprep.mubr.f32.mxu0 0.0
        %1498 = vmatmul.mubr.f32.gmra.mxu0 %v497
        %v1499 = vpop.f32.mrf.mxu0
        %v1500 = vadd.f32 0.0, %v1499
        %v1501 = vpop.f32.mrf.mxu0
        %v1502 = vadd.f32 0.0, %v1501
        %1503 = vmatprep.mubr.f32.mxu0 0.0
        %1504 = vmatmul.mubr.f32.gmra.mxu0 %v500
        %v1505 = vpop.f32.mrf.mxu0
        %v1506 = vadd.f32 0.0, %v1505
        %v1507 = vpop.f32.mrf.mxu0
        %v1508 = vadd.f32 0.0, %v1507
        %1509 = vmatprep.mubr.f32.mxu0 0.0
        %1510 = vmatmul.mubr.f32.gmra.mxu0 %v503
        %v1511 = vpop.f32.mrf.mxu0
        %v1512 = vadd.f32 0.0, %v1511
        %v1513 = vpop.f32.mrf.mxu0
        %v1514 = vadd.f32 0.0, %v1513
        %1515 = vmatprep.mubr.f32.mxu0 0.0
        %1516 = vmatmul.mubr.f32.gmra.mxu0 %v506
        %v1517 = vpop.f32.mrf.mxu0
        %v1518 = vadd.f32 0.0, %v1517
        %v1519 = vpop.f32.mrf.mxu0
        %v1520 = vadd.f32 0.0, %v1519
        %1521 = vmatprep.mubr.f32.mxu0 0.0
        %1522 = vmatmul.mubr.f32.gmra.mxu0 %v509
        %v1523 = vpop.f32.mrf.mxu0
        %v1524 = vadd.f32 0.0, %v1523
        %v1525 = vpop.f32.mrf.mxu0
        %v1526 = vadd.f32 0.0, %v1525
        %1527 = vmatprep.mubr.f32.mxu0 0.0
        %1528 = vmatmul.mubr.f32.gmra.mxu0 %v1284
        %v1529 = vpop.f32.mrf.mxu0
        %v1530 = vadd.f32 0.0, %v1529
        %v1531 = vpop.f32.mrf.mxu0
        %v1532 = vadd.f32 0.0, %v1531
        %1533 = vmatprep.mubr.f32.mxu0 0.0
        %1534 = vmatmul.mubr.f32.gmra.mxu0 %v1287
        %v1535 = vpop.f32.mrf.mxu0
        %v1536 = vadd.f32 0.0, %v1535
        %v1537 = vpop.f32.mrf.mxu0
        %v1538 = vadd.f32 0.0, %v1537
        %1539 = vmatprep.mubr.f32.mxu0 0.0
        %1540 = vmatmul.mubr.f32.gmra.mxu0 %v1290
        %v1541 = vpop.f32.mrf.mxu0
        %v1542 = vadd.f32 0.0, %v1541
        %v1543 = vpop.f32.mrf.mxu0
        %v1544 = vadd.f32 0.0, %v1543
        %1545 = vmatprep.mubr.f32.mxu0 0.0
        %1546 = vmatmul.mubr.f32.gmra.mxu0 %v1293
        %v1547 = vpop.f32.mrf.mxu0
        %v1548 = vadd.f32 0.0, %v1547
        %v1549 = vpop.f32.mrf.mxu0
        %v1550 = vadd.f32 0.0, %v1549
        %1551 = vdwg.mxu0
        %v1552 = vadd.f32 %v1202, %v1362
        %v1553 = vadd.f32 %v1203, %v1364
        %v1554 = vadd.f32 %v1204, %v1368
        %v1555 = vadd.f32 %v1205, %v1370
        %v1556 = vadd.f32 %v1206, %v1374
        %v1557 = vadd.f32 %v1207, %v1376
        %v1558 = vadd.f32 %v1208, %v1380
        %v1559 = vadd.f32 %v1209, %v1382
        %v1560 = vadd.f32 %v1210, %v1386
        %v1561 = vadd.f32 %v1211, %v1388
        %v1562 = vadd.f32 %v1212, %v1392
        %v1563 = vadd.f32 %v1213, %v1394
        %v1564 = vadd.f32 %v1214, %v1398
        %v1565 = vadd.f32 %v1215, %v1400
        %v1566 = vadd.f32 %v1216, %v1404
        %v1567 = vadd.f32 %v1217, %v1406
        %v1568 = vadd.f32 %v1218, %v1410
        %v1569 = vadd.f32 %v1219, %v1412
        %v1570 = vadd.f32 %v1220, %v1416
        %v1571 = vadd.f32 %v1221, %v1418
        %v1572 = vadd.f32 %v1222, %v1422
        %v1573 = vadd.f32 %v1223, %v1424
        %v1574 = vadd.f32 %v1224, %v1428
        %v1575 = vadd.f32 %v1225, %v1430
        %v1576 = vadd.f32 %v1226, %v1434
        %v1577 = vadd.f32 %v1227, %v1436
        %v1578 = vadd.f32 %v1228, %v1440
        %v1579 = vadd.f32 %v1229, %v1442
        %v1580 = vadd.f32 %v1230, %v1446
        %v1581 = vadd.f32 %v1231, %v1448
        %v1582 = vadd.f32 %v1232, %v1452
        %v1583 = vadd.f32 %v1233, %v1454
        %v1584 = vadd.f32 %v1234, %v1458
        %v1585 = vadd.f32 %v1235, %v1460
        %v1586 = vadd.f32 %v1236, %v1464
        %v1587 = vadd.f32 %v1237, %v1466
        %v1588 = vadd.f32 %v1238, %v1470
        %v1589 = vadd.f32 %v1239, %v1472
        %v1590 = vadd.f32 %v1240, %v1476
        %v1591 = vadd.f32 %v1241, %v1478
        %v1592 = vadd.f32 %v1242, %v1482
        %v1593 = vadd.f32 %v1243, %v1484
        %v1594 = vadd.f32 %v1244, %v1488
        %v1595 = vadd.f32 %v1245, %v1490
        %v1596 = vadd.f32 %v1246, %v1494
        %v1597 = vadd.f32 %v1247, %v1496
        %v1598 = vadd.f32 %v1248, %v1500
        %v1599 = vadd.f32 %v1249, %v1502
        %v1600 = vadd.f32 %v1250, %v1506
        %v1601 = vadd.f32 %v1251, %v1508
        %v1602 = vadd.f32 %v1252, %v1512
        %v1603 = vadd.f32 %v1253, %v1514
        %v1604 = vadd.f32 %v1254, %v1518
        %v1605 = vadd.f32 %v1255, %v1520
        %v1606 = vadd.f32 %v1256, %v1524
        %v1607 = vadd.f32 %v1257, %v1526
        %v1608 = vadd.f32 %v1258, %v1530
        %v1609 = vadd.f32 %v1259, %v1532
        %v1610 = vadd.f32 %v1260, %v1536
        %v1611 = vadd.f32 %v1261, %v1538
        %v1612 = vadd.f32 %v1262, %v1542
        %v1613 = vadd.f32 %v1263, %v1544
        %v1614 = vadd.f32 %v1264, %v1548
        %v1615 = vadd.f32 %v1265, %v1550
        %v1616 = vmax.f32 %v1552, 0.0
        %v1617 = vmax.f32 %v1553, 0.0
        %v1618 = vmax.f32 %v1554, 0.0
        %v1619 = vmax.f32 %v1555, 0.0
        %v1620 = vmax.f32 %v1556, 0.0
        %v1621 = vmax.f32 %v1557, 0.0
        %v1622 = vmax.f32 %v1558, 0.0
        %v1623 = vmax.f32 %v1559, 0.0
        %v1624 = vmax.f32 %v1560, 0.0
        %v1625 = vmax.f32 %v1561, 0.0
        %v1626 = vmax.f32 %v1562, 0.0
        %v1627 = vmax.f32 %v1563, 0.0
        %v1628 = vmax.f32 %v1564, 0.0
        %v1629 = vmax.f32 %v1565, 0.0
        %v1630 = vmax.f32 %v1566, 0.0
        %v1631 = vmax.f32 %v1567, 0.0
        %v1632 = vmax.f32 %v1568, 0.0
        %v1633 = vmax.f32 %v1569, 0.0
        %v1634 = vmax.f32 %v1570, 0.0
        %v1635 = vmax.f32 %v1571, 0.0
        %v1636 = vmax.f32 %v1572, 0.0
        %v1637 = vmax.f32 %v1573, 0.0
        %v1638 = vmax.f32 %v1574, 0.0
        %v1639 = vmax.f32 %v1575, 0.0
        %v1640 = vmax.f32 %v1576, 0.0
        %v1641 = vmax.f32 %v1577, 0.0
        %v1642 = vmax.f32 %v1578, 0.0
        %v1643 = vmax.f32 %v1579, 0.0
        %v1644 = vmax.f32 %v1580, 0.0
        %v1645 = vmax.f32 %v1581, 0.0
        %v1646 = vmax.f32 %v1582, 0.0
        %v1647 = vmax.f32 %v1583, 0.0
        %v1648 = vmax.f32 %v1584, 0.0
        %v1649 = vmax.f32 %v1585, 0.0
        %v1650 = vmax.f32 %v1586, 0.0
        %v1651 = vmax.f32 %v1587, 0.0
        %v1652 = vmax.f32 %v1588, 0.0
        %v1653 = vmax.f32 %v1589, 0.0
        %v1654 = vmax.f32 %v1590, 0.0
        %v1655 = vmax.f32 %v1591, 0.0
        %v1656 = vmax.f32 %v1592, 0.0
        %v1657 = vmax.f32 %v1593, 0.0
        %v1658 = vmax.f32 %v1594, 0.0
        %v1659 = vmax.f32 %v1595, 0.0
        %v1660 = vmax.f32 %v1596, 0.0
        %v1661 = vmax.f32 %v1597, 0.0
        %v1662 = vmax.f32 %v1598, 0.0
        %v1663 = vmax.f32 %v1599, 0.0
        %v1664 = vmax.f32 %v1600, 0.0
        %v1665 = vmax.f32 %v1601, 0.0
        %v1666 = vmax.f32 %v1602, 0.0
        %v1667 = vmax.f32 %v1603, 0.0
        %v1668 = vmax.f32 %v1604, 0.0
        %v1669 = vmax.f32 %v1605, 0.0
        %v1670 = vmax.f32 %v1606, 0.0
        %v1671 = vmax.f32 %v1607, 0.0
        %v1672 = vmax.f32 %v1608, 0.0
        %v1673 = vmax.f32 %v1609, 0.0
        %v1674 = vmax.f32 %v1610, 0.0
        %v1675 = vmax.f32 %v1611, 0.0
        %v1676 = vmax.f32 %v1612, 0.0
        %v1677 = vmax.f32 %v1613, 0.0
        %v1678 = vmax.f32 %v1614, 0.0
        %v1679 = vmax.f32 %v1615, 0.0
        %v1680 = vld [vmem:[%s4] sm:$0x3]
        %v1682 = vlaneseq
        %v1683 = vshrl.u32 %v1682, 7
        %v1684 = vsub.s32 0, %v1683
        %v1685 = vrot.slane %v1680, %v1684
        %v1686 = vlaneseq
        %v1687 = vshrl.u32 %v1686, 7
        %v1688 = vsub.s32 1, %v1687
        %v1689 = vrot.slane %v1680, %v1688
        %v1692 = vld [vmem:[%s3] sm:$0xff]
        %v1693 = vld [vmem:[%s3 + $0x8] sm:$0xff]
        %v1694 = vld [vmem:[%s3 + $0x10] sm:$0xff]
        %v1695 = vld [vmem:[%s3 + $0x18] sm:$0xff]
        %v1696 = vld [vmem:[%s3 + $0x20] sm:$0xff]
        %v1697 = vld [vmem:[%s3 + $0x28] sm:$0xff]
        %v1698 = vld [vmem:[%s3 + $0x30] sm:$0xff]
        %v1699 = vld [vmem:[%s3 + $0x38] sm:$0xff]
        %v1700 = vld [vmem:[%s3 + $0x40] sm:$0xff]
        %v1701 = vld [vmem:[%s3 + $0x48] sm:$0xff]
        %v1702 = vld [vmem:[%s3 + $0x50] sm:$0xff]
        %v1703 = vld [vmem:[%s3 + $0x58] sm:$0xff]
        %v1704 = vld [vmem:[%s3 + $0x60] sm:$0xff]
        %v1705 = vld [vmem:[%s3 + $0x68] sm:$0xff]
        %v1706 = vld [vmem:[%s3 + $0x70] sm:$0xff]
        %v1707 = vld [vmem:[%s3 + $0x78] sm:$0xff]
        %v1708 = vld [vmem:[%s3 + $0x80] sm:$0xff]
        %v1709 = vld [vmem:[%s3 + $0x88] sm:$0xff]
        %v1710 = vld [vmem:[%s3 + $0x90] sm:$0xff]
        %v1711 = vld [vmem:[%s3 + $0x98] sm:$0xff]
        %v1712 = vld [vmem:[%s3 + $0xa0] sm:$0xff]
        %v1713 = vld [vmem:[%s3 + $0xa8] sm:$0xff]
        %v1714 = vld [vmem:[%s3 + $0xb0] sm:$0xff]
        %v1715 = vld [vmem:[%s3 + $0xb8] sm:$0xff]
        %v1716 = vld [vmem:[%s3 + $0xc0] sm:$0xff]
        %v1717 = vld [vmem:[%s3 + $0xc8] sm:$0xff]
        %v1718 = vld [vmem:[%s3 + $0xd0] sm:$0xff]
        %v1719 = vld [vmem:[%s3 + $0xd8] sm:$0xff]
        %v1720 = vld [vmem:[%s3 + $0xe0] sm:$0xff]
        %v1721 = vld [vmem:[%s3 + $0xe8] sm:$0xff]
        %v1722 = vld [vmem:[%s3 + $0xf0] sm:$0xff]
        %v1723 = vld [vmem:[%s3 + $0xf8] sm:$0xff]
        %v1724 = vld [vmem:[%s3 + $0x100] sm:$0xff]
        %v1725 = vld [vmem:[%s3 + $0x108] sm:$0xff]
        %v1726 = vld [vmem:[%s3 + $0x110] sm:$0xff]
        %v1727 = vld [vmem:[%s3 + $0x118] sm:$0xff]
        %v1728 = vld [vmem:[%s3 + $0x120] sm:$0xff]
        %v1729 = vld [vmem:[%s3 + $0x128] sm:$0xff]
        %v1730 = vld [vmem:[%s3 + $0x130] sm:$0xff]
        %v1731 = vld [vmem:[%s3 + $0x138] sm:$0xff]
        %v1732 = vld [vmem:[%s3 + $0x140] sm:$0xff]
        %v1733 = vld [vmem:[%s3 + $0x148] sm:$0xff]
        %v1734 = vld [vmem:[%s3 + $0x150] sm:$0xff]
        %v1735 = vld [vmem:[%s3 + $0x158] sm:$0xff]
        %v1736 = vld [vmem:[%s3 + $0x160] sm:$0xff]
        %v1737 = vld [vmem:[%s3 + $0x168] sm:$0xff]
        %v1738 = vld [vmem:[%s3 + $0x170] sm:$0xff]
        %v1739 = vld [vmem:[%s3 + $0x178] sm:$0xff]
        %v1740 = vld [vmem:[%s3 + $0x180] sm:$0xff]
        %v1741 = vld [vmem:[%s3 + $0x188] sm:$0xff]
        %v1742 = vld [vmem:[%s3 + $0x190] sm:$0xff]
        %v1743 = vld [vmem:[%s3 + $0x198] sm:$0xff]
        %v1744 = vld [vmem:[%s3 + $0x1a0] sm:$0xff]
        %v1745 = vld [vmem:[%s3 + $0x1a8] sm:$0xff]
        %v1746 = vld [vmem:[%s3 + $0x1b0] sm:$0xff]
        %v1747 = vld [vmem:[%s3 + $0x1b8] sm:$0xff]
        %v1748 = vld [vmem:[%s3 + $0x1c0] sm:$0xff]
        %v1749 = vld [vmem:[%s3 + $0x1c8] sm:$0xff]
        %v1750 = vld [vmem:[%s3 + $0x1d0] sm:$0xff]
        %v1751 = vld [vmem:[%s3 + $0x1d8] sm:$0xff]
        %v1752 = vld [vmem:[%s3 + $0x1e0] sm:$0xff]
        %v1753 = vld [vmem:[%s3 + $0x1e8] sm:$0xff]
        %v1754 = vld [vmem:[%s3 + $0x1f0] sm:$0xff]
        %v1755 = vld [vmem:[%s3 + $0x1f8] sm:$0xff]
        %1756 = vmatprep.subr.mxu0 %v1723
        %1757 = vmatpush1.msra.mxu0 %v1722
        %1758 = vmatprep.subr.mxu0 %v1721
        %1759 = vmatpush1.msra.mxu0 %v1720
        %1760 = vmatprep.subr.mxu0 %v1719
        %1761 = vmatpush1.msra.mxu0 %v1718
        %1762 = vmatprep.subr.mxu0 %v1717
        %1763 = vmatpush1.msra.mxu0 %v1716
        %1764 = vmatprep.subr.mxu0 %v1715
        %1765 = vmatpush1.msra.mxu0 %v1714
        %1766 = vmatprep.subr.mxu0 %v1713
        %1767 = vmatpush1.msra.mxu0 %v1712
        %1768 = vmatprep.subr.mxu0 %v1711
        %1769 = vmatpush1.msra.mxu0 %v1710
        %1770 = vmatprep.subr.mxu0 %v1709
        %1771 = vmatpush1.msra.mxu0 %v1708
        %1772 = vmatprep.subr.mxu0 %v1707
        %1773 = vmatpush1.msra.mxu0 %v1706
        %1774 = vmatprep.subr.mxu0 %v1705
        %1775 = vmatpush1.msra.mxu0 %v1704
        %1776 = vmatprep.subr.mxu0 %v1703
        %1777 = vmatpush1.msra.mxu0 %v1702
        %1778 = vmatprep.subr.mxu0 %v1701
        %1779 = vmatpush1.msra.mxu0 %v1700
        %1780 = vmatprep.subr.mxu0 %v1699
        %1781 = vmatpush1.msra.mxu0 %v1698
        %1782 = vmatprep.subr.mxu0 %v1697
        %1783 = vmatpush1.msra.mxu0 %v1696
        %1784 = vmatprep.subr.mxu0 %v1695
        %1785 = vmatpush1.msra.mxu0 %v1694
        %1786 = vmatprep.subr.mxu0 %v1693
        %1787 = vmatpush1.msra.mxu0 %v1692
        %1788 = vmatprep.subr.mxu0 %v1755
        %1789 = vmatpush2.msra.mxu0 %v1754
        %1790 = vmatprep.subr.mxu0 %v1753
        %1791 = vmatpush2.msra.mxu0 %v1752
        %1792 = vmatprep.subr.mxu0 %v1751
        %1793 = vmatpush2.msra.mxu0 %v1750
        %1794 = vmatprep.subr.mxu0 %v1749
        %1795 = vmatpush2.msra.mxu0 %v1748
        %1796 = vmatprep.subr.mxu0 %v1747
        %1797 = vmatpush2.msra.mxu0 %v1746
        %1798 = vmatprep.subr.mxu0 %v1745
        %1799 = vmatpush2.msra.mxu0 %v1744
        %1800 = vmatprep.subr.mxu0 %v1743
        %1801 = vmatpush2.msra.mxu0 %v1742
        %1802 = vmatprep.subr.mxu0 %v1741
        %1803 = vmatpush2.msra.mxu0 %v1740
        %1804 = vmatprep.subr.mxu0 %v1739
        %1805 = vmatpush2.msra.mxu0 %v1738
        %1806 = vmatprep.subr.mxu0 %v1737
        %1807 = vmatpush2.msra.mxu0 %v1736
        %1808 = vmatprep.subr.mxu0 %v1735
        %1809 = vmatpush2.msra.mxu0 %v1734
        %1810 = vmatprep.subr.mxu0 %v1733
        %1811 = vmatpush2.msra.mxu0 %v1732
        %1812 = vmatprep.subr.mxu0 %v1731
        %1813 = vmatpush2.msra.mxu0 %v1730
        %1814 = vmatprep.subr.mxu0 %v1729
        %1815 = vmatpush2.msra.mxu0 %v1728
        %1816 = vmatprep.subr.mxu0 %v1727
        %1817 = vmatpush2.msra.mxu0 %v1726
        %1818 = vmatprep.subr.mxu0 %v1725
        %1819 = vmatpush2.msra.mxu0 %v1724
        %1820 = vmatprep.mubr.f32.mxu0 0.0
        %1821 = vmatmul.mubr.f32.gmra.mxu0 0.0
        %v1822 = vpop.f32.mrf.mxu0
        %v1823 = vadd.f32 0.0, %v1822
        %v1824 = vpop.f32.mrf.mxu0
        %v1825 = vadd.f32 0.0, %v1824
        %1826 = vmatprep.mubr.f32.mxu0 0.0
        %1827 = vmatmul.mubr.f32.gmra.mxu0 0.0
        %v1828 = vpop.f32.mrf.mxu0
        %v1829 = vadd.f32 0.0, %v1828
        %v1830 = vpop.f32.mrf.mxu0
        %v1831 = vadd.f32 0.0, %v1830
        %1832 = vmatprep.mubr.f32.mxu0 0.0
        %1833 = vmatmul.mubr.f32.gmra.mxu0 0.0
        %v1834 = vpop.f32.mrf.mxu0
        %v1835 = vadd.f32 0.0, %v1834
        %v1836 = vpop.f32.mrf.mxu0
        %v1837 = vadd.f32 0.0, %v1836
        %1838 = vmatprep.mubr.f32.mxu0 0.0
        %1839 = vmatmul.mubr.f32.gmra.mxu0 0.0
        %v1840 = vpop.f32.mrf.mxu0
        %v1841 = vadd.f32 0.0, %v1840
        %v1842 = vpop.f32.mrf.mxu0
        %v1843 = vadd.f32 0.0, %v1842
        %1844 = vmatprep.mubr.f32.mxu0 %v1625
        %1845 = vmatmul.mubr.f32.gmra.mxu0 %v1624
        %v1846 = vpop.f32.mrf.mxu0
        %v1847 = vadd.f32 0.0, %v1846
        %v1848 = vpop.f32.mrf.mxu0
        %v1849 = vadd.f32 0.0, %v1848
        %1850 = vmatprep.mubr.f32.mxu0 %v1627
        %1851 = vmatmul.mubr.f32.gmra.mxu0 %v1626
        %v1852 = vpop.f32.mrf.mxu0
        %v1853 = vadd.f32 0.0, %v1852
        %v1854 = vpop.f32.mrf.mxu0
        %v1855 = vadd.f32 0.0, %v1854
        %1856 = vmatprep.mubr.f32.mxu0 %v1629
        %1857 = vmatmul.mubr.f32.gmra.mxu0 %v1628
        %v1858 = vpop.f32.mrf.mxu0
        %v1859 = vadd.f32 0.0, %v1858
        %v1860 = vpop.f32.mrf.mxu0
        %v1861 = vadd.f32 0.0, %v1860
        %1862 = vmatprep.mubr.f32.mxu0 %v1631
        %1863 = vmatmul.mubr.f32.gmra.mxu0 %v1630
        %v1864 = vpop.f32.mrf.mxu0
        %v1865 = vadd.f32 0.0, %v1864
        %v1866 = vpop.f32.mrf.mxu0
        %v1867 = vadd.f32 0.0, %v1866
        %1868 = vmatprep.mubr.f32.mxu0 %v1641
        %1869 = vmatmul.mubr.f32.gmra.mxu0 %v1640
        %v1870 = vpop.f32.mrf.mxu0
        %v1871 = vadd.f32 0.0, %v1870
        %v1872 = vpop.f32.mrf.mxu0
        %v1873 = vadd.f32 0.0, %v1872
        %1874 = vmatprep.mubr.f32.mxu0 %v1643
        %1875 = vmatmul.mubr.f32.gmra.mxu0 %v1642
        %v1876 = vpop.f32.mrf.mxu0
        %v1877 = vadd.f32 0.0, %v1876
        %v1878 = vpop.f32.mrf.mxu0
        %v1879 = vadd.f32 0.0, %v1878
        %1880 = vmatprep.mubr.f32.mxu0 %v1645
        %1881 = vmatmul.mubr.f32.gmra.mxu0 %v1644
        %v1882 = vpop.f32.mrf.mxu0
        %v1883 = vadd.f32 0.0, %v1882
        %v1884 = vpop.f32.mrf.mxu0
        %v1885 = vadd.f32 0.0, %v1884
        %1886 = vmatprep.mubr.f32.mxu0 %v1647
        %1887 = vmatmul.mubr.f32.gmra.mxu0 %v1646
        %v1888 = vpop.f32.mrf.mxu0
        %v1889 = vadd.f32 0.0, %v1888
        %v1890 = vpop.f32.mrf.mxu0
        %v1891 = vadd.f32 0.0, %v1890
        %1892 = vmatprep.mubr.f32.mxu0 %v1657
        %1893 = vmatmul.mubr.f32.gmra.mxu0 %v1656
        %v1894 = vpop.f32.mrf.mxu0
        %v1895 = vadd.f32 0.0, %v1894
        %v1896 = vpop.f32.mrf.mxu0
        %v1897 = vadd.f32 0.0, %v1896
        %1898 = vmatprep.mubr.f32.mxu0 %v1659
        %1899 = vmatmul.mubr.f32.gmra.mxu0 %v1658
        %v1900 = vpop.f32.mrf.mxu0
        %v1901 = vadd.f32 0.0, %v1900
        %v1902 = vpop.f32.mrf.mxu0
        %v1903 = vadd.f32 0.0, %v1902
        %1904 = vmatprep.mubr.f32.mxu0 %v1661
        %1905 = vmatmul.mubr.f32.gmra.mxu0 %v1660
        %v1906 = vpop.f32.mrf.mxu0
        %v1907 = vadd.f32 0.0, %v1906
        %v1908 = vpop.f32.mrf.mxu0
        %v1909 = vadd.f32 0.0, %v1908
        %1910 = vmatprep.mubr.f32.mxu0 %v1663
        %1911 = vmatmul.mubr.f32.gmra.mxu0 %v1662
        %v1912 = vpop.f32.mrf.mxu0
        %v1913 = vadd.f32 0.0, %v1912
        %v1914 = vpop.f32.mrf.mxu0
        %v1915 = vadd.f32 0.0, %v1914
        %1916 = vdwg.mxu0
        %v1917 = vadd.f32 %v1685, %v1823
        %v1918 = vadd.f32 %v1689, %v1825
        %v1919 = vadd.f32 %v1685, %v1829
        %v1920 = vadd.f32 %v1689, %v1831
        %v1921 = vadd.f32 %v1685, %v1835
        %v1922 = vadd.f32 %v1689, %v1837
        %v1923 = vadd.f32 %v1685, %v1841
        %v1924 = vadd.f32 %v1689, %v1843
        %v1925 = vadd.f32 %v1685, %v1847
        %v1926 = vadd.f32 %v1689, %v1849
        %v1927 = vadd.f32 %v1685, %v1853
        %v1928 = vadd.f32 %v1689, %v1855
        %v1929 = vadd.f32 %v1685, %v1859
        %v1930 = vadd.f32 %v1689, %v1861
        %v1931 = vadd.f32 %v1685, %v1865
        %v1932 = vadd.f32 %v1689, %v1867
        %v1933 = vadd.f32 %v1685, %v1871
        %v1934 = vadd.f32 %v1689, %v1873
        %v1935 = vadd.f32 %v1685, %v1877
        %v1936 = vadd.f32 %v1689, %v1879
        %v1937 = vadd.f32 %v1685, %v1883
        %v1938 = vadd.f32 %v1689, %v1885
        %v1939 = vadd.f32 %v1685, %v1889
        %v1940 = vadd.f32 %v1689, %v1891
        %v1941 = vadd.f32 %v1685, %v1895
        %v1942 = vadd.f32 %v1689, %v1897
        %v1943 = vadd.f32 %v1685, %v1901
        %v1944 = vadd.f32 %v1689, %v1903
        %v1945 = vadd.f32 %v1685, %v1907
        %v1946 = vadd.f32 %v1689, %v1909
        %v1947 = vadd.f32 %v1685, %v1913
        %v1948 = vadd.f32 %v1689, %v1915
        %s1949 = scalar_lea.vmem %s3, 512
        %v1950 = vld [vmem:[%s1949] sm:$0xff]
        %v1951 = vld [vmem:[%s1949 + $0x8] sm:$0xff]
        %v1952 = vld [vmem:[%s1949 + $0x10] sm:$0xff]
        %v1953 = vld [vmem:[%s1949 + $0x18] sm:$0xff]
        %v1954 = vld [vmem:[%s1949 + $0x20] sm:$0xff]
        %v1955 = vld [vmem:[%s1949 + $0x28] sm:$0xff]
        %v1956 = vld [vmem:[%s1949 + $0x30] sm:$0xff]
        %v1957 = vld [vmem:[%s1949 + $0x38] sm:$0xff]
        %v1958 = vld [vmem:[%s1949 + $0x40] sm:$0xff]
        %v1959 = vld [vmem:[%s1949 + $0x48] sm:$0xff]
        %v1960 = vld [vmem:[%s1949 + $0x50] sm:$0xff]
        %v1961 = vld [vmem:[%s1949 + $0x58] sm:$0xff]
        %v1962 = vld [vmem:[%s1949 + $0x60] sm:$0xff]
        %v1963 = vld [vmem:[%s1949 + $0x68] sm:$0xff]
        %v1964 = vld [vmem:[%s1949 + $0x70] sm:$0xff]
        %v1965 = vld [vmem:[%s1949 + $0x78] sm:$0xff]
        %v1966 = vld [vmem:[%s1949 + $0x80] sm:$0xff]
        %v1967 = vld [vmem:[%s1949 + $0x88] sm:$0xff]
        %v1968 = vld [vmem:[%s1949 + $0x90] sm:$0xff]
        %v1969 = vld [vmem:[%s1949 + $0x98] sm:$0xff]
        %v1970 = vld [vmem:[%s1949 + $0xa0] sm:$0xff]
        %v1971 = vld [vmem:[%s1949 + $0xa8] sm:$0xff]
        %v1972 = vld [vmem:[%s1949 + $0xb0] sm:$0xff]
        %v1973 = vld [vmem:[%s1949 + $0xb8] sm:$0xff]
        %v1974 = vld [vmem:[%s1949 + $0xc0] sm:$0xff]
        %v1975 = vld [vmem:[%s1949 + $0xc8] sm:$0xff]
        %v1976 = vld [vmem:[%s1949 + $0xd0] sm:$0xff]
        %v1977 = vld [vmem:[%s1949 + $0xd8] sm:$0xff]
        %v1978 = vld [vmem:[%s1949 + $0xe0] sm:$0xff]
        %v1979 = vld [vmem:[%s1949 + $0xe8] sm:$0xff]
        %v1980 = vld [vmem:[%s1949 + $0xf0] sm:$0xff]
        %v1981 = vld [vmem:[%s1949 + $0xf8] sm:$0xff]
        %v1982 = vld [vmem:[%s1949 + $0x100] sm:$0xff]
        %v1983 = vld [vmem:[%s1949 + $0x108] sm:$0xff]
        %v1984 = vld [vmem:[%s1949 + $0x110] sm:$0xff]
        %v1985 = vld [vmem:[%s1949 + $0x118] sm:$0xff]
        %v1986 = vld [vmem:[%s1949 + $0x120] sm:$0xff]
        %v1987 = vld [vmem:[%s1949 + $0x128] sm:$0xff]
        %v1988 = vld [vmem:[%s1949 + $0x130] sm:$0xff]
        %v1989 = vld [vmem:[%s1949 + $0x138] sm:$0xff]
        %v1990 = vld [vmem:[%s1949 + $0x140] sm:$0xff]
        %v1991 = vld [vmem:[%s1949 + $0x148] sm:$0xff]
        %v1992 = vld [vmem:[%s1949 + $0x150] sm:$0xff]
        %v1993 = vld [vmem:[%s1949 + $0x158] sm:$0xff]
        %v1994 = vld [vmem:[%s1949 + $0x160] sm:$0xff]
        %v1995 = vld [vmem:[%s1949 + $0x168] sm:$0xff]
        %v1996 = vld [vmem:[%s1949 + $0x170] sm:$0xff]
        %v1997 = vld [vmem:[%s1949 + $0x178] sm:$0xff]
        %v1998 = vld [vmem:[%s1949 + $0x180] sm:$0xff]
        %v1999 = vld [vmem:[%s1949 + $0x188] sm:$0xff]
        %v2000 = vld [vmem:[%s1949 + $0x190] sm:$0xff]
        %v2001 = vld [vmem:[%s1949 + $0x198] sm:$0xff]
        %v2002 = vld [vmem:[%s1949 + $0x1a0] sm:$0xff]
        %v2003 = vld [vmem:[%s1949 + $0x1a8] sm:$0xff]
        %v2004 = vld [vmem:[%s1949 + $0x1b0] sm:$0xff]
        %v2005 = vld [vmem:[%s1949 + $0x1b8] sm:$0xff]
        %v2006 = vld [vmem:[%s1949 + $0x1c0] sm:$0xff]
        %v2007 = vld [vmem:[%s1949 + $0x1c8] sm:$0xff]
        %v2008 = vld [vmem:[%s1949 + $0x1d0] sm:$0xff]
        %v2009 = vld [vmem:[%s1949 + $0x1d8] sm:$0xff]
        %v2010 = vld [vmem:[%s1949 + $0x1e0] sm:$0xff]
        %v2011 = vld [vmem:[%s1949 + $0x1e8] sm:$0xff]
        %v2012 = vld [vmem:[%s1949 + $0x1f0] sm:$0xff]
        %v2013 = vld [vmem:[%s1949 + $0x1f8] sm:$0xff]
        %2014 = vmatprep.subr.mxu0 %v1981
        %2015 = vmatpush1.msra.mxu0 %v1980
        %2016 = vmatprep.subr.mxu0 %v1979
        %2017 = vmatpush1.msra.mxu0 %v1978
        %2018 = vmatprep.subr.mxu0 %v1977
        %2019 = vmatpush1.msra.mxu0 %v1976
        %2020 = vmatprep.subr.mxu0 %v1975
        %2021 = vmatpush1.msra.mxu0 %v1974
        %2022 = vmatprep.subr.mxu0 %v1973
        %2023 = vmatpush1.msra.mxu0 %v1972
        %2024 = vmatprep.subr.mxu0 %v1971
        %2025 = vmatpush1.msra.mxu0 %v1970
        %2026 = vmatprep.subr.mxu0 %v1969
        %2027 = vmatpush1.msra.mxu0 %v1968
        %2028 = vmatprep.subr.mxu0 %v1967
        %2029 = vmatpush1.msra.mxu0 %v1966
        %2030 = vmatprep.subr.mxu0 %v1965
        %2031 = vmatpush1.msra.mxu0 %v1964
        %2032 = vmatprep.subr.mxu0 %v1963
        %2033 = vmatpush1.msra.mxu0 %v1962
        %2034 = vmatprep.subr.mxu0 %v1961
        %2035 = vmatpush1.msra.mxu0 %v1960
        %2036 = vmatprep.subr.mxu0 %v1959
        %2037 = vmatpush1.msra.mxu0 %v1958
        %2038 = vmatprep.subr.mxu0 %v1957
        %2039 = vmatpush1.msra.mxu0 %v1956
        %2040 = vmatprep.subr.mxu0 %v1955
        %2041 = vmatpush1.msra.mxu0 %v1954
        %2042 = vmatprep.subr.mxu0 %v1953
        %2043 = vmatpush1.msra.mxu0 %v1952
        %2044 = vmatprep.subr.mxu0 %v1951
        %2045 = vmatpush1.msra.mxu0 %v1950
        %2046 = vmatprep.subr.mxu0 %v2013
        %2047 = vmatpush2.msra.mxu0 %v2012
        %2048 = vmatprep.subr.mxu0 %v2011
        %2049 = vmatpush2.msra.mxu0 %v2010
        %2050 = vmatprep.subr.mxu0 %v2009
        %2051 = vmatpush2.msra.mxu0 %v2008
        %2052 = vmatprep.subr.mxu0 %v2007
        %2053 = vmatpush2.msra.mxu0 %v2006
        %2054 = vmatprep.subr.mxu0 %v2005
        %2055 = vmatpush2.msra.mxu0 %v2004
        %2056 = vmatprep.subr.mxu0 %v2003
        %2057 = vmatpush2.msra.mxu0 %v2002
        %2058 = vmatprep.subr.mxu0 %v2001
        %2059 = vmatpush2.msra.mxu0 %v2000
        %2060 = vmatprep.subr.mxu0 %v1999
        %2061 = vmatpush2.msra.mxu0 %v1998
        %2062 = vmatprep.subr.mxu0 %v1997
        %2063 = vmatpush2.msra.mxu0 %v1996
        %2064 = vmatprep.subr.mxu0 %v1995
        %2065 = vmatpush2.msra.mxu0 %v1994
        %2066 = vmatprep.subr.mxu0 %v1993
        %2067 = vmatpush2.msra.mxu0 %v1992
        %2068 = vmatprep.subr.mxu0 %v1991
        %2069 = vmatpush2.msra.mxu0 %v1990
        %2070 = vmatprep.subr.mxu0 %v1989
        %2071 = vmatpush2.msra.mxu0 %v1988
        %2072 = vmatprep.subr.mxu0 %v1987
        %2073 = vmatpush2.msra.mxu0 %v1986
        %2074 = vmatprep.subr.mxu0 %v1985
        %2075 = vmatpush2.msra.mxu0 %v1984
        %2076 = vmatprep.subr.mxu0 %v1983
        %2077 = vmatpush2.msra.mxu0 %v1982
        %2078 = vmatprep.mubr.f32.mxu0 %v1617
        %2079 = vmatmul.mubr.f32.gmra.mxu0 %v1616
        %v2080 = vpop.f32.mrf.mxu0
        %v2081 = vadd.f32 0.0, %v2080
        %v2082 = vpop.f32.mrf.mxu0
        %v2083 = vadd.f32 0.0, %v2082
        %2084 = vmatprep.mubr.f32.mxu0 %v1619
        %2085 = vmatmul.mubr.f32.gmra.mxu0 %v1618
        %v2086 = vpop.f32.mrf.mxu0
        %v2087 = vadd.f32 0.0, %v2086
        %v2088 = vpop.f32.mrf.mxu0
        %v2089 = vadd.f32 0.0, %v2088
        %2090 = vmatprep.mubr.f32.mxu0 %v1621
        %2091 = vmatmul.mubr.f32.gmra.mxu0 %v1620
        %v2092 = vpop.f32.mrf.mxu0
        %v2093 = vadd.f32 0.0, %v2092
        %v2094 = vpop.f32.mrf.mxu0
        %v2095 = vadd.f32 0.0, %v2094
        %2096 = vmatprep.mubr.f32.mxu0 %v1623
        %2097 = vmatmul.mubr.f32.gmra.mxu0 %v1622
        %v2098 = vpop.f32.mrf.mxu0
        %v2099 = vadd.f32 0.0, %v2098
        %v2100 = vpop.f32.mrf.mxu0
        %v2101 = vadd.f32 0.0, %v2100
        %2102 = vmatprep.mubr.f32.mxu0 %v1633
        %2103 = vmatmul.mubr.f32.gmra.mxu0 %v1632
        %v2104 = vpop.f32.mrf.mxu0
        %v2105 = vadd.f32 0.0, %v2104
        %v2106 = vpop.f32.mrf.mxu0
        %v2107 = vadd.f32 0.0, %v2106
        %2108 = vmatprep.mubr.f32.mxu0 %v1635
        %2109 = vmatmul.mubr.f32.gmra.mxu0 %v1634
        %v2110 = vpop.f32.mrf.mxu0
        %v2111 = vadd.f32 0.0, %v2110
        %v2112 = vpop.f32.mrf.mxu0
        %v2113 = vadd.f32 0.0, %v2112
        %2114 = vmatprep.mubr.f32.mxu0 %v1637
        %2115 = vmatmul.mubr.f32.gmra.mxu0 %v1636
        %v2116 = vpop.f32.mrf.mxu0
        %v2117 = vadd.f32 0.0, %v2116
        %v2118 = vpop.f32.mrf.mxu0
        %v2119 = vadd.f32 0.0, %v2118
        %2120 = vmatprep.mubr.f32.mxu0 %v1639
        %2121 = vmatmul.mubr.f32.gmra.mxu0 %v1638
        %v2122 = vpop.f32.mrf.mxu0
        %v2123 = vadd.f32 0.0, %v2122
        %v2124 = vpop.f32.mrf.mxu0
        %v2125 = vadd.f32 0.0, %v2124
        %2126 = vmatprep.mubr.f32.mxu0 %v1649
        %2127 = vmatmul.mubr.f32.gmra.mxu0 %v1648
        %v2128 = vpop.f32.mrf.mxu0
        %v2129 = vadd.f32 0.0, %v2128
        %v2130 = vpop.f32.mrf.mxu0
        %v2131 = vadd.f32 0.0, %v2130
        %2132 = vmatprep.mubr.f32.mxu0 %v1651
        %2133 = vmatmul.mubr.f32.gmra.mxu0 %v1650
        %v2134 = vpop.f32.mrf.mxu0
        %v2135 = vadd.f32 0.0, %v2134
        %v2136 = vpop.f32.mrf.mxu0
        %v2137 = vadd.f32 0.0, %v2136
        %2138 = vmatprep.mubr.f32.mxu0 %v1653
        %2139 = vmatmul.mubr.f32.gmra.mxu0 %v1652
        %v2140 = vpop.f32.mrf.mxu0
        %v2141 = vadd.f32 0.0, %v2140
        %v2142 = vpop.f32.mrf.mxu0
        %v2143 = vadd.f32 0.0, %v2142
        %2144 = vmatprep.mubr.f32.mxu0 %v1655
        %2145 = vmatmul.mubr.f32.gmra.mxu0 %v1654
        %v2146 = vpop.f32.mrf.mxu0
        %v2147 = vadd.f32 0.0, %v2146
        %v2148 = vpop.f32.mrf.mxu0
        %v2149 = vadd.f32 0.0, %v2148
        %2150 = vmatprep.mubr.f32.mxu0 %v1665
        %2151 = vmatmul.mubr.f32.gmra.mxu0 %v1664
        %v2152 = vpop.f32.mrf.mxu0
        %v2153 = vadd.f32 0.0, %v2152
        %v2154 = vpop.f32.mrf.mxu0
        %v2155 = vadd.f32 0.0, %v2154
        %2156 = vmatprep.mubr.f32.mxu0 %v1667
        %2157 = vmatmul.mubr.f32.gmra.mxu0 %v1666
        %v2158 = vpop.f32.mrf.mxu0
        %v2159 = vadd.f32 0.0, %v2158
        %v2160 = vpop.f32.mrf.mxu0
        %v2161 = vadd.f32 0.0, %v2160
        %2162 = vmatprep.mubr.f32.mxu0 %v1669
        %2163 = vmatmul.mubr.f32.gmra.mxu0 %v1668
        %v2164 = vpop.f32.mrf.mxu0
        %v2165 = vadd.f32 0.0, %v2164
        %v2166 = vpop.f32.mrf.mxu0
        %v2167 = vadd.f32 0.0, %v2166
        %2168 = vmatprep.mubr.f32.mxu0 %v1671
        %2169 = vmatmul.mubr.f32.gmra.mxu0 %v1670
        %v2170 = vpop.f32.mrf.mxu0
        %v2171 = vadd.f32 0.0, %v2170
        %v2172 = vpop.f32.mrf.mxu0
        %v2173 = vadd.f32 0.0, %v2172
        %2174 = vdwg.mxu0
        %v2175 = vadd.f32 %v1917, %v2081
        %v2176 = vadd.f32 %v1918, %v2083
        %v2177 = vadd.f32 %v1919, %v2087
        %v2178 = vadd.f32 %v1920, %v2089
        %v2179 = vadd.f32 %v1921, %v2093
        %v2180 = vadd.f32 %v1922, %v2095
        %v2181 = vadd.f32 %v1923, %v2099
        %v2182 = vadd.f32 %v1924, %v2101
        %v2183 = vadd.f32 %v1925, %v2105
        %v2184 = vadd.f32 %v1926, %v2107
        %v2185 = vadd.f32 %v1927, %v2111
        %v2186 = vadd.f32 %v1928, %v2113
        %v2187 = vadd.f32 %v1929, %v2117
        %v2188 = vadd.f32 %v1930, %v2119
        %v2189 = vadd.f32 %v1931, %v2123
        %v2190 = vadd.f32 %v1932, %v2125
        %v2191 = vadd.f32 %v1933, %v2129
        %v2192 = vadd.f32 %v1934, %v2131
        %v2193 = vadd.f32 %v1935, %v2135
        %v2194 = vadd.f32 %v1936, %v2137
        %v2195 = vadd.f32 %v1937, %v2141
        %v2196 = vadd.f32 %v1938, %v2143
        %v2197 = vadd.f32 %v1939, %v2147
        %v2198 = vadd.f32 %v1940, %v2149
        %v2199 = vadd.f32 %v1941, %v2153
        %v2200 = vadd.f32 %v1942, %v2155
        %v2201 = vadd.f32 %v1943, %v2159
        %v2202 = vadd.f32 %v1944, %v2161
        %v2203 = vadd.f32 %v1945, %v2165
        %v2204 = vadd.f32 %v1946, %v2167
        %v2205 = vadd.f32 %v1947, %v2171
        %v2206 = vadd.f32 %v1948, %v2173
        %s2207 = scalar_lea.vmem %s3, 1024
        %v2208 = vld [vmem:[%s2207] sm:$0xff]
        %v2209 = vld [vmem:[%s2207 + $0x8] sm:$0xff]
        %v2210 = vld [vmem:[%s2207 + $0x10] sm:$0xff]
        %v2211 = vld [vmem:[%s2207 + $0x18] sm:$0xff]
        %v2212 = vld [vmem:[%s2207 + $0x20] sm:$0xff]
        %v2213 = vld [vmem:[%s2207 + $0x28] sm:$0xff]
        %v2214 = vld [vmem:[%s2207 + $0x30] sm:$0xff]
        %v2215 = vld [vmem:[%s2207 + $0x38] sm:$0xff]
        %v2216 = vld [vmem:[%s2207 + $0x40] sm:$0xff]
        %v2217 = vld [vmem:[%s2207 + $0x48] sm:$0xff]
        %v2218 = vld [vmem:[%s2207 + $0x50] sm:$0xff]
        %v2219 = vld [vmem:[%s2207 + $0x58] sm:$0xff]
        %v2220 = vld [vmem:[%s2207 + $0x60] sm:$0xff]
        %v2221 = vld [vmem:[%s2207 + $0x68] sm:$0xff]
        %v2222 = vld [vmem:[%s2207 + $0x70] sm:$0xff]
        %v2223 = vld [vmem:[%s2207 + $0x78] sm:$0xff]
        %v2224 = vld [vmem:[%s2207 + $0x80] sm:$0xff]
        %v2225 = vld [vmem:[%s2207 + $0x88] sm:$0xff]
        %v2226 = vld [vmem:[%s2207 + $0x90] sm:$0xff]
        %v2227 = vld [vmem:[%s2207 + $0x98] sm:$0xff]
        %v2228 = vld [vmem:[%s2207 + $0xa0] sm:$0xff]
        %v2229 = vld [vmem:[%s2207 + $0xa8] sm:$0xff]
        %v2230 = vld [vmem:[%s2207 + $0xb0] sm:$0xff]
        %v2231 = vld [vmem:[%s2207 + $0xb8] sm:$0xff]
        %v2232 = vld [vmem:[%s2207 + $0xc0] sm:$0xff]
        %v2233 = vld [vmem:[%s2207 + $0xc8] sm:$0xff]
        %v2234 = vld [vmem:[%s2207 + $0xd0] sm:$0xff]
        %v2235 = vld [vmem:[%s2207 + $0xd8] sm:$0xff]
        %v2236 = vld [vmem:[%s2207 + $0xe0] sm:$0xff]
        %v2237 = vld [vmem:[%s2207 + $0xe8] sm:$0xff]
        %v2238 = vld [vmem:[%s2207 + $0xf0] sm:$0xff]
        %v2239 = vld [vmem:[%s2207 + $0xf8] sm:$0xff]
        %v2240 = vld [vmem:[%s2207 + $0x100] sm:$0xff]
        %v2241 = vld [vmem:[%s2207 + $0x108] sm:$0xff]
        %v2242 = vld [vmem:[%s2207 + $0x110] sm:$0xff]
        %v2243 = vld [vmem:[%s2207 + $0x118] sm:$0xff]
        %v2244 = vld [vmem:[%s2207 + $0x120] sm:$0xff]
        %v2245 = vld [vmem:[%s2207 + $0x128] sm:$0xff]
        %v2246 = vld [vmem:[%s2207 + $0x130] sm:$0xff]
        %v2247 = vld [vmem:[%s2207 + $0x138] sm:$0xff]
        %v2248 = vld [vmem:[%s2207 + $0x140] sm:$0xff]
        %v2249 = vld [vmem:[%s2207 + $0x148] sm:$0xff]
        %v2250 = vld [vmem:[%s2207 + $0x150] sm:$0xff]
        %v2251 = vld [vmem:[%s2207 + $0x158] sm:$0xff]
        %v2252 = vld [vmem:[%s2207 + $0x160] sm:$0xff]
        %v2253 = vld [vmem:[%s2207 + $0x168] sm:$0xff]
        %v2254 = vld [vmem:[%s2207 + $0x170] sm:$0xff]
        %v2255 = vld [vmem:[%s2207 + $0x178] sm:$0xff]
        %v2256 = vld [vmem:[%s2207 + $0x180] sm:$0xff]
        %v2257 = vld [vmem:[%s2207 + $0x188] sm:$0xff]
        %v2258 = vld [vmem:[%s2207 + $0x190] sm:$0xff]
        %v2259 = vld [vmem:[%s2207 + $0x198] sm:$0xff]
        %v2260 = vld [vmem:[%s2207 + $0x1a0] sm:$0xff]
        %v2261 = vld [vmem:[%s2207 + $0x1a8] sm:$0xff]
        %v2262 = vld [vmem:[%s2207 + $0x1b0] sm:$0xff]
        %v2263 = vld [vmem:[%s2207 + $0x1b8] sm:$0xff]
        %v2264 = vld [vmem:[%s2207 + $0x1c0] sm:$0xff]
        %v2265 = vld [vmem:[%s2207 + $0x1c8] sm:$0xff]
        %v2266 = vld [vmem:[%s2207 + $0x1d0] sm:$0xff]
        %v2267 = vld [vmem:[%s2207 + $0x1d8] sm:$0xff]
        %v2268 = vld [vmem:[%s2207 + $0x1e0] sm:$0xff]
        %v2269 = vld [vmem:[%s2207 + $0x1e8] sm:$0xff]
        %v2270 = vld [vmem:[%s2207 + $0x1f0] sm:$0xff]
        %v2271 = vld [vmem:[%s2207 + $0x1f8] sm:$0xff]
        %2272 = vmatprep.subr.mxu0 %v2239
        %2273 = vmatpush1.msra.mxu0 %v2238
        %2274 = vmatprep.subr.mxu0 %v2237
        %2275 = vmatpush1.msra.mxu0 %v2236
        %2276 = vmatprep.subr.mxu0 %v2235
        %2277 = vmatpush1.msra.mxu0 %v2234
        %2278 = vmatprep.subr.mxu0 %v2233
        %2279 = vmatpush1.msra.mxu0 %v2232
        %2280 = vmatprep.subr.mxu0 %v2231
        %2281 = vmatpush1.msra.mxu0 %v2230
        %2282 = vmatprep.subr.mxu0 %v2229
        %2283 = vmatpush1.msra.mxu0 %v2228
        %2284 = vmatprep.subr.mxu0 %v2227
        %2285 = vmatpush1.msra.mxu0 %v2226
        %2286 = vmatprep.subr.mxu0 %v2225
        %2287 = vmatpush1.msra.mxu0 %v2224
        %2288 = vmatprep.subr.mxu0 %v2223
        %2289 = vmatpush1.msra.mxu0 %v2222
        %2290 = vmatprep.subr.mxu0 %v2221
        %2291 = vmatpush1.msra.mxu0 %v2220
        %2292 = vmatprep.subr.mxu0 %v2219
        %2293 = vmatpush1.msra.mxu0 %v2218
        %2294 = vmatprep.subr.mxu0 %v2217
        %2295 = vmatpush1.msra.mxu0 %v2216
        %2296 = vmatprep.subr.mxu0 %v2215
        %2297 = vmatpush1.msra.mxu0 %v2214
        %2298 = vmatprep.subr.mxu0 %v2213
        %2299 = vmatpush1.msra.mxu0 %v2212
        %2300 = vmatprep.subr.mxu0 %v2211
        %2301 = vmatpush1.msra.mxu0 %v2210
        %2302 = vmatprep.subr.mxu0 %v2209
        %2303 = vmatpush1.msra.mxu0 %v2208
        %2304 = vmatprep.subr.mxu0 %v2271
        %2305 = vmatpush2.msra.mxu0 %v2270
        %2306 = vmatprep.subr.mxu0 %v2269
        %2307 = vmatpush2.msra.mxu0 %v2268
        %2308 = vmatprep.subr.mxu0 %v2267
        %2309 = vmatpush2.msra.mxu0 %v2266
        %2310 = vmatprep.subr.mxu0 %v2265
        %2311 = vmatpush2.msra.mxu0 %v2264
        %2312 = vmatprep.subr.mxu0 %v2263
        %2313 = vmatpush2.msra.mxu0 %v2262
        %2314 = vmatprep.subr.mxu0 %v2261
        %2315 = vmatpush2.msra.mxu0 %v2260
        %2316 = vmatprep.subr.mxu0 %v2259
        %2317 = vmatpush2.msra.mxu0 %v2258
        %2318 = vmatprep.subr.mxu0 %v2257
        %2319 = vmatpush2.msra.mxu0 %v2256
        %2320 = vmatprep.subr.mxu0 %v2255
        %2321 = vmatpush2.msra.mxu0 %v2254
        %2322 = vmatprep.subr.mxu0 %v2253
        %2323 = vmatpush2.msra.mxu0 %v2252
        %2324 = vmatprep.subr.mxu0 %v2251
        %2325 = vmatpush2.msra.mxu0 %v2250
        %2326 = vmatprep.subr.mxu0 %v2249
        %2327 = vmatpush2.msra.mxu0 %v2248
        %2328 = vmatprep.subr.mxu0 %v2247
        %2329 = vmatpush2.msra.mxu0 %v2246
        %2330 = vmatprep.subr.mxu0 %v2245
        %2331 = vmatpush2.msra.mxu0 %v2244
        %2332 = vmatprep.subr.mxu0 %v2243
        %2333 = vmatpush2.msra.mxu0 %v2242
        %2334 = vmatprep.subr.mxu0 %v2241
        %2335 = vmatpush2.msra.mxu0 %v2240
        %2336 = vmatprep.mubr.f32.mxu0 %v1625
        %2337 = vmatmul.mubr.f32.gmra.mxu0 %v1624
        %v2338 = vpop.f32.mrf.mxu0
        %v2339 = vadd.f32 0.0, %v2338
        %v2340 = vpop.f32.mrf.mxu0
        %v2341 = vadd.f32 0.0, %v2340
        %2342 = vmatprep.mubr.f32.mxu0 %v1627
        %2343 = vmatmul.mubr.f32.gmra.mxu0 %v1626
        %v2344 = vpop.f32.mrf.mxu0
        %v2345 = vadd.f32 0.0, %v2344
        %v2346 = vpop.f32.mrf.mxu0
        %v2347 = vadd.f32 0.0, %v2346
        %2348 = vmatprep.mubr.f32.mxu0 %v1629
        %2349 = vmatmul.mubr.f32.gmra.mxu0 %v1628
        %v2350 = vpop.f32.mrf.mxu0
        %v2351 = vadd.f32 0.0, %v2350
        %v2352 = vpop.f32.mrf.mxu0
        %v2353 = vadd.f32 0.0, %v2352
        %2354 = vmatprep.mubr.f32.mxu0 %v1631
        %2355 = vmatmul.mubr.f32.gmra.mxu0 %v1630
        %v2356 = vpop.f32.mrf.mxu0
        %v2357 = vadd.f32 0.0, %v2356
        %v2358 = vpop.f32.mrf.mxu0
        %v2359 = vadd.f32 0.0, %v2358
        %2360 = vmatprep.mubr.f32.mxu0 %v1641
        %2361 = vmatmul.mubr.f32.gmra.mxu0 %v1640
        %v2362 = vpop.f32.mrf.mxu0
        %v2363 = vadd.f32 0.0, %v2362
        %v2364 = vpop.f32.mrf.mxu0
        %v2365 = vadd.f32 0.0, %v2364
        %2366 = vmatprep.mubr.f32.mxu0 %v1643
        %2367 = vmatmul.mubr.f32.gmra.mxu0 %v1642
        %v2368 = vpop.f32.mrf.mxu0
        %v2369 = vadd.f32 0.0, %v2368
        %v2370 = vpop.f32.mrf.mxu0
        %v2371 = vadd.f32 0.0, %v2370
        %2372 = vmatprep.mubr.f32.mxu0 %v1645
        %2373 = vmatmul.mubr.f32.gmra.mxu0 %v1644
        %v2374 = vpop.f32.mrf.mxu0
        %v2375 = vadd.f32 0.0, %v2374
        %v2376 = vpop.f32.mrf.mxu0
        %v2377 = vadd.f32 0.0, %v2376
        %2378 = vmatprep.mubr.f32.mxu0 %v1647
        %2379 = vmatmul.mubr.f32.gmra.mxu0 %v1646
        %v2380 = vpop.f32.mrf.mxu0
        %v2381 = vadd.f32 0.0, %v2380
        %v2382 = vpop.f32.mrf.mxu0
        %v2383 = vadd.f32 0.0, %v2382
        %2384 = vmatprep.mubr.f32.mxu0 %v1657
        %2385 = vmatmul.mubr.f32.gmra.mxu0 %v1656
        %v2386 = vpop.f32.mrf.mxu0
        %v2387 = vadd.f32 0.0, %v2386
        %v2388 = vpop.f32.mrf.mxu0
        %v2389 = vadd.f32 0.0, %v2388
        %2390 = vmatprep.mubr.f32.mxu0 %v1659
        %2391 = vmatmul.mubr.f32.gmra.mxu0 %v1658
        %v2392 = vpop.f32.mrf.mxu0
        %v2393 = vadd.f32 0.0, %v2392
        %v2394 = vpop.f32.mrf.mxu0
        %v2395 = vadd.f32 0.0, %v2394
        %2396 = vmatprep.mubr.f32.mxu0 %v1661
        %2397 = vmatmul.mubr.f32.gmra.mxu0 %v1660
        %v2398 = vpop.f32.mrf.mxu0
        %v2399 = vadd.f32 0.0, %v2398
        %v2400 = vpop.f32.mrf.mxu0
        %v2401 = vadd.f32 0.0, %v2400
        %2402 = vmatprep.mubr.f32.mxu0 %v1663
        %2403 = vmatmul.mubr.f32.gmra.mxu0 %v1662
        %v2404 = vpop.f32.mrf.mxu0
        %v2405 = vadd.f32 0.0, %v2404
        %v2406 = vpop.f32.mrf.mxu0
        %v2407 = vadd.f32 0.0, %v2406
        %2408 = vmatprep.mubr.f32.mxu0 %v1673
        %2409 = vmatmul.mubr.f32.gmra.mxu0 %v1672
        %v2410 = vpop.f32.mrf.mxu0
        %v2411 = vadd.f32 0.0, %v2410
        %v2412 = vpop.f32.mrf.mxu0
        %v2413 = vadd.f32 0.0, %v2412
        %2414 = vmatprep.mubr.f32.mxu0 %v1675
        %2415 = vmatmul.mubr.f32.gmra.mxu0 %v1674
        %v2416 = vpop.f32.mrf.mxu0
        %v2417 = vadd.f32 0.0, %v2416
        %v2418 = vpop.f32.mrf.mxu0
        %v2419 = vadd.f32 0.0, %v2418
        %2420 = vmatprep.mubr.f32.mxu0 %v1677
        %2421 = vmatmul.mubr.f32.gmra.mxu0 %v1676
        %v2422 = vpop.f32.mrf.mxu0
        %v2423 = vadd.f32 0.0, %v2422
        %v2424 = vpop.f32.mrf.mxu0
        %v2425 = vadd.f32 0.0, %v2424
        %2426 = vmatprep.mubr.f32.mxu0 %v1679
        %2427 = vmatmul.mubr.f32.gmra.mxu0 %v1678
        %v2428 = vpop.f32.mrf.mxu0
        %v2429 = vadd.f32 0.0, %v2428
        %v2430 = vpop.f32.mrf.mxu0
        %v2431 = vadd.f32 0.0, %v2430
        %2432 = vdwg.mxu0
        %v2433 = vadd.f32 %v2175, %v2339
        %v2434 = vadd.f32 %v2176, %v2341
        %v2435 = vadd.f32 %v2177, %v2345
        %v2436 = vadd.f32 %v2178, %v2347
        %v2437 = vadd.f32 %v2179, %v2351
        %v2438 = vadd.f32 %v2180, %v2353
        %v2439 = vadd.f32 %v2181, %v2357
        %v2440 = vadd.f32 %v2182, %v2359
        %v2441 = vadd.f32 %v2183, %v2363
        %v2442 = vadd.f32 %v2184, %v2365
        %v2443 = vadd.f32 %v2185, %v2369
        %v2444 = vadd.f32 %v2186, %v2371
        %v2445 = vadd.f32 %v2187, %v2375
        %v2446 = vadd.f32 %v2188, %v2377
        %v2447 = vadd.f32 %v2189, %v2381
        %v2448 = vadd.f32 %v2190, %v2383
        %v2449 = vadd.f32 %v2191, %v2387
        %v2450 = vadd.f32 %v2192, %v2389
        %v2451 = vadd.f32 %v2193, %v2393
        %v2452 = vadd.f32 %v2194, %v2395
        %v2453 = vadd.f32 %v2195, %v2399
        %v2454 = vadd.f32 %v2196, %v2401
        %v2455 = vadd.f32 %v2197, %v2405
        %v2456 = vadd.f32 %v2198, %v2407
        %v2457 = vadd.f32 %v2199, %v2411
        %v2458 = vadd.f32 %v2200, %v2413
        %v2459 = vadd.f32 %v2201, %v2417
        %v2460 = vadd.f32 %v2202, %v2419
        %v2461 = vadd.f32 %v2203, %v2423
        %v2462 = vadd.f32 %v2204, %v2425
        %v2463 = vadd.f32 %v2205, %v2429
        %v2464 = vadd.f32 %v2206, %v2431
        %v2465 = vmax.f32 %v2433, 0.0
        %v2466 = vmax.f32 %v2434, 0.0
        %v2467 = vmax.f32 %v2435, 0.0
        %v2468 = vmax.f32 %v2436, 0.0
        %v2469 = vmax.f32 %v2437, 0.0
        %v2470 = vmax.f32 %v2438, 0.0
        %v2471 = vmax.f32 %v2439, 0.0
        %v2472 = vmax.f32 %v2440, 0.0
        %v2473 = vmax.f32 %v2441, 0.0
        %v2474 = vmax.f32 %v2442, 0.0
        %v2475 = vmax.f32 %v2443, 0.0
        %v2476 = vmax.f32 %v2444, 0.0
        %v2477 = vmax.f32 %v2445, 0.0
        %v2478 = vmax.f32 %v2446, 0.0
        %v2479 = vmax.f32 %v2447, 0.0
        %v2480 = vmax.f32 %v2448, 0.0
        %v2481 = vmax.f32 %v2449, 0.0
        %v2482 = vmax.f32 %v2450, 0.0
        %v2483 = vmax.f32 %v2451, 0.0
        %v2484 = vmax.f32 %v2452, 0.0
        %v2485 = vmax.f32 %v2453, 0.0
        %v2486 = vmax.f32 %v2454, 0.0
        %v2487 = vmax.f32 %v2455, 0.0
        %v2488 = vmax.f32 %v2456, 0.0
        %v2489 = vmax.f32 %v2457, 0.0
        %v2490 = vmax.f32 %v2458, 0.0
        %v2491 = vmax.f32 %v2459, 0.0
        %v2492 = vmax.f32 %v2460, 0.0
        %v2493 = vmax.f32 %v2461, 0.0
        %v2494 = vmax.f32 %v2462, 0.0
        %v2495 = vmax.f32 %v2463, 0.0
        %v2496 = vmax.f32 %v2464, 0.0
        %v2497 = vld [vmem:[%s6] sm:$0x1]
        %v2499 = vlaneseq
        %v2500 = vshrl.u32 %v2499, 7
        %v2501 = vsub.s32 0, %v2500
        %v2502 = vrot.slane %v2497, %v2501
        %v2504 = vld [vmem:[%s5] sm:$0xff]
        %v2505 = vld [vmem:[%s5 + $0x8] sm:$0xff]
        %v2506 = vld [vmem:[%s5 + $0x10] sm:$0xff]
        %v2507 = vld [vmem:[%s5 + $0x18] sm:$0xff]
        %v2508 = vld [vmem:[%s5 + $0x20] sm:$0xff]
        %v2509 = vld [vmem:[%s5 + $0x28] sm:$0xff]
        %v2510 = vld [vmem:[%s5 + $0x30] sm:$0xff]
        %v2511 = vld [vmem:[%s5 + $0x38] sm:$0xff]
        %v2512 = vld [vmem:[%s5 + $0x40] sm:$0xff]
        %v2513 = vld [vmem:[%s5 + $0x48] sm:$0xff]
        %v2514 = vld [vmem:[%s5 + $0x50] sm:$0xff]
        %v2515 = vld [vmem:[%s5 + $0x58] sm:$0xff]
        %v2516 = vld [vmem:[%s5 + $0x60] sm:$0xff]
        %v2517 = vld [vmem:[%s5 + $0x68] sm:$0xff]
        %v2518 = vld [vmem:[%s5 + $0x70] sm:$0xff]
        %v2519 = vld [vmem:[%s5 + $0x78] sm:$0xff]
        %v2520 = vld [vmem:[%s5 + $0x80] sm:$0xff]
        %v2521 = vld [vmem:[%s5 + $0x88] sm:$0xff]
        %v2522 = vld [vmem:[%s5 + $0x90] sm:$0xff]
        %v2523 = vld [vmem:[%s5 + $0x98] sm:$0xff]
        %v2524 = vld [vmem:[%s5 + $0xa0] sm:$0xff]
        %v2525 = vld [vmem:[%s5 + $0xa8] sm:$0xff]
        %v2526 = vld [vmem:[%s5 + $0xb0] sm:$0xff]
        %v2527 = vld [vmem:[%s5 + $0xb8] sm:$0xff]
        %v2528 = vld [vmem:[%s5 + $0xc0] sm:$0xff]
        %v2529 = vld [vmem:[%s5 + $0xc8] sm:$0xff]
        %v2530 = vld [vmem:[%s5 + $0xd0] sm:$0xff]
        %v2531 = vld [vmem:[%s5 + $0xd8] sm:$0xff]
        %v2532 = vld [vmem:[%s5 + $0xe0] sm:$0xff]
        %v2533 = vld [vmem:[%s5 + $0xe8] sm:$0xff]
        %v2534 = vld [vmem:[%s5 + $0xf0] sm:$0xff]
        %v2535 = vld [vmem:[%s5 + $0xf8] sm:$0xff]
        %2536 = vmatprep.subr.mxu0 0.0
        %2537 = vmatpush1.msra.mxu0 %v2519
        %2538 = vmatprep.subr.mxu0 0.0
        %2539 = vmatpush1.msra.mxu0 %v2518
        %2540 = vmatprep.subr.mxu0 0.0
        %2541 = vmatpush1.msra.mxu0 %v2517
        %2542 = vmatprep.subr.mxu0 0.0
        %2543 = vmatpush1.msra.mxu0 %v2516
        %2544 = vmatprep.subr.mxu0 0.0
        %2545 = vmatpush1.msra.mxu0 %v2515
        %2546 = vmatprep.subr.mxu0 0.0
        %2547 = vmatpush1.msra.mxu0 %v2514
        %2548 = vmatprep.subr.mxu0 0.0
        %2549 = vmatpush1.msra.mxu0 %v2513
        %2550 = vmatprep.subr.mxu0 0.0
        %2551 = vmatpush1.msra.mxu0 %v2512
        %2552 = vmatprep.subr.mxu0 0.0
        %2553 = vmatpush1.msra.mxu0 %v2511
        %2554 = vmatprep.subr.mxu0 0.0
        %2555 = vmatpush1.msra.mxu0 %v2510
        %2556 = vmatprep.subr.mxu0 0.0
        %2557 = vmatpush1.msra.mxu0 %v2509
        %2558 = vmatprep.subr.mxu0 0.0
        %2559 = vmatpush1.msra.mxu0 %v2508
        %2560 = vmatprep.subr.mxu0 0.0
        %2561 = vmatpush1.msra.mxu0 %v2507
        %2562 = vmatprep.subr.mxu0 0.0
        %2563 = vmatpush1.msra.mxu0 %v2506
        %2564 = vmatprep.subr.mxu0 0.0
        %2565 = vmatpush1.msra.mxu0 %v2505
        %2566 = vmatprep.subr.mxu0 0.0
        %2567 = vmatpush1.msra.mxu0 %v2504
        %2568 = vmatprep.subr.mxu0 0.0
        %2569 = vmatpush2.msra.mxu0 %v2535
        %2570 = vmatprep.subr.mxu0 0.0
        %2571 = vmatpush2.msra.mxu0 %v2534
        %2572 = vmatprep.subr.mxu0 0.0
        %2573 = vmatpush2.msra.mxu0 %v2533
        %2574 = vmatprep.subr.mxu0 0.0
        %2575 = vmatpush2.msra.mxu0 %v2532
        %2576 = vmatprep.subr.mxu0 0.0
        %2577 = vmatpush2.msra.mxu0 %v2531
        %2578 = vmatprep.subr.mxu0 0.0
        %2579 = vmatpush2.msra.mxu0 %v2530
        %2580 = vmatprep.subr.mxu0 0.0
        %2581 = vmatpush2.msra.mxu0 %v2529
        %2582 = vmatprep.subr.mxu0 0.0
        %2583 = vmatpush2.msra.mxu0 %v2528
        %2584 = vmatprep.subr.mxu0 0.0
        %2585 = vmatpush2.msra.mxu0 %v2527
        %2586 = vmatprep.subr.mxu0 0.0
        %2587 = vmatpush2.msra.mxu0 %v2526
        %2588 = vmatprep.subr.mxu0 0.0
        %2589 = vmatpush2.msra.mxu0 %v2525
        %2590 = vmatprep.subr.mxu0 0.0
        %2591 = vmatpush2.msra.mxu0 %v2524
        %2592 = vmatprep.subr.mxu0 0.0
        %2593 = vmatpush2.msra.mxu0 %v2523
        %2594 = vmatprep.subr.mxu0 0.0
        %2595 = vmatpush2.msra.mxu0 %v2522
        %2596 = vmatprep.subr.mxu0 0.0
        %2597 = vmatpush2.msra.mxu0 %v2521
        %2598 = vmatprep.subr.mxu0 0.0
        %2599 = vmatpush2.msra.mxu0 %v2520
        %2600 = vmatprep.mubr.f32.mxu0 0.0
        %2601 = vmatmul.mubr.f32.gmra.mxu0 0.0
        %v2602 = vpop.f32.mrf.mxu0
        %v2603 = vadd.f32 0.0, %v2602
        %v2604 = vpop.f32.mrf.mxu0
        %2605 = vmatprep.mubr.f32.mxu0 0.0
        %2606 = vmatmul.mubr.f32.gmra.mxu0 0.0
        %v2607 = vpop.f32.mrf.mxu0
        %v2608 = vadd.f32 0.0, %v2607
        %v2609 = vpop.f32.mrf.mxu0
        %2610 = vmatprep.mubr.f32.mxu0 0.0
        %2611 = vmatmul.mubr.f32.gmra.mxu0 0.0
        %v2612 = vpop.f32.mrf.mxu0
        %v2613 = vadd.f32 0.0, %v2612
        %v2614 = vpop.f32.mrf.mxu0
        %2615 = vmatprep.mubr.f32.mxu0 0.0
        %2616 = vmatmul.mubr.f32.gmra.mxu0 0.0
        %v2617 = vpop.f32.mrf.mxu0
        %v2618 = vadd.f32 0.0, %v2617
        %v2619 = vpop.f32.mrf.mxu0
        %2620 = vmatprep.mubr.f32.mxu0 %v2474
        %2621 = vmatmul.mubr.f32.gmra.mxu0 %v2473
        %v2622 = vpop.f32.mrf.mxu0
        %v2623 = vadd.f32 0.0, %v2622
        %v2624 = vpop.f32.mrf.mxu0
        %2625 = vmatprep.mubr.f32.mxu0 %v2476
        %2626 = vmatmul.mubr.f32.gmra.mxu0 %v2475
        %v2627 = vpop.f32.mrf.mxu0
        %v2628 = vadd.f32 0.0, %v2627
        %v2629 = vpop.f32.mrf.mxu0
        %2630 = vmatprep.mubr.f32.mxu0 %v2478
        %2631 = vmatmul.mubr.f32.gmra.mxu0 %v2477
        %v2632 = vpop.f32.mrf.mxu0
        %v2633 = vadd.f32 0.0, %v2632
        %v2634 = vpop.f32.mrf.mxu0
        %2635 = vmatprep.mubr.f32.mxu0 %v2480
        %2636 = vmatmul.mubr.f32.gmra.mxu0 %v2479
        %v2637 = vpop.f32.mrf.mxu0
        %v2638 = vadd.f32 0.0, %v2637
        %v2639 = vpop.f32.mrf.mxu0
        %2640 = vdwg.mxu0
        %v2641 = vadd.f32 %v2502, %v2603
        %v2642 = vadd.f32 %v2502, %v2608
        %v2643 = vadd.f32 %v2502, %v2613
        %v2644 = vadd.f32 %v2502, %v2618
        %v2645 = vadd.f32 %v2502, %v2623
        %v2646 = vadd.f32 %v2502, %v2628
        %v2647 = vadd.f32 %v2502, %v2633
        %v2648 = vadd.f32 %v2502, %v2638
        %s2649 = scalar_lea.vmem %s5, 256
        %v2650 = vld [vmem:[%s2649] sm:$0xff]
        %v2651 = vld [vmem:[%s2649 + $0x8] sm:$0xff]
        %v2652 = vld [vmem:[%s2649 + $0x10] sm:$0xff]
        %v2653 = vld [vmem:[%s2649 + $0x18] sm:$0xff]
        %v2654 = vld [vmem:[%s2649 + $0x20] sm:$0xff]
        %v2655 = vld [vmem:[%s2649 + $0x28] sm:$0xff]
        %v2656 = vld [vmem:[%s2649 + $0x30] sm:$0xff]
        %v2657 = vld [vmem:[%s2649 + $0x38] sm:$0xff]
        %v2658 = vld [vmem:[%s2649 + $0x40] sm:$0xff]
        %v2659 = vld [vmem:[%s2649 + $0x48] sm:$0xff]
        %v2660 = vld [vmem:[%s2649 + $0x50] sm:$0xff]
        %v2661 = vld [vmem:[%s2649 + $0x58] sm:$0xff]
        %v2662 = vld [vmem:[%s2649 + $0x60] sm:$0xff]
        %v2663 = vld [vmem:[%s2649 + $0x68] sm:$0xff]
        %v2664 = vld [vmem:[%s2649 + $0x70] sm:$0xff]
        %v2665 = vld [vmem:[%s2649 + $0x78] sm:$0xff]
        %v2666 = vld [vmem:[%s2649 + $0x80] sm:$0xff]
        %v2667 = vld [vmem:[%s2649 + $0x88] sm:$0xff]
        %v2668 = vld [vmem:[%s2649 + $0x90] sm:$0xff]
        %v2669 = vld [vmem:[%s2649 + $0x98] sm:$0xff]
        %v2670 = vld [vmem:[%s2649 + $0xa0] sm:$0xff]
        %v2671 = vld [vmem:[%s2649 + $0xa8] sm:$0xff]
        %v2672 = vld [vmem:[%s2649 + $0xb0] sm:$0xff]
        %v2673 = vld [vmem:[%s2649 + $0xb8] sm:$0xff]
        %v2674 = vld [vmem:[%s2649 + $0xc0] sm:$0xff]
        %v2675 = vld [vmem:[%s2649 + $0xc8] sm:$0xff]
        %v2676 = vld [vmem:[%s2649 + $0xd0] sm:$0xff]
        %v2677 = vld [vmem:[%s2649 + $0xd8] sm:$0xff]
        %v2678 = vld [vmem:[%s2649 + $0xe0] sm:$0xff]
        %v2679 = vld [vmem:[%s2649 + $0xe8] sm:$0xff]
        %v2680 = vld [vmem:[%s2649 + $0xf0] sm:$0xff]
        %v2681 = vld [vmem:[%s2649 + $0xf8] sm:$0xff]
        %2682 = vmatprep.subr.mxu0 0.0
        %2683 = vmatpush1.msra.mxu0 %v2665
        %2684 = vmatprep.subr.mxu0 0.0
        %2685 = vmatpush1.msra.mxu0 %v2664
        %2686 = vmatprep.subr.mxu0 0.0
        %2687 = vmatpush1.msra.mxu0 %v2663
        %2688 = vmatprep.subr.mxu0 0.0
        %2689 = vmatpush1.msra.mxu0 %v2662
        %2690 = vmatprep.subr.mxu0 0.0
        %2691 = vmatpush1.msra.mxu0 %v2661
        %2692 = vmatprep.subr.mxu0 0.0
        %2693 = vmatpush1.msra.mxu0 %v2660
        %2694 = vmatprep.subr.mxu0 0.0
        %2695 = vmatpush1.msra.mxu0 %v2659
        %2696 = vmatprep.subr.mxu0 0.0
        %2697 = vmatpush1.msra.mxu0 %v2658
        %2698 = vmatprep.subr.mxu0 0.0
        %2699 = vmatpush1.msra.mxu0 %v2657
        %2700 = vmatprep.subr.mxu0 0.0
        %2701 = vmatpush1.msra.mxu0 %v2656
        %2702 = vmatprep.subr.mxu0 0.0
        %2703 = vmatpush1.msra.mxu0 %v2655
        %2704 = vmatprep.subr.mxu0 0.0
        %2705 = vmatpush1.msra.mxu0 %v2654
        %2706 = vmatprep.subr.mxu0 0.0
        %2707 = vmatpush1.msra.mxu0 %v2653
        %2708 = vmatprep.subr.mxu0 0.0
        %2709 = vmatpush1.msra.mxu0 %v2652
        %2710 = vmatprep.subr.mxu0 0.0
        %2711 = vmatpush1.msra.mxu0 %v2651
        %2712 = vmatprep.subr.mxu0 0.0
        %2713 = vmatpush1.msra.mxu0 %v2650
        %2714 = vmatprep.subr.mxu0 0.0
        %2715 = vmatpush2.msra.mxu0 %v2681
        %2716 = vmatprep.subr.mxu0 0.0
        %2717 = vmatpush2.msra.mxu0 %v2680
        %2718 = vmatprep.subr.mxu0 0.0
        %2719 = vmatpush2.msra.mxu0 %v2679
        %2720 = vmatprep.subr.mxu0 0.0
        %2721 = vmatpush2.msra.mxu0 %v2678
        %2722 = vmatprep.subr.mxu0 0.0
        %2723 = vmatpush2.msra.mxu0 %v2677
        %2724 = vmatprep.subr.mxu0 0.0
        %2725 = vmatpush2.msra.mxu0 %v2676
        %2726 = vmatprep.subr.mxu0 0.0
        %2727 = vmatpush2.msra.mxu0 %v2675
        %2728 = vmatprep.subr.mxu0 0.0
        %2729 = vmatpush2.msra.mxu0 %v2674
        %2730 = vmatprep.subr.mxu0 0.0
        %2731 = vmatpush2.msra.mxu0 %v2673
        %2732 = vmatprep.subr.mxu0 0.0
        %2733 = vmatpush2.msra.mxu0 %v2672
        %2734 = vmatprep.subr.mxu0 0.0
        %2735 = vmatpush2.msra.mxu0 %v2671
        %2736 = vmatprep.subr.mxu0 0.0
        %2737 = vmatpush2.msra.mxu0 %v2670
        %2738 = vmatprep.subr.mxu0 0.0
        %2739 = vmatpush2.msra.mxu0 %v2669
        %2740 = vmatprep.subr.mxu0 0.0
        %2741 = vmatpush2.msra.mxu0 %v2668
        %2742 = vmatprep.subr.mxu0 0.0
        %2743 = vmatpush2.msra.mxu0 %v2667
        %2744 = vmatprep.subr.mxu0 0.0
        %2745 = vmatpush2.msra.mxu0 %v2666
        %2746 = vmatprep.mubr.f32.mxu0 %v2466
        %2747 = vmatmul.mubr.f32.gmra.mxu0 %v2465
        %v2748 = vpop.f32.mrf.mxu0
        %v2749 = vadd.f32 0.0, %v2748
        %v2750 = vpop.f32.mrf.mxu0
        %2751 = vmatprep.mubr.f32.mxu0 %v2468
        %2752 = vmatmul.mubr.f32.gmra.mxu0 %v2467
        %v2753 = vpop.f32.mrf.mxu0
        %v2754 = vadd.f32 0.0, %v2753
        %v2755 = vpop.f32.mrf.mxu0
        %2756 = vmatprep.mubr.f32.mxu0 %v2470
        %2757 = vmatmul.mubr.f32.gmra.mxu0 %v2469
        %v2758 = vpop.f32.mrf.mxu0
        %v2759 = vadd.f32 0.0, %v2758
        %v2760 = vpop.f32.mrf.mxu0
        %2761 = vmatprep.mubr.f32.mxu0 %v2472
        %2762 = vmatmul.mubr.f32.gmra.mxu0 %v2471
        %v2763 = vpop.f32.mrf.mxu0
        %v2764 = vadd.f32 0.0, %v2763
        %v2765 = vpop.f32.mrf.mxu0
        %2766 = vmatprep.mubr.f32.mxu0 %v2482
        %2767 = vmatmul.mubr.f32.gmra.mxu0 %v2481
        %v2768 = vpop.f32.mrf.mxu0
        %v2769 = vadd.f32 0.0, %v2768
        %v2770 = vpop.f32.mrf.mxu0
        %2771 = vmatprep.mubr.f32.mxu0 %v2484
        %2772 = vmatmul.mubr.f32.gmra.mxu0 %v2483
        %v2773 = vpop.f32.mrf.mxu0
        %v2774 = vadd.f32 0.0, %v2773
        %v2775 = vpop.f32.mrf.mxu0
        %2776 = vmatprep.mubr.f32.mxu0 %v2486
        %2777 = vmatmul.mubr.f32.gmra.mxu0 %v2485
        %v2778 = vpop.f32.mrf.mxu0
        %v2779 = vadd.f32 0.0, %v2778
        %v2780 = vpop.f32.mrf.mxu0
        %2781 = vmatprep.mubr.f32.mxu0 %v2488
        %2782 = vmatmul.mubr.f32.gmra.mxu0 %v2487
        %v2783 = vpop.f32.mrf.mxu0
        %v2784 = vadd.f32 0.0, %v2783
        %v2785 = vpop.f32.mrf.mxu0
        %2786 = vdwg.mxu0
        %v2787 = vadd.f32 %v2641, %v2749
        %v2788 = vadd.f32 %v2642, %v2754
        %v2789 = vadd.f32 %v2643, %v2759
        %v2790 = vadd.f32 %v2644, %v2764
        %v2791 = vadd.f32 %v2645, %v2769
        %v2792 = vadd.f32 %v2646, %v2774
        %v2793 = vadd.f32 %v2647, %v2779
        %v2794 = vadd.f32 %v2648, %v2784
        %s2795 = scalar_lea.vmem %s5, 512
        %v2796 = vld [vmem:[%s2795] sm:$0xff]
        %v2797 = vld [vmem:[%s2795 + $0x8] sm:$0xff]
        %v2798 = vld [vmem:[%s2795 + $0x10] sm:$0xff]
        %v2799 = vld [vmem:[%s2795 + $0x18] sm:$0xff]
        %v2800 = vld [vmem:[%s2795 + $0x20] sm:$0xff]
        %v2801 = vld [vmem:[%s2795 + $0x28] sm:$0xff]
        %v2802 = vld [vmem:[%s2795 + $0x30] sm:$0xff]
        %v2803 = vld [vmem:[%s2795 + $0x38] sm:$0xff]
        %v2804 = vld [vmem:[%s2795 + $0x40] sm:$0xff]
        %v2805 = vld [vmem:[%s2795 + $0x48] sm:$0xff]
        %v2806 = vld [vmem:[%s2795 + $0x50] sm:$0xff]
        %v2807 = vld [vmem:[%s2795 + $0x58] sm:$0xff]
        %v2808 = vld [vmem:[%s2795 + $0x60] sm:$0xff]
        %v2809 = vld [vmem:[%s2795 + $0x68] sm:$0xff]
        %v2810 = vld [vmem:[%s2795 + $0x70] sm:$0xff]
        %v2811 = vld [vmem:[%s2795 + $0x78] sm:$0xff]
        %v2812 = vld [vmem:[%s2795 + $0x80] sm:$0xff]
        %v2813 = vld [vmem:[%s2795 + $0x88] sm:$0xff]
        %v2814 = vld [vmem:[%s2795 + $0x90] sm:$0xff]
        %v2815 = vld [vmem:[%s2795 + $0x98] sm:$0xff]
        %v2816 = vld [vmem:[%s2795 + $0xa0] sm:$0xff]
        %v2817 = vld [vmem:[%s2795 + $0xa8] sm:$0xff]
        %v2818 = vld [vmem:[%s2795 + $0xb0] sm:$0xff]
        %v2819 = vld [vmem:[%s2795 + $0xb8] sm:$0xff]
        %v2820 = vld [vmem:[%s2795 + $0xc0] sm:$0xff]
        %v2821 = vld [vmem:[%s2795 + $0xc8] sm:$0xff]
        %v2822 = vld [vmem:[%s2795 + $0xd0] sm:$0xff]
        %v2823 = vld [vmem:[%s2795 + $0xd8] sm:$0xff]
        %v2824 = vld [vmem:[%s2795 + $0xe0] sm:$0xff]
        %v2825 = vld [vmem:[%s2795 + $0xe8] sm:$0xff]
        %v2826 = vld [vmem:[%s2795 + $0xf0] sm:$0xff]
        %v2827 = vld [vmem:[%s2795 + $0xf8] sm:$0xff]
        %2828 = vmatprep.subr.mxu0 0.0
        %2829 = vmatpush1.msra.mxu0 %v2811
        %2830 = vmatprep.subr.mxu0 0.0
        %2831 = vmatpush1.msra.mxu0 %v2810
        %2832 = vmatprep.subr.mxu0 0.0
        %2833 = vmatpush1.msra.mxu0 %v2809
        %2834 = vmatprep.subr.mxu0 0.0
        %2835 = vmatpush1.msra.mxu0 %v2808
        %2836 = vmatprep.subr.mxu0 0.0
        %2837 = vmatpush1.msra.mxu0 %v2807
        %2838 = vmatprep.subr.mxu0 0.0
        %2839 = vmatpush1.msra.mxu0 %v2806
        %2840 = vmatprep.subr.mxu0 0.0
        %2841 = vmatpush1.msra.mxu0 %v2805
        %2842 = vmatprep.subr.mxu0 0.0
        %2843 = vmatpush1.msra.mxu0 %v2804
        %2844 = vmatprep.subr.mxu0 0.0
        %2845 = vmatpush1.msra.mxu0 %v2803
        %2846 = vmatprep.subr.mxu0 0.0
        %2847 = vmatpush1.msra.mxu0 %v2802
        %2848 = vmatprep.subr.mxu0 0.0
        %2849 = vmatpush1.msra.mxu0 %v2801
        %2850 = vmatprep.subr.mxu0 0.0
        %2851 = vmatpush1.msra.mxu0 %v2800
        %2852 = vmatprep.subr.mxu0 0.0
        %2853 = vmatpush1.msra.mxu0 %v2799
        %2854 = vmatprep.subr.mxu0 0.0
        %2855 = vmatpush1.msra.mxu0 %v2798
        %2856 = vmatprep.subr.mxu0 0.0
        %2857 = vmatpush1.msra.mxu0 %v2797
        %2858 = vmatprep.subr.mxu0 0.0
        %2859 = vmatpush1.msra.mxu0 %v2796
        %2860 = vmatprep.subr.mxu0 0.0
        %2861 = vmatpush2.msra.mxu0 %v2827
        %2862 = vmatprep.subr.mxu0 0.0
        %2863 = vmatpush2.msra.mxu0 %v2826
        %2864 = vmatprep.subr.mxu0 0.0
        %2865 = vmatpush2.msra.mxu0 %v2825
        %2866 = vmatprep.subr.mxu0 0.0
        %2867 = vmatpush2.msra.mxu0 %v2824
        %2868 = vmatprep.subr.mxu0 0.0
        %2869 = vmatpush2.msra.mxu0 %v2823
        %2870 = vmatprep.subr.mxu0 0.0
        %2871 = vmatpush2.msra.mxu0 %v2822
        %2872 = vmatprep.subr.mxu0 0.0
        %2873 = vmatpush2.msra.mxu0 %v2821
        %2874 = vmatprep.subr.mxu0 0.0
        %2875 = vmatpush2.msra.mxu0 %v2820
        %2876 = vmatprep.subr.mxu0 0.0
        %2877 = vmatpush2.msra.mxu0 %v2819
        %2878 = vmatprep.subr.mxu0 0.0
        %2879 = vmatpush2.msra.mxu0 %v2818
        %2880 = vmatprep.subr.mxu0 0.0
        %2881 = vmatpush2.msra.mxu0 %v2817
        %2882 = vmatprep.subr.mxu0 0.0
        %2883 = vmatpush2.msra.mxu0 %v2816
        %2884 = vmatprep.subr.mxu0 0.0
        %2885 = vmatpush2.msra.mxu0 %v2815
        %2886 = vmatprep.subr.mxu0 0.0
        %2887 = vmatpush2.msra.mxu0 %v2814
        %2888 = vmatprep.subr.mxu0 0.0
        %2889 = vmatpush2.msra.mxu0 %v2813
        %2890 = vmatprep.subr.mxu0 0.0
        %2891 = vmatpush2.msra.mxu0 %v2812
        %2892 = vmatprep.mubr.f32.mxu0 %v2474
        %2893 = vmatmul.mubr.f32.gmra.mxu0 %v2473
        %v2894 = vpop.f32.mrf.mxu0
        %v2895 = vadd.f32 0.0, %v2894
        %v2896 = vpop.f32.mrf.mxu0
        %2897 = vmatprep.mubr.f32.mxu0 %v2476
        %2898 = vmatmul.mubr.f32.gmra.mxu0 %v2475
        %v2899 = vpop.f32.mrf.mxu0
        %v2900 = vadd.f32 0.0, %v2899
        %v2901 = vpop.f32.mrf.mxu0
        %2902 = vmatprep.mubr.f32.mxu0 %v2478
        %2903 = vmatmul.mubr.f32.gmra.mxu0 %v2477
        %v2904 = vpop.f32.mrf.mxu0
        %v2905 = vadd.f32 0.0, %v2904
        %v2906 = vpop.f32.mrf.mxu0
        %2907 = vmatprep.mubr.f32.mxu0 %v2480
        %2908 = vmatmul.mubr.f32.gmra.mxu0 %v2479
        %v2909 = vpop.f32.mrf.mxu0
        %v2910 = vadd.f32 0.0, %v2909
        %v2911 = vpop.f32.mrf.mxu0
        %2912 = vmatprep.mubr.f32.mxu0 %v2490
        %2913 = vmatmul.mubr.f32.gmra.mxu0 %v2489
        %v2914 = vpop.f32.mrf.mxu0
        %v2915 = vadd.f32 0.0, %v2914
        %v2916 = vpop.f32.mrf.mxu0
        %2917 = vmatprep.mubr.f32.mxu0 %v2492
        %2918 = vmatmul.mubr.f32.gmra.mxu0 %v2491
        %v2919 = vpop.f32.mrf.mxu0
        %v2920 = vadd.f32 0.0, %v2919
        %v2921 = vpop.f32.mrf.mxu0
        %2922 = vmatprep.mubr.f32.mxu0 %v2494
        %2923 = vmatmul.mubr.f32.gmra.mxu0 %v2493
        %v2924 = vpop.f32.mrf.mxu0
        %v2925 = vadd.f32 0.0, %v2924
        %v2926 = vpop.f32.mrf.mxu0
        %2927 = vmatprep.mubr.f32.mxu0 %v2496
        %2928 = vmatmul.mubr.f32.gmra.mxu0 %v2495
        %v2929 = vpop.f32.mrf.mxu0
        %v2930 = vadd.f32 0.0, %v2929
        %v2931 = vpop.f32.mrf.mxu0
        %2932 = vdwg.mxu0
        %v2933 = vadd.f32 %v2787, %v2895
        %v2934 = vadd.f32 %v2788, %v2900
        %v2935 = vadd.f32 %v2789, %v2905
        %v2936 = vadd.f32 %v2790, %v2910
        %v2937 = vadd.f32 %v2791, %v2915
        %v2938 = vadd.f32 %v2792, %v2920
        %v2939 = vadd.f32 %v2793, %v2925
        %v2940 = vadd.f32 %v2794, %v2930
        %v2941 = vmax.f32 %v2933, 0.0
        %v2942 = vmax.f32 %v2934, 0.0
        %v2943 = vmax.f32 %v2935, 0.0
        %v2944 = vmax.f32 %v2936, 0.0
        %v2945 = vmax.f32 %v2937, 0.0
        %v2946 = vmax.f32 %v2938, 0.0
        %v2947 = vmax.f32 %v2939, 0.0
        %v2948 = vmax.f32 %v2940, 0.0
        %v2949 = vld [vmem:[%s8] sm:$0x1]
        %v2951 = vlaneseq
        %v2952 = vshrl.u32 %v2951, 7
        %v2953 = vsub.s32 0, %v2952
        %v2954 = vrot.slane %v2949, %v2953
        %s2956 = scalar_lea.vmem %s7, 128
        %v2957 = vld [vmem:[%s2956] sm:$0xff]
        %v2958 = vld [vmem:[%s2956 + $0x8] sm:$0xff]
        %v2959 = vld [vmem:[%s2956 + $0x10] sm:$0xff]
        %v2960 = vld [vmem:[%s2956 + $0x18] sm:$0xff]
        %v2961 = vld [vmem:[%s2956 + $0x20] sm:$0xff]
        %v2962 = vld [vmem:[%s2956 + $0x28] sm:$0xff]
        %v2963 = vld [vmem:[%s2956 + $0x30] sm:$0xff]
        %v2964 = vld [vmem:[%s2956 + $0x38] sm:$0xff]
        %v2965 = vld [vmem:[%s2956 + $0x40] sm:$0xff]
        %v2966 = vld [vmem:[%s2956 + $0x48] sm:$0xff]
        %v2967 = vld [vmem:[%s2956 + $0x50] sm:$0xff]
        %v2968 = vld [vmem:[%s2956 + $0x58] sm:$0xff]
        %v2969 = vld [vmem:[%s2956 + $0x60] sm:$0xff]
        %v2970 = vld [vmem:[%s2956 + $0x68] sm:$0xff]
        %v2971 = vld [vmem:[%s2956 + $0x70] sm:$0xff]
        %v2972 = vld [vmem:[%s2956 + $0x78] sm:$0xff]
        %2973 = vmatprep.subr.mxu0 0.0
        %2974 = vmatpush1.msra.mxu0 %v2972
        %2975 = vmatprep.subr.mxu0 0.0
        %2976 = vmatpush1.msra.mxu0 %v2971
        %2977 = vmatprep.subr.mxu0 0.0
        %2978 = vmatpush1.msra.mxu0 %v2970
        %2979 = vmatprep.subr.mxu0 0.0
        %2980 = vmatpush1.msra.mxu0 %v2969
        %2981 = vmatprep.subr.mxu0 0.0
        %2982 = vmatpush1.msra.mxu0 %v2968
        %2983 = vmatprep.subr.mxu0 0.0
        %2984 = vmatpush1.msra.mxu0 %v2967
        %2985 = vmatprep.subr.mxu0 0.0
        %2986 = vmatpush1.msra.mxu0 %v2966
        %2987 = vmatprep.subr.mxu0 0.0
        %2988 = vmatpush1.msra.mxu0 %v2965
        %2989 = vmatprep.subr.mxu0 0.0
        %2990 = vmatpush1.msra.mxu0 %v2964
        %2991 = vmatprep.subr.mxu0 0.0
        %2992 = vmatpush1.msra.mxu0 %v2963
        %2993 = vmatprep.subr.mxu0 0.0
        %2994 = vmatpush1.msra.mxu0 %v2962
        %2995 = vmatprep.subr.mxu0 0.0
        %2996 = vmatpush1.msra.mxu0 %v2961
        %2997 = vmatprep.subr.mxu0 0.0
        %2998 = vmatpush1.msra.mxu0 %v2960
        %2999 = vmatprep.subr.mxu0 0.0
        %3000 = vmatpush1.msra.mxu0 %v2959
        %3001 = vmatprep.subr.mxu0 0.0
        %3002 = vmatpush1.msra.mxu0 %v2958
        %3003 = vmatprep.subr.mxu0 0.0
        %3004 = vmatpush1.msra.mxu0 %v2957
        %3005 = vmatprep.subr.mxu0 0.0
        %3006 = vmatpush2.msra.mxu0 0.0
        %3007 = vmatprep.subr.mxu0 0.0
        %3008 = vmatpush2.msra.mxu0 0.0
        %3009 = vmatprep.subr.mxu0 0.0
        %3010 = vmatpush2.msra.mxu0 0.0
        %3011 = vmatprep.subr.mxu0 0.0
        %3012 = vmatpush2.msra.mxu0 0.0
        %3013 = vmatprep.subr.mxu0 0.0
        %3014 = vmatpush2.msra.mxu0 0.0
        %3015 = vmatprep.subr.mxu0 0.0
        %3016 = vmatpush2.msra.mxu0 0.0
        %3017 = vmatprep.subr.mxu0 0.0
        %3018 = vmatpush2.msra.mxu0 0.0
        %3019 = vmatprep.subr.mxu0 0.0
        %3020 = vmatpush2.msra.mxu0 0.0
        %3021 = vmatprep.subr.mxu0 0.0
        %3022 = vmatpush2.msra.mxu0 0.0
        %3023 = vmatprep.subr.mxu0 0.0
        %3024 = vmatpush2.msra.mxu0 0.0
        %3025 = vmatprep.subr.mxu0 0.0
        %3026 = vmatpush2.msra.mxu0 0.0
        %3027 = vmatprep.subr.mxu0 0.0
        %3028 = vmatpush2.msra.mxu0 0.0
        %3029 = vmatprep.subr.mxu0 0.0
        %3030 = vmatpush2.msra.mxu0 0.0
        %3031 = vmatprep.subr.mxu0 0.0
        %3032 = vmatpush2.msra.mxu0 0.0
        %3033 = vmatprep.subr.mxu0 0.0
        %3034 = vmatpush2.msra.mxu0 0.0
        %3035 = vmatprep.subr.mxu0 0.0
        %3036 = vmatpush2.msra.mxu0 0.0
        %3037 = vmatprep.mubr.f32.mxu0 0.0
        %3038 = vmatmul.mubr.f32.gmra.mxu0 %v2941
        %v3039 = vpop.f32.mrf.mxu0
        %v3040 = vadd.f32 0.0, %v3039
        %v3041 = vpop.f32.mrf.mxu0
        %3042 = vmatprep.mubr.f32.mxu0 0.0
        %3043 = vmatmul.mubr.f32.gmra.mxu0 %v2942
        %v3044 = vpop.f32.mrf.mxu0
        %v3045 = vadd.f32 0.0, %v3044
        %v3046 = vpop.f32.mrf.mxu0
        %3047 = vmatprep.mubr.f32.mxu0 0.0
        %3048 = vmatmul.mubr.f32.gmra.mxu0 %v2943
        %v3049 = vpop.f32.mrf.mxu0
        %v3050 = vadd.f32 0.0, %v3049
        %v3051 = vpop.f32.mrf.mxu0
        %3052 = vmatprep.mubr.f32.mxu0 0.0
        %3053 = vmatmul.mubr.f32.gmra.mxu0 %v2944
        %v3054 = vpop.f32.mrf.mxu0
        %v3055 = vadd.f32 0.0, %v3054
        %v3056 = vpop.f32.mrf.mxu0
        %3057 = vdwg.mxu0
        %v3058 = vadd.f32 %v2954, %v3040
        %v3059 = vadd.f32 %v2954, %v3045
        %v3060 = vadd.f32 %v2954, %v3050
        %v3061 = vadd.f32 %v2954, %v3055
        %s3062 = scalar_lea.vmem %s7, 256
        %v3063 = vld [vmem:[%s3062] sm:$0xff]
        %v3064 = vld [vmem:[%s3062 + $0x8] sm:$0xff]
        %v3065 = vld [vmem:[%s3062 + $0x10] sm:$0xff]
        %v3066 = vld [vmem:[%s3062 + $0x18] sm:$0xff]
        %v3067 = vld [vmem:[%s3062 + $0x20] sm:$0xff]
        %v3068 = vld [vmem:[%s3062 + $0x28] sm:$0xff]
        %v3069 = vld [vmem:[%s3062 + $0x30] sm:$0xff]
        %v3070 = vld [vmem:[%s3062 + $0x38] sm:$0xff]
        %v3071 = vld [vmem:[%s3062 + $0x40] sm:$0xff]
        %v3072 = vld [vmem:[%s3062 + $0x48] sm:$0xff]
        %v3073 = vld [vmem:[%s3062 + $0x50] sm:$0xff]
        %v3074 = vld [vmem:[%s3062 + $0x58] sm:$0xff]
        %v3075 = vld [vmem:[%s3062 + $0x60] sm:$0xff]
        %v3076 = vld [vmem:[%s3062 + $0x68] sm:$0xff]
        %v3077 = vld [vmem:[%s3062 + $0x70] sm:$0xff]
        %v3078 = vld [vmem:[%s3062 + $0x78] sm:$0xff]
        %3079 = vmatprep.subr.mxu0 0.0
        %3080 = vmatpush1.msra.mxu0 %v3078
        %3081 = vmatprep.subr.mxu0 0.0
        %3082 = vmatpush1.msra.mxu0 %v3077
        %3083 = vmatprep.subr.mxu0 0.0
        %3084 = vmatpush1.msra.mxu0 %v3076
        %3085 = vmatprep.subr.mxu0 0.0
        %3086 = vmatpush1.msra.mxu0 %v3075
        %3087 = vmatprep.subr.mxu0 0.0
        %3088 = vmatpush1.msra.mxu0 %v3074
        %3089 = vmatprep.subr.mxu0 0.0
        %3090 = vmatpush1.msra.mxu0 %v3073
        %3091 = vmatprep.subr.mxu0 0.0
        %3092 = vmatpush1.msra.mxu0 %v3072
        %3093 = vmatprep.subr.mxu0 0.0
        %3094 = vmatpush1.msra.mxu0 %v3071
        %3095 = vmatprep.subr.mxu0 0.0
        %3096 = vmatpush1.msra.mxu0 %v3070
        %3097 = vmatprep.subr.mxu0 0.0
        %3098 = vmatpush1.msra.mxu0 %v3069
        %3099 = vmatprep.subr.mxu0 0.0
        %3100 = vmatpush1.msra.mxu0 %v3068
        %3101 = vmatprep.subr.mxu0 0.0
        %3102 = vmatpush1.msra.mxu0 %v3067
        %3103 = vmatprep.subr.mxu0 0.0
        %3104 = vmatpush1.msra.mxu0 %v3066
        %3105 = vmatprep.subr.mxu0 0.0
        %3106 = vmatpush1.msra.mxu0 %v3065
        %3107 = vmatprep.subr.mxu0 0.0
        %3108 = vmatpush1.msra.mxu0 %v3064
        %3109 = vmatprep.subr.mxu0 0.0
        %3110 = vmatpush1.msra.mxu0 %v3063
        %3111 = vmatprep.subr.mxu0 0.0
        %3112 = vmatpush2.msra.mxu0 0.0
        %3113 = vmatprep.subr.mxu0 0.0
        %3114 = vmatpush2.msra.mxu0 0.0
        %3115 = vmatprep.subr.mxu0 0.0
        %3116 = vmatpush2.msra.mxu0 0.0
        %3117 = vmatprep.subr.mxu0 0.0
        %3118 = vmatpush2.msra.mxu0 0.0
        %3119 = vmatprep.subr.mxu0 0.0
        %3120 = vmatpush2.msra.mxu0 0.0
        %3121 = vmatprep.subr.mxu0 0.0
        %3122 = vmatpush2.msra.mxu0 0.0
        %3123 = vmatprep.subr.mxu0 0.0
        %3124 = vmatpush2.msra.mxu0 0.0
        %3125 = vmatprep.subr.mxu0 0.0
        %3126 = vmatpush2.msra.mxu0 0.0
        %3127 = vmatprep.subr.mxu0 0.0
        %3128 = vmatpush2.msra.mxu0 0.0
        %3129 = vmatprep.subr.mxu0 0.0
        %3130 = vmatpush2.msra.mxu0 0.0
        %3131 = vmatprep.subr.mxu0 0.0
        %3132 = vmatpush2.msra.mxu0 0.0
        %3133 = vmatprep.subr.mxu0 0.0
        %3134 = vmatpush2.msra.mxu0 0.0
        %3135 = vmatprep.subr.mxu0 0.0
        %3136 = vmatpush2.msra.mxu0 0.0
        %3137 = vmatprep.subr.mxu0 0.0
        %3138 = vmatpush2.msra.mxu0 0.0
        %3139 = vmatprep.subr.mxu0 0.0
        %3140 = vmatpush2.msra.mxu0 0.0
        %3141 = vmatprep.subr.mxu0 0.0
        %3142 = vmatpush2.msra.mxu0 0.0
        %3143 = vmatprep.mubr.f32.mxu0 0.0
        %3144 = vmatmul.mubr.f32.gmra.mxu0 %v2945
        %v3145 = vpop.f32.mrf.mxu0
        %v3146 = vadd.f32 0.0, %v3145
        %v3147 = vpop.f32.mrf.mxu0
        %3148 = vmatprep.mubr.f32.mxu0 0.0
        %3149 = vmatmul.mubr.f32.gmra.mxu0 %v2946
        %v3150 = vpop.f32.mrf.mxu0
        %v3151 = vadd.f32 0.0, %v3150
        %v3152 = vpop.f32.mrf.mxu0
        %3153 = vmatprep.mubr.f32.mxu0 0.0
        %3154 = vmatmul.mubr.f32.gmra.mxu0 %v2947
        %v3155 = vpop.f32.mrf.mxu0
        %v3156 = vadd.f32 0.0, %v3155
        %v3157 = vpop.f32.mrf.mxu0
        %3158 = vmatprep.mubr.f32.mxu0 0.0
        %3159 = vmatmul.mubr.f32.gmra.mxu0 %v2948
        %v3160 = vpop.f32.mrf.mxu0
        %v3161 = vadd.f32 0.0, %v3160
        %v3162 = vpop.f32.mrf.mxu0
        %3163 = vdwg.mxu0
        %v3164 = vadd.f32 %v3058, %v3146
        %v3165 = vadd.f32 %v3059, %v3151
        %v3166 = vadd.f32 %v3060, %v3156
        %v3167 = vadd.f32 %v3061, %v3161
        %v3168 = vmax.f32 %v3164, 0.0
        %v3169 = vmax.f32 %v3165, 0.0
        %v3170 = vmax.f32 %v3166, 0.0
        %v3171 = vmax.f32 %v3167, 0.0
        %3172 = vst [vmem:[%s325] sm:$0xff] %v3168
        %3173 = vst [vmem:[%s325 + $0x8] sm:$0xff] %v3169
        %3174 = vst [vmem:[%s325 + $0x10] sm:$0xff] %v3170
        %3175 = vst [vmem:[%s325 + $0x18] sm:$0xff] %v3171
        %s3176 = sand.u32 %s225, 1
        %s3177 = scalar_lea.sflag [#allocation3], %s3176
        %s3178 = sand.u32 %s225, 1
        %s3179 = smul.addr %s3178, 32
        %s3180 = scalar_lea.vmem [#allocation2], %s3179
        // Predicated region
        $region57: #{conv_encoder_forward.1} parent=55 // pred_check
          %p3181 = pneg %p235
        $region58: #{conv_encoder_forward.1} parent=55 // pred_check_branch
          %3183 = sbr.rel (%p3181) target = $region60
        $region59: #{conv_encoder_forward.1} parent=55 // pred_region
          %s3185 = ssub.s32 512, 512
          %3186 = vsyncadd %s3177, %s3185
          %s3187 = smul.addr %s23, 4
          %s3188 = smul.addr %s3187, 128
          %s3189 = scalar_lea.hbm %s9, %s3188
          %s3190 = sshll.u32 %s3180, 4
          %s3191 = int_to_ptr.vmem [resolvable:$true] %s3190
          %3196 = dma.vmem_to_hbm [thread:$0]  %s3191, 512, %s3189, %s3177, 128, 128, 8
        $region60: #{conv_encoder_forward.1} parent=55 // pred_fallthru
          _
      $region56: #{conv_encoder_forward.1} parent=5 // pred_fallthru
        _
      %p3197 = scmp.le.s32.totalorder 2, %s18
      // Predicated region
      $region61: #{conv_encoder_forward.1} parent=5 // pred_check
        %p3198 = pneg %p3197
      $region62: #{conv_encoder_forward.1} parent=5 // pred_check_branch
        %3200 = sbr.rel (%p3198) target = $region64
      $region63: #{conv_encoder_forward.1} parent=5 // pred_region
        %s3201 = ssub.s32 %s18, 2
        // Predicated region
        $region65: #{conv_encoder_forward.1} parent=63 // pred_check
          %p3202 = pneg %p241
        $region66: #{conv_encoder_forward.1} parent=63 // pred_check_branch
          %3204 = sbr.rel (%p3202) target = $region68
        $region67: #{conv_encoder_forward.1} parent=63 // pred_region
          %s3205 = sand.u32 %s226, 1
          %s3206 = scalar_lea.sflag [#allocation3], %s3205
          %s3207 = sand.u32 %s226, 1
          %s3208 = smul.addr %s3207, 32
          %s3209 = scalar_lea.vmem [#allocation2], %s3208
          %3210 = dma.done %s3206, 512
        $region68: #{conv_encoder_forward.1} parent=63 // pred_fallthru
          _
      $region64: #{conv_encoder_forward.1} parent=5 // pred_fallthru
        _
    $region6: #{conv_encoder_forward.1} parent=1 // loop_footer
      %s22 = sadd.s32 1, %s18
    $region7: #{conv_encoder_forward.1} parent=1 // loop_footer_branch
      %17 = sbr.rel target = $region3
    $region8: #{conv_encoder_forward.1} parent=1 // loop_exit
      _
    %3211 = vsyncpa [#allocation3], 1
    %s3212 = scalar_lea.sflag [#allocation3], 1
    %3213 = vsyncpa %s3212, 1

</llo_original>
